<compile_context>
chip_gen: v7x
topology: tpu7x:2x2x1
jax: 0.10.0
libtpu: 0.0.40
codegen_flags: <defaults>
</compile_context>

<pallas_src>
import functools

import jax
import jax.numpy as jnp
from jax import lax
from jax.experimental import pallas as pl
from jax.experimental.pallas import tpu as pltpu


# ----------------------------------------------------------------------------
# Small in-kernel helpers
# ----------------------------------------------------------------------------
def _shift_lanes(x, s):
    """y[:, p] = x[:, p - s] for 0 <= p - s < L, else 0.  Static shift s."""
    if s == 0:
        return x
    c, length = x.shape
    z = jnp.zeros((c, abs(s)), x.dtype)
    if s > 0:
        return jnp.concatenate([z, x[:, : length - s]], axis=1)
    return jnp.concatenate([x[:, -s:], z], axis=1)


# ----------------------------------------------------------------------------
# Fused kernel: 7 convs + curve enhancement for one (batch, strip) grid point
# ----------------------------------------------------------------------------
def zero_dce_kernel(x_ref,
                    w1, b1, w2, b2, w3, b3, w4, b4,
                    w5, b5, w6, b6, w7, b7,
                    o_ref, *, width, strip_rows, halo, n_strips):
    W_ = width
    Ts = strip_rows
    slab_h = Ts + 2 * halo
    L = slab_h * W_                    # flattened slab spatial size (lanes)
    TsW = Ts * W_                      # flattened strip spatial size

    x_slab = x_ref[0, 0]               # (3, L) f32, halo'd input slab
    x_bf = x_slab.astype(jnp.bfloat16)

    # Hoisted lane-index masks for the horizontal (kx) taps.
    lane = lax.broadcasted_iota(jnp.int32, (1, L), 1)
    wpos = lane % W_
    at_w_first = wpos == 0             # no left neighbour  (w == 0)
    at_w_last = wpos == W_ - 1         # no right neighbour (w == W-1)

    def wcols(xs):
        """Stack [x(.,w-1); x; x(.,w+1)] (w-masked) for every input along K."""
        pieces = []
        for x in xs:
            left = jnp.where(at_w_first, 0.0, _shift_lanes(x, 1))    # x[., w-1]
            right = jnp.where(at_w_last, 0.0, _shift_lanes(x, -1))   # x[., w+1]
            pieces += [left, x, right]
        return jnp.concatenate(pieces, axis=0)                       # (K, L)

    def conv3x3(xs, w_ref, b_ref):
        """3x3 same-pad conv: 3 MXU dots (one per ky) + 2 zero-fill row shifts."""
        cols = wcols(xs)                                             # (K, L) bf16
        z_top = jnp.dot(w_ref[0], cols, preferred_element_type=jnp.float32)
        z_mid = jnp.dot(w_ref[1], cols, preferred_element_type=jnp.float32)
        z_bot = jnp.dot(w_ref[2], cols, preferred_element_type=jnp.float32)
        acc = z_mid + _shift_lanes(z_top, W_) + _shift_lanes(z_bot, -W_)
        return acc + b_ref[...]                                      # (Cout, L) f32

    def relu_bf16(acc):
        return jnp.maximum(acc, 0.0).astype(jnp.bfloat16)

    # ---- conv stack (U-net concats folded into merged-K contractions) -------
    a1 = relu_bf16(conv3x3([x_bf], w1, b1))
    a2 = relu_bf16(conv3x3([a1], w2, b2))
    a3 = relu_bf16(conv3x3([a2], w3, b3))
    a4 = relu_bf16(conv3x3([a3], w4, b4))
    a5 = relu_bf16(conv3x3([a3, a4], w5, b5))       # torch.cat([x3, x4], 1)
    a6 = relu_bf16(conv3x3([a2, a5], w6, b6))       # torch.cat([x2, x5], 1)
    r = jnp.tanh(conv3x3([a1, a6], w7, b7))         # torch.cat([x1, x6], 1) -> (24, L)

    # ---- crop the halo: the strip occupies slab rows [crop, crop + Ts) ------
    if halo == 0:
        r_s, x_s = r, x_slab
    else:
        s = pl.program_id(1)

        def crop(v):
            c_first = v[:, :TsW]                                   # crop = 0
            c_mid = v[:, halo * W_: halo * W_ + TsW]               # crop = halo
            c_last = v[:, 2 * halo * W_: 2 * halo * W_ + TsW]      # crop = 2*halo
            return jnp.where(s == 0, c_first,
                             jnp.where(s == n_strips - 1, c_last, c_mid))

        r_s, x_s = crop(r), crop(x_slab)

    # ---- iterative curve enhancement, lane-dense, f32 ------------------------
    x_e = x_s                                                       # (3, TsW) f32
    for i in range(8):
        r_i = r_s[3 * i:3 * i + 3, :]
        x_e = x_e + r_i * (x_e * x_e - x_e)

    o_ref[0] = x_e                                                  # lane-dense store


# ----------------------------------------------------------------------------
# Host-side weight prep
# ----------------------------------------------------------------------------
def _prep_w(w):
    """(kH, kW, Cin, Cout) f32 -> (3, Cout, 3*Cin) bf16, K ordered (kx, cin).

    NOTE: real PyTorch checkpoints store conv weights as (Cout, Cin, kH, kW);
    transpose to (kH, kW, Cin, Cout) before calling this when loading them.
    """
    w = jnp.transpose(w, (0, 3, 1, 2))              # (ky, Cout, kx, Cin)
    return w.reshape(w.shape[0], w.shape[1], -1).astype(jnp.bfloat16)


def _prep_w_cat(w, nf):
    """Weight of a conv fed by torch.cat([A, B], 1): K order [A kx-major | B kx-major]."""
    return jnp.concatenate([_prep_w(w[:, :, :nf]), _prep_w(w[:, :, nf:])], axis=-1)


def _prep_b(b):
    return b.reshape(-1, 1).astype(jnp.float32)


def _vmem_limit_bytes():
    """Target ~80% of physical VMEM; fall back to the compiler default."""
    try:
        return int(pltpu.get_tpu_info().vmem_capacity_bytes * 0.8)
    except Exception:
        return None


def _choose_strip_rows(H, W, halo, max_slab_elems=24 * 1024):
    """Pick a strip height dividing H (H itself disables tiling)."""
    if H * W <= max_slab_elems:
        return H
    valid = [d for d in range(max(halo, 1), H)
             if H % d == 0 and d + 2 * halo <= H and (d * W) % 128 == 0]
    if not valid:
        return H
    fitting = [d for d in valid if (d + 2 * halo) * W <= max_slab_elems]
    return max(fitting) if fitting else min(valid)


# ----------------------------------------------------------------------------
# Wrapper
# ----------------------------------------------------------------------------
def zero_dce_forward(x_nchw, params, strip_rows=None):
    N, C, H, W = x_nchw.shape
    assert C == 3, "ZeroDCE expects a 3-channel (RGB) input"

    halo_full = 7                                   # 7 stacked 3x3 convs
    if strip_rows is None:
        strip_rows = _choose_strip_rows(H, W, halo_full)
    Ts = int(strip_rows)
    assert H % Ts == 0
    S = H // Ts
    halo = 0 if S == 1 else halo_full
    if S > 1:
        assert Ts >= halo and Ts + 2 * halo <= H and (Ts * W) % 128 == 0
    slab_h = Ts + 2 * halo
    L = slab_h * W

    x_f32 = x_nchw.astype(jnp.float32)
    # Per-strip halo'd slabs, clamped to the image (cheap 3-channel gather in
    # XLA, done once); clamping keeps per-layer zero padding at true borders.
    slabs = []
    for s in range(S):
        st = min(max(s * Ts - halo, 0), H - slab_h)
        slabs.append(lax.slice_in_dim(x_f32, st, st + slab_h, axis=2))
    x_slabs = jnp.stack(slabs, axis=1).reshape(N, S, 3, L)

    w1, b1 = params["e_conv1"]; w2, b2 = params["e_conv2"]
    w3, b3 = params["e_conv3"]; w4, b4 = params["e_conv4"]
    w5, b5 = params["e_conv5"]; w6, b6 = params["e_conv6"]
    w7, b7 = params["e_conv7"]
    nf = w1.shape[3]                                # feature width (32)

    weight_args = [
        _prep_w(w1), _prep_b(b1),
        _prep_w(w2), _prep_b(b2),
        _prep_w(w3), _prep_b(b3),
        _prep_w(w4), _prep_b(b4),
        _prep_w_cat(w5, nf), _prep_b(b5),
        _prep_w_cat(w6, nf), _prep_b(b6),
        _prep_w_cat(w7, nf), _prep_b(b7),
    ]

    def _const_spec(arr):
        zeros = (0,) * arr.ndim
        return pl.BlockSpec(arr.shape, lambda n, s, _z=zeros: _z)   # VMEM-resident

    kernel = functools.partial(zero_dce_kernel, width=W, strip_rows=Ts,
                               halo=halo, n_strips=S)

    compiler_kwargs = dict(dimension_semantics=("parallel", "parallel"))
    vmem_limit = _vmem_limit_bytes()
    if vmem_limit is not None:
        compiler_kwargs["vmem_limit_bytes"] = vmem_limit

    out = pl.pallas_call(
        kernel,
        out_shape=jax.ShapeDtypeStruct((N, 3, H * W), jnp.float32),
        grid=(N, S),
        in_specs=[pl.BlockSpec((1, 1, 3, L), lambda n, s: (n, s, 0, 0))]
                 + [_const_spec(a) for a in weight_args],
        out_specs=pl.BlockSpec((1, 3, Ts * W), lambda n, s: (n, 0, s)),
        compiler_params=pltpu.CompilerParams(**compiler_kwargs),
    )(x_slabs, *weight_args)

    return out.reshape(N, 3, H, W)


# ----------------------------------------------------------------------------
# Pure-JAX f32 reference (for validation only)
# ----------------------------------------------------------------------------
def zero_dce_reference(x, params):
    def conv(v, name):
        w, b = params[name]
        out = lax.conv_general_dilated(
            v, w, window_strides=(1, 1), padding="SAME",
            dimension_numbers=("NCHW", "HWIO", "NCHW"),
            precision=lax.Precision.HIGHEST)
        return out + b.reshape(1, -1, 1, 1)

    relu = jax.nn.relu
    x1 = relu(conv(x, "e_conv1"))
    x2 = relu(conv(x1, "e_conv2"))
    x3 = relu(conv(x2, "e_conv3"))
    x4 = relu(conv(x3, "e_conv4"))
    x5 = relu(conv(jnp.concatenate([x3, x4], 1), "e_conv5"))
    x6 = relu(conv(jnp.concatenate([x2, x5], 1), "e_conv6"))
    x_r = jnp.tanh(conv(jnp.concatenate([x1, x6], 1), "e_conv7"))
    x_e = x
    for r_i in jnp.split(x_r, 8, axis=1):
        x_e = x_e + r_i * (x_e * x_e - x_e)
    return x_e                                       # == second tuple element


# ----------------------------------------------------------------------------
# Parameter init (deterministic, synthetic — shapes match enhance_net_nopool)
# ----------------------------------------------------------------------------
def init_params(key, number_f=32):
    layer_defs = [
        ("e_conv1", 3, number_f),
        ("e_conv2", number_f, number_f),
        ("e_conv3", number_f, number_f),
        ("e_conv4", number_f, number_f),
        ("e_conv5", number_f * 2, number_f),
        ("e_conv6", number_f * 2, number_f),
        ("e_conv7", number_f * 2, 24),
    ]
    params = {}
    keys = jax.random.split(key, len(layer_defs))
    for k, (name, cin, cout) in zip(keys, layer_defs):
        kw, kb = jax.random.split(k)
        w = 0.05 * jax.random.normal(kw, (3, 3, cin, cout), jnp.float32)
        b = 0.01 * jax.random.normal(kb, (cout,), jnp.float32)
        params[name] = (w, b)
    return params


if __name__ == "__main__":
    key = jax.random.PRNGKey(0)
    kx1, kx2, kp = jax.random.split(key, 3)
    params = init_params(kp)

    fwd = jax.jit(zero_dce_forward, static_argnames=("strip_rows",))

    # Case 1: small image, whole-image (single-strip) path.
    N, C, H, W = 2, 3, 16, 16
    x = jax.random.uniform(kx1, (N, C, H, W), jnp.float32)
    out = jax.block_until_ready(fwd(x, params))
    ref = zero_dce_reference(x, params)
    assert out.shape == (N, 3, H, W) and out.dtype == jnp.float32
    err = float(jnp.max(jnp.abs(out - ref)))
    assert bool(jnp.all(jnp.isfinite(out))) and err < 5e-2, err

    # Case 2: exercise the halo'd H-strip grid path (2 strips of 16 rows).
    N2, H2, W2 = 1, 32, 32
    x2 = jax.random.uniform(kx2, (N2, 3, H2, W2), jnp.float32)
    out2 = jax.block_until_ready(fwd(x2, params, strip_rows=16))
    ref2 = zero_dce_reference(x2, params)
    assert out2.shape == (N2, 3, H2, W2)
    err2 = float(jnp.max(jnp.abs(out2 - ref2)))
    assert bool(jnp.all(jnp.isfinite(out2))) and err2 < 5e-2, err2

    print("KERNEL_OK")
</pallas_src>

<mosaic_0001>
module attributes {stable_mosaic.version = 11 : i64} {
  func.func @zero_dce_kernel(%arg0: i32, %arg1: i32, %arg2: memref<1x1x3x256xf32, #tpu.memory_space<vmem>>, %arg3: memref<3x32x9xbf16, #tpu.memory_space<vmem>>, %arg4: memref<32x1xf32, #tpu.memory_space<vmem>>, %arg5: memref<3x32x96xbf16, #tpu.memory_space<vmem>>, %arg6: memref<32x1xf32, #tpu.memory_space<vmem>>, %arg7: memref<3x32x96xbf16, #tpu.memory_space<vmem>>, %arg8: memref<32x1xf32, #tpu.memory_space<vmem>>, %arg9: memref<3x32x96xbf16, #tpu.memory_space<vmem>>, %arg10: memref<32x1xf32, #tpu.memory_space<vmem>>, %arg11: memref<3x32x192xbf16, #tpu.memory_space<vmem>>, %arg12: memref<32x1xf32, #tpu.memory_space<vmem>>, %arg13: memref<3x32x192xbf16, #tpu.memory_space<vmem>>, %arg14: memref<32x1xf32, #tpu.memory_space<vmem>>, %arg15: memref<3x24x192xbf16, #tpu.memory_space<vmem>>, %arg16: memref<24x1xf32, #tpu.memory_space<vmem>>, %arg17: memref<1x3x256xf32, #tpu.memory_space<vmem>>) attributes {dimension_semantics = [#tpu.dimension_semantics<parallel>, #tpu.dimension_semantics<parallel>], iteration_bounds = array<i64: 2, 1>, scalar_prefetch = 0 : i64, scratch_operands = 0 : i64, tpu.core_type = #tpu.core_type<tc>, window_params = [{transform_indices = @transform_0, window_bounds = array<i64: 1, 1, 3, 256>}, {pipeline_mode = #tpu.pipeline_mode<synchronous>, transform_indices = @transform_1, window_bounds = array<i64: 3, 32, 9>}, {pipeline_mode = #tpu.pipeline_mode<synchronous>, transform_indices = @transform_2, window_bounds = array<i64: 32, 1>}, {pipeline_mode = #tpu.pipeline_mode<synchronous>, transform_indices = @transform_3, window_bounds = array<i64: 3, 32, 96>}, {pipeline_mode = #tpu.pipeline_mode<synchronous>, transform_indices = @transform_4, window_bounds = array<i64: 32, 1>}, {pipeline_mode = #tpu.pipeline_mode<synchronous>, transform_indices = @transform_5, window_bounds = array<i64: 3, 32, 96>}, {pipeline_mode = #tpu.pipeline_mode<synchronous>, transform_indices = @transform_6, window_bounds = array<i64: 32, 1>}, {pipeline_mode = #tpu.pipeline_mode<synchronous>, transform_indices = @transform_7, window_bounds = array<i64: 3, 32, 96>}, {pipeline_mode = #tpu.pipeline_mode<synchronous>, transform_indices = @transform_8, window_bounds = array<i64: 32, 1>}, {pipeline_mode = #tpu.pipeline_mode<synchronous>, transform_indices = @transform_9, window_bounds = array<i64: 3, 32, 192>}, {pipeline_mode = #tpu.pipeline_mode<synchronous>, transform_indices = @transform_10, window_bounds = array<i64: 32, 1>}, {pipeline_mode = #tpu.pipeline_mode<synchronous>, transform_indices = @transform_11, window_bounds = array<i64: 3, 32, 192>}, {pipeline_mode = #tpu.pipeline_mode<synchronous>, transform_indices = @transform_12, window_bounds = array<i64: 32, 1>}, {pipeline_mode = #tpu.pipeline_mode<synchronous>, transform_indices = @transform_13, window_bounds = array<i64: 3, 24, 192>}, {pipeline_mode = #tpu.pipeline_mode<synchronous>, transform_indices = @transform_14, window_bounds = array<i64: 24, 1>}, {transform_indices = @transform_15, window_bounds = array<i64: 1, 3, 256>}]} {
    %c0 = arith.constant 0 : index
    %c0_0 = arith.constant 0 : index
    %c0_1 = arith.constant 0 : index
    %c0_2 = arith.constant 0 : index
    %0 = vector.load %arg2[%c0, %c0_0, %c0_1, %c0_2] : memref<1x1x3x256xf32, #tpu.memory_space<vmem>>, vector<1x1x3x256xf32>
    %1 = vector.shape_cast %0 : vector<1x1x3x256xf32> to vector<3x256xf32>
    %2 = arith.truncf %1 : vector<3x256xf32> to vector<3x256xbf16>
    %3 = tpu.iota {dimensions = array<i32: 1>} : vector<1x256xi32>
    %c16_i32 = arith.constant 16 : i32
    %c0_i32 = arith.constant 0 : i32
    %4 = arith.cmpi eq, %c16_i32, %c0_i32 : i32
    %c1_i32 = arith.constant 1 : i32
    %5 = arith.select %4, %c1_i32, %c16_i32 : i32
    %6 = vector.broadcast %5 : i32 to vector<1x256xi32>
    %7 = arith.remsi %3, %6 : vector<1x256xi32>
    %c0_i32_3 = arith.constant 0 : i32
    %8 = vector.broadcast %c0_i32_3 : i32 to vector<1x256xi32>
    %9 = arith.cmpi ne, %7, %8 : vector<1x256xi32>
    %c0_i32_4 = arith.constant 0 : i32
    %10 = vector.broadcast %c0_i32_4 : i32 to vector<1x256xi32>
    %11 = arith.cmpi slt, %7, %10 : vector<1x256xi32>
    %c0_i32_5 = arith.constant 0 : i32
    %12 = arith.cmpi slt, %5, %c0_i32_5 : i32
    %13 = vector.broadcast %12 : i1 to vector<1x256xi1>
    %14 = vector.broadcast %13 : vector<1x256xi1> to vector<1x256xi1>
    %15 = arith.xori %11, %14 : vector<1x256xi1>
    %16 = arith.andi %15, %9 : vector<1x256xi1>
    %17 = vector.broadcast %5 : i32 to vector<1x256xi32>
    %18 = arith.addi %7, %17 : vector<1x256xi32>
    %19 = arith.select %16, %18, %7 : vector<1x256xi1>, vector<1x256xi32>
    %c0_i32_6 = arith.constant 0 : i32
    %20 = vector.broadcast %c0_i32_6 : i32 to vector<1x256xi32>
    %21 = arith.cmpi eq, %19, %20 : vector<1x256xi32>
    %c15_i32 = arith.constant 15 : i32
    %22 = vector.broadcast %c15_i32 : i32 to vector<1x256xi32>
    %23 = arith.cmpi eq, %19, %22 : vector<1x256xi32>
    %cst = arith.constant 0.000000e+00 : bf16
    %24 = vector.broadcast %cst : bf16 to vector<3x1xbf16>
    %25 = vector.extract_strided_slice %2 {offsets = [0, 0], sizes = [3, 255], strides = [1, 1]} : vector<3x256xbf16> to vector<3x255xbf16>
    %26 = tpu.concatenate %24, %25 in 1 : vector<3x1xbf16>, vector<3x255xbf16> -> vector<3x256xbf16>
    %cst_7 = arith.constant 0.000000e+00 : f32
    %27 = arith.truncf %cst_7 : f32 to bf16
    %28 = vector.shape_cast %21 : vector<1x256xi1> to vector<1x256xi1>
    %29 = vector.broadcast %28 : vector<1x256xi1> to vector<3x256xi1>
    %30 = vector.broadcast %27 : bf16 to vector<3x256xbf16>
    %31 = arith.select %29, %30, %26 : vector<3x256xi1>, vector<3x256xbf16>
    %cst_8 = arith.constant 0.000000e+00 : bf16
    %32 = vector.broadcast %cst_8 : bf16 to vector<3x1xbf16>
    %33 = vector.extract_strided_slice %2 {offsets = [0, 1], sizes = [3, 255], strides = [1, 1]} : vector<3x256xbf16> to vector<3x255xbf16>
    %34 = tpu.concatenate %33, %32 in 1 : vector<3x255xbf16>, vector<3x1xbf16> -> vector<3x256xbf16>
    %cst_9 = arith.constant 0.000000e+00 : f32
    %35 = arith.truncf %cst_9 : f32 to bf16
    %36 = vector.shape_cast %23 : vector<1x256xi1> to vector<1x256xi1>
    %37 = vector.broadcast %36 : vector<1x256xi1> to vector<3x256xi1>
    %38 = vector.broadcast %35 : bf16 to vector<3x256xbf16>
    %39 = arith.select %37, %38, %34 : vector<3x256xi1>, vector<3x256xbf16>
    %40 = tpu.concatenate %31, %2, %39 in 0 : vector<3x256xbf16>, vector<3x256xbf16>, vector<3x256xbf16> -> vector<9x256xbf16>
    %c0_10 = arith.constant 0 : index
    %c0_11 = arith.constant 0 : index
    %c0_12 = arith.constant 0 : index
    %41 = vector.load %arg3[%c0_10, %c0_11, %c0_12] : memref<3x32x9xbf16, #tpu.memory_space<vmem>>, vector<1x32x9xbf16>
    %42 = vector.shape_cast %41 : vector<1x32x9xbf16> to vector<32x9xbf16>
    %cst_13 = arith.constant dense<0.000000e+00> : vector<32x256xf32>
    %43 = tpu.matmul %42, %40, %cst_13 {dimension_numbers = #tpu.dot_dimension_numbers<[1], [0], [0], [1], [0, 0, 1, 1], [], []>} : vector<32x9xbf16>, vector<9x256xbf16>, vector<32x256xf32> -> vector<32x256xf32>
    %c1 = arith.constant 1 : index
    %c0_14 = arith.constant 0 : index
    %c0_15 = arith.constant 0 : index
    %44 = vector.load %arg3[%c1, %c0_14, %c0_15] : memref<3x32x9xbf16, #tpu.memory_space<vmem>>, vector<1x32x9xbf16>
    %45 = vector.shape_cast %44 : vector<1x32x9xbf16> to vector<32x9xbf16>
    %cst_16 = arith.constant dense<0.000000e+00> : vector<32x256xf32>
    %46 = tpu.matmul %45, %40, %cst_16 {dimension_numbers = #tpu.dot_dimension_numbers<[1], [0], [0], [1], [0, 0, 1, 1], [], []>} : vector<32x9xbf16>, vector<9x256xbf16>, vector<32x256xf32> -> vector<32x256xf32>
    %c2 = arith.constant 2 : index
    %c0_17 = arith.constant 0 : index
    %c0_18 = arith.constant 0 : index
    %47 = vector.load %arg3[%c2, %c0_17, %c0_18] : memref<3x32x9xbf16, #tpu.memory_space<vmem>>, vector<1x32x9xbf16>
    %48 = vector.shape_cast %47 : vector<1x32x9xbf16> to vector<32x9xbf16>
    %cst_19 = arith.constant dense<0.000000e+00> : vector<32x256xf32>
    %49 = tpu.matmul %48, %40, %cst_19 {dimension_numbers = #tpu.dot_dimension_numbers<[1], [0], [0], [1], [0, 0, 1, 1], [], []>} : vector<32x9xbf16>, vector<9x256xbf16>, vector<32x256xf32> -> vector<32x256xf32>
    %cst_20 = arith.constant 0.000000e+00 : f32
    %50 = vector.broadcast %cst_20 : f32 to vector<32x16xf32>
    %51 = vector.extract_strided_slice %43 {offsets = [0, 0], sizes = [32, 240], strides = [1, 1]} : vector<32x256xf32> to vector<32x240xf32>
    %52 = tpu.concatenate %50, %51 in 1 : vector<32x16xf32>, vector<32x240xf32> -> vector<32x256xf32>
    %53 = arith.addf %46, %52 : vector<32x256xf32>
    %cst_21 = arith.constant 0.000000e+00 : f32
    %54 = vector.broadcast %cst_21 : f32 to vector<32x16xf32>
    %55 = vector.extract_strided_slice %49 {offsets = [0, 16], sizes = [32, 240], strides = [1, 1]} : vector<32x256xf32> to vector<32x240xf32>
    %56 = tpu.concatenate %55, %54 in 1 : vector<32x240xf32>, vector<32x16xf32> -> vector<32x256xf32>
    %57 = arith.addf %53, %56 : vector<32x256xf32>
    %c0_22 = arith.constant 0 : index
    %c0_23 = arith.constant 0 : index
    %58 = vector.load %arg4[%c0_22, %c0_23] : memref<32x1xf32, #tpu.memory_space<vmem>>, vector<32x1xf32>
    %59 = vector.broadcast %58 : vector<32x1xf32> to vector<32x256xf32>
    %60 = arith.addf %57, %59 : vector<32x256xf32>
    %cst_24 = arith.constant 0.000000e+00 : f32
    %61 = vector.broadcast %cst_24 : f32 to vector<32x256xf32>
    %62 = arith.maximumf %60, %61 : vector<32x256xf32>
    %63 = arith.truncf %62 : vector<32x256xf32> to vector<32x256xbf16>
    %cst_25 = arith.constant 0.000000e+00 : bf16
    %64 = vector.broadcast %cst_25 : bf16 to vector<32x1xbf16>
    %65 = vector.extract_strided_slice %63 {offsets = [0, 0], sizes = [32, 255], strides = [1, 1]} : vector<32x256xbf16> to vector<32x255xbf16>
    %66 = tpu.concatenate %64, %65 in 1 : vector<32x1xbf16>, vector<32x255xbf16> -> vector<32x256xbf16>
    %cst_26 = arith.constant 0.000000e+00 : f32
    %67 = arith.truncf %cst_26 : f32 to bf16
    %68 = vector.shape_cast %21 : vector<1x256xi1> to vector<1x256xi1>
    %69 = vector.broadcast %68 : vector<1x256xi1> to vector<32x256xi1>
    %70 = vector.broadcast %67 : bf16 to vector<32x256xbf16>
    %71 = arith.select %69, %70, %66 : vector<32x256xi1>, vector<32x256xbf16>
    %cst_27 = arith.constant 0.000000e+00 : bf16
    %72 = vector.broadcast %cst_27 : bf16 to vector<32x1xbf16>
    %73 = vector.extract_strided_slice %63 {offsets = [0, 1], sizes = [32, 255], strides = [1, 1]} : vector<32x256xbf16> to vector<32x255xbf16>
    %74 = tpu.concatenate %73, %72 in 1 : vector<32x255xbf16>, vector<32x1xbf16> -> vector<32x256xbf16>
    %cst_28 = arith.constant 0.000000e+00 : f32
    %75 = arith.truncf %cst_28 : f32 to bf16
    %76 = vector.shape_cast %23 : vector<1x256xi1> to vector<1x256xi1>
    %77 = vector.broadcast %76 : vector<1x256xi1> to vector<32x256xi1>
    %78 = vector.broadcast %75 : bf16 to vector<32x256xbf16>
    %79 = arith.select %77, %78, %74 : vector<32x256xi1>, vector<32x256xbf16>
    %80 = tpu.concatenate %71, %63, %79 in 0 : vector<32x256xbf16>, vector<32x256xbf16>, vector<32x256xbf16> -> vector<96x256xbf16>
    %c0_29 = arith.constant 0 : index
    %c0_30 = arith.constant 0 : index
    %c0_31 = arith.constant 0 : index
    %81 = vector.load %arg5[%c0_29, %c0_30, %c0_31] : memref<3x32x96xbf16, #tpu.memory_space<vmem>>, vector<1x32x96xbf16>
    %82 = vector.shape_cast %81 : vector<1x32x96xbf16> to vector<32x96xbf16>
    %cst_32 = arith.constant dense<0.000000e+00> : vector<32x256xf32>
    %83 = tpu.matmul %82, %80, %cst_32 {dimension_numbers = #tpu.dot_dimension_numbers<[1], [0], [0], [1], [0, 0, 1, 1], [], []>} : vector<32x96xbf16>, vector<96x256xbf16>, vector<32x256xf32> -> vector<32x256xf32>
    %c1_33 = arith.constant 1 : index
    %c0_34 = arith.constant 0 : index
    %c0_35 = arith.constant 0 : index
    %84 = vector.load %arg5[%c1_33, %c0_34, %c0_35] : memref<3x32x96xbf16, #tpu.memory_space<vmem>>, vector<1x32x96xbf16>
    %85 = vector.shape_cast %84 : vector<1x32x96xbf16> to vector<32x96xbf16>
    %cst_36 = arith.constant dense<0.000000e+00> : vector<32x256xf32>
    %86 = tpu.matmul %85, %80, %cst_36 {dimension_numbers = #tpu.dot_dimension_numbers<[1], [0], [0], [1], [0, 0, 1, 1], [], []>} : vector<32x96xbf16>, vector<96x256xbf16>, vector<32x256xf32> -> vector<32x256xf32>
    %c2_37 = arith.constant 2 : index
    %c0_38 = arith.constant 0 : index
    %c0_39 = arith.constant 0 : index
    %87 = vector.load %arg5[%c2_37, %c0_38, %c0_39] : memref<3x32x96xbf16, #tpu.memory_space<vmem>>, vector<1x32x96xbf16>
    %88 = vector.shape_cast %87 : vector<1x32x96xbf16> to vector<32x96xbf16>
    %cst_40 = arith.constant dense<0.000000e+00> : vector<32x256xf32>
    %89 = tpu.matmul %88, %80, %cst_40 {dimension_numbers = #tpu.dot_dimension_numbers<[1], [0], [0], [1], [0, 0, 1, 1], [], []>} : vector<32x96xbf16>, vector<96x256xbf16>, vector<32x256xf32> -> vector<32x256xf32>
    %cst_41 = arith.constant 0.000000e+00 : f32
    %90 = vector.broadcast %cst_41 : f32 to vector<32x16xf32>
    %91 = vector.extract_strided_slice %83 {offsets = [0, 0], sizes = [32, 240], strides = [1, 1]} : vector<32x256xf32> to vector<32x240xf32>
    %92 = tpu.concatenate %90, %91 in 1 : vector<32x16xf32>, vector<32x240xf32> -> vector<32x256xf32>
    %93 = arith.addf %86, %92 : vector<32x256xf32>
    %cst_42 = arith.constant 0.000000e+00 : f32
    %94 = vector.broadcast %cst_42 : f32 to vector<32x16xf32>
    %95 = vector.extract_strided_slice %89 {offsets = [0, 16], sizes = [32, 240], strides = [1, 1]} : vector<32x256xf32> to vector<32x240xf32>
    %96 = tpu.concatenate %95, %94 in 1 : vector<32x240xf32>, vector<32x16xf32> -> vector<32x256xf32>
    %97 = arith.addf %93, %96 : vector<32x256xf32>
    %c0_43 = arith.constant 0 : index
    %c0_44 = arith.constant 0 : index
    %98 = vector.load %arg6[%c0_43, %c0_44] : memref<32x1xf32, #tpu.memory_space<vmem>>, vector<32x1xf32>
    %99 = vector.broadcast %98 : vector<32x1xf32> to vector<32x256xf32>
    %100 = arith.addf %97, %99 : vector<32x256xf32>
    %cst_45 = arith.constant 0.000000e+00 : f32
    %101 = vector.broadcast %cst_45 : f32 to vector<32x256xf32>
    %102 = arith.maximumf %100, %101 : vector<32x256xf32>
    %103 = arith.truncf %102 : vector<32x256xf32> to vector<32x256xbf16>
    %cst_46 = arith.constant 0.000000e+00 : bf16
    %104 = vector.broadcast %cst_46 : bf16 to vector<32x1xbf16>
    %105 = vector.extract_strided_slice %103 {offsets = [0, 0], sizes = [32, 255], strides = [1, 1]} : vector<32x256xbf16> to vector<32x255xbf16>
    %106 = tpu.concatenate %104, %105 in 1 : vector<32x1xbf16>, vector<32x255xbf16> -> vector<32x256xbf16>
    %cst_47 = arith.constant 0.000000e+00 : f32
    %107 = arith.truncf %cst_47 : f32 to bf16
    %108 = vector.shape_cast %21 : vector<1x256xi1> to vector<1x256xi1>
    %109 = vector.broadcast %108 : vector<1x256xi1> to vector<32x256xi1>
    %110 = vector.broadcast %107 : bf16 to vector<32x256xbf16>
    %111 = arith.select %109, %110, %106 : vector<32x256xi1>, vector<32x256xbf16>
    %cst_48 = arith.constant 0.000000e+00 : bf16
    %112 = vector.broadcast %cst_48 : bf16 to vector<32x1xbf16>
    %113 = vector.extract_strided_slice %103 {offsets = [0, 1], sizes = [32, 255], strides = [1, 1]} : vector<32x256xbf16> to vector<32x255xbf16>
    %114 = tpu.concatenate %113, %112 in 1 : vector<32x255xbf16>, vector<32x1xbf16> -> vector<32x256xbf16>
    %cst_49 = arith.constant 0.000000e+00 : f32
    %115 = arith.truncf %cst_49 : f32 to bf16
    %116 = vector.shape_cast %23 : vector<1x256xi1> to vector<1x256xi1>
    %117 = vector.broadcast %116 : vector<1x256xi1> to vector<32x256xi1>
    %118 = vector.broadcast %115 : bf16 to vector<32x256xbf16>
    %119 = arith.select %117, %118, %114 : vector<32x256xi1>, vector<32x256xbf16>
    %120 = tpu.concatenate %111, %103, %119 in 0 : vector<32x256xbf16>, vector<32x256xbf16>, vector<32x256xbf16> -> vector<96x256xbf16>
    %c0_50 = arith.constant 0 : index
    %c0_51 = arith.constant 0 : index
    %c0_52 = arith.constant 0 : index
    %121 = vector.load %arg7[%c0_50, %c0_51, %c0_52] : memref<3x32x96xbf16, #tpu.memory_space<vmem>>, vector<1x32x96xbf16>
    %122 = vector.shape_cast %121 : vector<1x32x96xbf16> to vector<32x96xbf16>
    %cst_53 = arith.constant dense<0.000000e+00> : vector<32x256xf32>
    %123 = tpu.matmul %122, %120, %cst_53 {dimension_numbers = #tpu.dot_dimension_numbers<[1], [0], [0], [1], [0, 0, 1, 1], [], []>} : vector<32x96xbf16>, vector<96x256xbf16>, vector<32x256xf32> -> vector<32x256xf32>
    %c1_54 = arith.constant 1 : index
    %c0_55 = arith.constant 0 : index
    %c0_56 = arith.constant 0 : index
    %124 = vector.load %arg7[%c1_54, %c0_55, %c0_56] : memref<3x32x96xbf16, #tpu.memory_space<vmem>>, vector<1x32x96xbf16>
    %125 = vector.shape_cast %124 : vector<1x32x96xbf16> to vector<32x96xbf16>
    %cst_57 = arith.constant dense<0.000000e+00> : vector<32x256xf32>
    %126 = tpu.matmul %125, %120, %cst_57 {dimension_numbers = #tpu.dot_dimension_numbers<[1], [0], [0], [1], [0, 0, 1, 1], [], []>} : vector<32x96xbf16>, vector<96x256xbf16>, vector<32x256xf32> -> vector<32x256xf32>
    %c2_58 = arith.constant 2 : index
    %c0_59 = arith.constant 0 : index
    %c0_60 = arith.constant 0 : index
    %127 = vector.load %arg7[%c2_58, %c0_59, %c0_60] : memref<3x32x96xbf16, #tpu.memory_space<vmem>>, vector<1x32x96xbf16>
    %128 = vector.shape_cast %127 : vector<1x32x96xbf16> to vector<32x96xbf16>
    %cst_61 = arith.constant dense<0.000000e+00> : vector<32x256xf32>
    %129 = tpu.matmul %128, %120, %cst_61 {dimension_numbers = #tpu.dot_dimension_numbers<[1], [0], [0], [1], [0, 0, 1, 1], [], []>} : vector<32x96xbf16>, vector<96x256xbf16>, vector<32x256xf32> -> vector<32x256xf32>
    %cst_62 = arith.constant 0.000000e+00 : f32
    %130 = vector.broadcast %cst_62 : f32 to vector<32x16xf32>
    %131 = vector.extract_strided_slice %123 {offsets = [0, 0], sizes = [32, 240], strides = [1, 1]} : vector<32x256xf32> to vector<32x240xf32>
    %132 = tpu.concatenate %130, %131 in 1 : vector<32x16xf32>, vector<32x240xf32> -> vector<32x256xf32>
    %133 = arith.addf %126, %132 : vector<32x256xf32>
    %cst_63 = arith.constant 0.000000e+00 : f32
    %134 = vector.broadcast %cst_63 : f32 to vector<32x16xf32>
    %135 = vector.extract_strided_slice %129 {offsets = [0, 16], sizes = [32, 240], strides = [1, 1]} : vector<32x256xf32> to vector<32x240xf32>
    %136 = tpu.concatenate %135, %134 in 1 : vector<32x240xf32>, vector<32x16xf32> -> vector<32x256xf32>
    %137 = arith.addf %133, %136 : vector<32x256xf32>
    %c0_64 = arith.constant 0 : index
    %c0_65 = arith.constant 0 : index
    %138 = vector.load %arg8[%c0_64, %c0_65] : memref<32x1xf32, #tpu.memory_space<vmem>>, vector<32x1xf32>
    %139 = vector.broadcast %138 : vector<32x1xf32> to vector<32x256xf32>
    %140 = arith.addf %137, %139 : vector<32x256xf32>
    %cst_66 = arith.constant 0.000000e+00 : f32
    %141 = vector.broadcast %cst_66 : f32 to vector<32x256xf32>
    %142 = arith.maximumf %140, %141 : vector<32x256xf32>
    %143 = arith.truncf %142 : vector<32x256xf32> to vector<32x256xbf16>
    %cst_67 = arith.constant 0.000000e+00 : bf16
    %144 = vector.broadcast %cst_67 : bf16 to vector<32x1xbf16>
    %145 = vector.extract_strided_slice %143 {offsets = [0, 0], sizes = [32, 255], strides = [1, 1]} : vector<32x256xbf16> to vector<32x255xbf16>
    %146 = tpu.concatenate %144, %145 in 1 : vector<32x1xbf16>, vector<32x255xbf16> -> vector<32x256xbf16>
    %cst_68 = arith.constant 0.000000e+00 : f32
    %147 = arith.truncf %cst_68 : f32 to bf16
    %148 = vector.shape_cast %21 : vector<1x256xi1> to vector<1x256xi1>
    %149 = vector.broadcast %148 : vector<1x256xi1> to vector<32x256xi1>
    %150 = vector.broadcast %147 : bf16 to vector<32x256xbf16>
    %151 = arith.select %149, %150, %146 : vector<32x256xi1>, vector<32x256xbf16>
    %cst_69 = arith.constant 0.000000e+00 : bf16
    %152 = vector.broadcast %cst_69 : bf16 to vector<32x1xbf16>
    %153 = vector.extract_strided_slice %143 {offsets = [0, 1], sizes = [32, 255], strides = [1, 1]} : vector<32x256xbf16> to vector<32x255xbf16>
    %154 = tpu.concatenate %153, %152 in 1 : vector<32x255xbf16>, vector<32x1xbf16> -> vector<32x256xbf16>
    %cst_70 = arith.constant 0.000000e+00 : f32
    %155 = arith.truncf %cst_70 : f32 to bf16
    %156 = vector.shape_cast %23 : vector<1x256xi1> to vector<1x256xi1>
    %157 = vector.broadcast %156 : vector<1x256xi1> to vector<32x256xi1>
    %158 = vector.broadcast %155 : bf16 to vector<32x256xbf16>
    %159 = arith.select %157, %158, %154 : vector<32x256xi1>, vector<32x256xbf16>
    %160 = tpu.concatenate %151, %143, %159 in 0 : vector<32x256xbf16>, vector<32x256xbf16>, vector<32x256xbf16> -> vector<96x256xbf16>
    %c0_71 = arith.constant 0 : index
    %c0_72 = arith.constant 0 : index
    %c0_73 = arith.constant 0 : index
    %161 = vector.load %arg9[%c0_71, %c0_72, %c0_73] : memref<3x32x96xbf16, #tpu.memory_space<vmem>>, vector<1x32x96xbf16>
    %162 = vector.shape_cast %161 : vector<1x32x96xbf16> to vector<32x96xbf16>
    %cst_74 = arith.constant dense<0.000000e+00> : vector<32x256xf32>
    %163 = tpu.matmul %162, %160, %cst_74 {dimension_numbers = #tpu.dot_dimension_numbers<[1], [0], [0], [1], [0, 0, 1, 1], [], []>} : vector<32x96xbf16>, vector<96x256xbf16>, vector<32x256xf32> -> vector<32x256xf32>
    %c1_75 = arith.constant 1 : index
    %c0_76 = arith.constant 0 : index
    %c0_77 = arith.constant 0 : index
    %164 = vector.load %arg9[%c1_75, %c0_76, %c0_77] : memref<3x32x96xbf16, #tpu.memory_space<vmem>>, vector<1x32x96xbf16>
    %165 = vector.shape_cast %164 : vector<1x32x96xbf16> to vector<32x96xbf16>
    %cst_78 = arith.constant dense<0.000000e+00> : vector<32x256xf32>
    %166 = tpu.matmul %165, %160, %cst_78 {dimension_numbers = #tpu.dot_dimension_numbers<[1], [0], [0], [1], [0, 0, 1, 1], [], []>} : vector<32x96xbf16>, vector<96x256xbf16>, vector<32x256xf32> -> vector<32x256xf32>
    %c2_79 = arith.constant 2 : index
    %c0_80 = arith.constant 0 : index
    %c0_81 = arith.constant 0 : index
    %167 = vector.load %arg9[%c2_79, %c0_80, %c0_81] : memref<3x32x96xbf16, #tpu.memory_space<vmem>>, vector<1x32x96xbf16>
    %168 = vector.shape_cast %167 : vector<1x32x96xbf16> to vector<32x96xbf16>
    %cst_82 = arith.constant dense<0.000000e+00> : vector<32x256xf32>
    %169 = tpu.matmul %168, %160, %cst_82 {dimension_numbers = #tpu.dot_dimension_numbers<[1], [0], [0], [1], [0, 0, 1, 1], [], []>} : vector<32x96xbf16>, vector<96x256xbf16>, vector<32x256xf32> -> vector<32x256xf32>
    %cst_83 = arith.constant 0.000000e+00 : f32
    %170 = vector.broadcast %cst_83 : f32 to vector<32x16xf32>
    %171 = vector.extract_strided_slice %163 {offsets = [0, 0], sizes = [32, 240], strides = [1, 1]} : vector<32x256xf32> to vector<32x240xf32>
    %172 = tpu.concatenate %170, %171 in 1 : vector<32x16xf32>, vector<32x240xf32> -> vector<32x256xf32>
    %173 = arith.addf %166, %172 : vector<32x256xf32>
    %cst_84 = arith.constant 0.000000e+00 : f32
    %174 = vector.broadcast %cst_84 : f32 to vector<32x16xf32>
    %175 = vector.extract_strided_slice %169 {offsets = [0, 16], sizes = [32, 240], strides = [1, 1]} : vector<32x256xf32> to vector<32x240xf32>
    %176 = tpu.concatenate %175, %174 in 1 : vector<32x240xf32>, vector<32x16xf32> -> vector<32x256xf32>
    %177 = arith.addf %173, %176 : vector<32x256xf32>
    %c0_85 = arith.constant 0 : index
    %c0_86 = arith.constant 0 : index
    %178 = vector.load %arg10[%c0_85, %c0_86] : memref<32x1xf32, #tpu.memory_space<vmem>>, vector<32x1xf32>
    %179 = vector.broadcast %178 : vector<32x1xf32> to vector<32x256xf32>
    %180 = arith.addf %177, %179 : vector<32x256xf32>
    %cst_87 = arith.constant 0.000000e+00 : f32
    %181 = vector.broadcast %cst_87 : f32 to vector<32x256xf32>
    %182 = arith.maximumf %180, %181 : vector<32x256xf32>
    %183 = arith.truncf %182 : vector<32x256xf32> to vector<32x256xbf16>
    %cst_88 = arith.constant 0.000000e+00 : bf16
    %184 = vector.broadcast %cst_88 : bf16 to vector<32x1xbf16>
    %185 = vector.extract_strided_slice %143 {offsets = [0, 0], sizes = [32, 255], strides = [1, 1]} : vector<32x256xbf16> to vector<32x255xbf16>
    %186 = tpu.concatenate %184, %185 in 1 : vector<32x1xbf16>, vector<32x255xbf16> -> vector<32x256xbf16>
    %cst_89 = arith.constant 0.000000e+00 : f32
    %187 = arith.truncf %cst_89 : f32 to bf16
    %188 = vector.shape_cast %21 : vector<1x256xi1> to vector<1x256xi1>
    %189 = vector.broadcast %188 : vector<1x256xi1> to vector<32x256xi1>
    %190 = vector.broadcast %187 : bf16 to vector<32x256xbf16>
    %191 = arith.select %189, %190, %186 : vector<32x256xi1>, vector<32x256xbf16>
    %cst_90 = arith.constant 0.000000e+00 : bf16
    %192 = vector.broadcast %cst_90 : bf16 to vector<32x1xbf16>
    %193 = vector.extract_strided_slice %143 {offsets = [0, 1], sizes = [32, 255], strides = [1, 1]} : vector<32x256xbf16> to vector<32x255xbf16>
    %194 = tpu.concatenate %193, %192 in 1 : vector<32x255xbf16>, vector<32x1xbf16> -> vector<32x256xbf16>
    %cst_91 = arith.constant 0.000000e+00 : f32
    %195 = arith.truncf %cst_91 : f32 to bf16
    %196 = vector.shape_cast %23 : vector<1x256xi1> to vector<1x256xi1>
    %197 = vector.broadcast %196 : vector<1x256xi1> to vector<32x256xi1>
    %198 = vector.broadcast %195 : bf16 to vector<32x256xbf16>
    %199 = arith.select %197, %198, %194 : vector<32x256xi1>, vector<32x256xbf16>
    %cst_92 = arith.constant 0.000000e+00 : bf16
    %200 = vector.broadcast %cst_92 : bf16 to vector<32x1xbf16>
    %201 = vector.extract_strided_slice %183 {offsets = [0, 0], sizes = [32, 255], strides = [1, 1]} : vector<32x256xbf16> to vector<32x255xbf16>
    %202 = tpu.concatenate %200, %201 in 1 : vector<32x1xbf16>, vector<32x255xbf16> -> vector<32x256xbf16>
    %cst_93 = arith.constant 0.000000e+00 : f32
    %203 = arith.truncf %cst_93 : f32 to bf16
    %204 = vector.shape_cast %21 : vector<1x256xi1> to vector<1x256xi1>
    %205 = vector.broadcast %204 : vector<1x256xi1> to vector<32x256xi1>
    %206 = vector.broadcast %203 : bf16 to vector<32x256xbf16>
    %207 = arith.select %205, %206, %202 : vector<32x256xi1>, vector<32x256xbf16>
    %cst_94 = arith.constant 0.000000e+00 : bf16
    %208 = vector.broadcast %cst_94 : bf16 to vector<32x1xbf16>
    %209 = vector.extract_strided_slice %183 {offsets = [0, 1], sizes = [32, 255], strides = [1, 1]} : vector<32x256xbf16> to vector<32x255xbf16>
    %210 = tpu.concatenate %209, %208 in 1 : vector<32x255xbf16>, vector<32x1xbf16> -> vector<32x256xbf16>
    %cst_95 = arith.constant 0.000000e+00 : f32
    %211 = arith.truncf %cst_95 : f32 to bf16
    %212 = vector.shape_cast %23 : vector<1x256xi1> to vector<1x256xi1>
    %213 = vector.broadcast %212 : vector<1x256xi1> to vector<32x256xi1>
    %214 = vector.broadcast %211 : bf16 to vector<32x256xbf16>
    %215 = arith.select %213, %214, %210 : vector<32x256xi1>, vector<32x256xbf16>
    %216 = tpu.concatenate %191, %143, %199, %207, %183, %215 in 0 : vector<32x256xbf16>, vector<32x256xbf16>, vector<32x256xbf16>, vector<32x256xbf16>, vector<32x256xbf16>, vector<32x256xbf16> -> vector<192x256xbf16>
    %c0_96 = arith.constant 0 : index
    %c0_97 = arith.constant 0 : index
    %c0_98 = arith.constant 0 : index
    %217 = vector.load %arg11[%c0_96, %c0_97, %c0_98] : memref<3x32x192xbf16, #tpu.memory_space<vmem>>, vector<1x32x192xbf16>
    %218 = vector.shape_cast %217 : vector<1x32x192xbf16> to vector<32x192xbf16>
    %cst_99 = arith.constant dense<0.000000e+00> : vector<32x256xf32>
    %219 = tpu.matmul %218, %216, %cst_99 {dimension_numbers = #tpu.dot_dimension_numbers<[1], [0], [0], [1], [0, 0, 1, 1], [], []>} : vector<32x192xbf16>, vector<192x256xbf16>, vector<32x256xf32> -> vector<32x256xf32>
    %c1_100 = arith.constant 1 : index
    %c0_101 = arith.constant 0 : index
    %c0_102 = arith.constant 0 : index
    %220 = vector.load %arg11[%c1_100, %c0_101, %c0_102] : memref<3x32x192xbf16, #tpu.memory_space<vmem>>, vector<1x32x192xbf16>
    %221 = vector.shape_cast %220 : vector<1x32x192xbf16> to vector<32x192xbf16>
    %cst_103 = arith.constant dense<0.000000e+00> : vector<32x256xf32>
    %222 = tpu.matmul %221, %216, %cst_103 {dimension_numbers = #tpu.dot_dimension_numbers<[1], [0], [0], [1], [0, 0, 1, 1], [], []>} : vector<32x192xbf16>, vector<192x256xbf16>, vector<32x256xf32> -> vector<32x256xf32>
    %c2_104 = arith.constant 2 : index
    %c0_105 = arith.constant 0 : index
    %c0_106 = arith.constant 0 : index
    %223 = vector.load %arg11[%c2_104, %c0_105, %c0_106] : memref<3x32x192xbf16, #tpu.memory_space<vmem>>, vector<1x32x192xbf16>
    %224 = vector.shape_cast %223 : vector<1x32x192xbf16> to vector<32x192xbf16>
    %cst_107 = arith.constant dense<0.000000e+00> : vector<32x256xf32>
    %225 = tpu.matmul %224, %216, %cst_107 {dimension_numbers = #tpu.dot_dimension_numbers<[1], [0], [0], [1], [0, 0, 1, 1], [], []>} : vector<32x192xbf16>, vector<192x256xbf16>, vector<32x256xf32> -> vector<32x256xf32>
    %cst_108 = arith.constant 0.000000e+00 : f32
    %226 = vector.broadcast %cst_108 : f32 to vector<32x16xf32>
    %227 = vector.extract_strided_slice %219 {offsets = [0, 0], sizes = [32, 240], strides = [1, 1]} : vector<32x256xf32> to vector<32x240xf32>
    %228 = tpu.concatenate %226, %227 in 1 : vector<32x16xf32>, vector<32x240xf32> -> vector<32x256xf32>
    %229 = arith.addf %222, %228 : vector<32x256xf32>
    %cst_109 = arith.constant 0.000000e+00 : f32
    %230 = vector.broadcast %cst_109 : f32 to vector<32x16xf32>
    %231 = vector.extract_strided_slice %225 {offsets = [0, 16], sizes = [32, 240], strides = [1, 1]} : vector<32x256xf32> to vector<32x240xf32>
    %232 = tpu.concatenate %231, %230 in 1 : vector<32x240xf32>, vector<32x16xf32> -> vector<32x256xf32>
    %233 = arith.addf %229, %232 : vector<32x256xf32>
    %c0_110 = arith.constant 0 : index
    %c0_111 = arith.constant 0 : index
    %234 = vector.load %arg12[%c0_110, %c0_111] : memref<32x1xf32, #tpu.memory_space<vmem>>, vector<32x1xf32>
    %235 = vector.broadcast %234 : vector<32x1xf32> to vector<32x256xf32>
    %236 = arith.addf %233, %235 : vector<32x256xf32>
    %cst_112 = arith.constant 0.000000e+00 : f32
    %237 = vector.broadcast %cst_112 : f32 to vector<32x256xf32>
    %238 = arith.maximumf %236, %237 : vector<32x256xf32>
    %239 = arith.truncf %238 : vector<32x256xf32> to vector<32x256xbf16>
    %cst_113 = arith.constant 0.000000e+00 : bf16
    %240 = vector.broadcast %cst_113 : bf16 to vector<32x1xbf16>
    %241 = vector.extract_strided_slice %103 {offsets = [0, 0], sizes = [32, 255], strides = [1, 1]} : vector<32x256xbf16> to vector<32x255xbf16>
    %242 = tpu.concatenate %240, %241 in 1 : vector<32x1xbf16>, vector<32x255xbf16> -> vector<32x256xbf16>
    %cst_114 = arith.constant 0.000000e+00 : f32
    %243 = arith.truncf %cst_114 : f32 to bf16
    %244 = vector.shape_cast %21 : vector<1x256xi1> to vector<1x256xi1>
    %245 = vector.broadcast %244 : vector<1x256xi1> to vector<32x256xi1>
    %246 = vector.broadcast %243 : bf16 to vector<32x256xbf16>
    %247 = arith.select %245, %246, %242 : vector<32x256xi1>, vector<32x256xbf16>
    %cst_115 = arith.constant 0.000000e+00 : bf16
    %248 = vector.broadcast %cst_115 : bf16 to vector<32x1xbf16>
    %249 = vector.extract_strided_slice %103 {offsets = [0, 1], sizes = [32, 255], strides = [1, 1]} : vector<32x256xbf16> to vector<32x255xbf16>
    %250 = tpu.concatenate %249, %248 in 1 : vector<32x255xbf16>, vector<32x1xbf16> -> vector<32x256xbf16>
    %cst_116 = arith.constant 0.000000e+00 : f32
    %251 = arith.truncf %cst_116 : f32 to bf16
    %252 = vector.shape_cast %23 : vector<1x256xi1> to vector<1x256xi1>
    %253 = vector.broadcast %252 : vector<1x256xi1> to vector<32x256xi1>
    %254 = vector.broadcast %251 : bf16 to vector<32x256xbf16>
    %255 = arith.select %253, %254, %250 : vector<32x256xi1>, vector<32x256xbf16>
    %cst_117 = arith.constant 0.000000e+00 : bf16
    %256 = vector.broadcast %cst_117 : bf16 to vector<32x1xbf16>
    %257 = vector.extract_strided_slice %239 {offsets = [0, 0], sizes = [32, 255], strides = [1, 1]} : vector<32x256xbf16> to vector<32x255xbf16>
    %258 = tpu.concatenate %256, %257 in 1 : vector<32x1xbf16>, vector<32x255xbf16> -> vector<32x256xbf16>
    %cst_118 = arith.constant 0.000000e+00 : f32
    %259 = arith.truncf %cst_118 : f32 to bf16
    %260 = vector.shape_cast %21 : vector<1x256xi1> to vector<1x256xi1>
    %261 = vector.broadcast %260 : vector<1x256xi1> to vector<32x256xi1>
    %262 = vector.broadcast %259 : bf16 to vector<32x256xbf16>
    %263 = arith.select %261, %262, %258 : vector<32x256xi1>, vector<32x256xbf16>
    %cst_119 = arith.constant 0.000000e+00 : bf16
    %264 = vector.broadcast %cst_119 : bf16 to vector<32x1xbf16>
    %265 = vector.extract_strided_slice %239 {offsets = [0, 1], sizes = [32, 255], strides = [1, 1]} : vector<32x256xbf16> to vector<32x255xbf16>
    %266 = tpu.concatenate %265, %264 in 1 : vector<32x255xbf16>, vector<32x1xbf16> -> vector<32x256xbf16>
    %cst_120 = arith.constant 0.000000e+00 : f32
    %267 = arith.truncf %cst_120 : f32 to bf16
    %268 = vector.shape_cast %23 : vector<1x256xi1> to vector<1x256xi1>
    %269 = vector.broadcast %268 : vector<1x256xi1> to vector<32x256xi1>
    %270 = vector.broadcast %267 : bf16 to vector<32x256xbf16>
    %271 = arith.select %269, %270, %266 : vector<32x256xi1>, vector<32x256xbf16>
    %272 = tpu.concatenate %247, %103, %255, %263, %239, %271 in 0 : vector<32x256xbf16>, vector<32x256xbf16>, vector<32x256xbf16>, vector<32x256xbf16>, vector<32x256xbf16>, vector<32x256xbf16> -> vector<192x256xbf16>
    %c0_121 = arith.constant 0 : index
    %c0_122 = arith.constant 0 : index
    %c0_123 = arith.constant 0 : index
    %273 = vector.load %arg13[%c0_121, %c0_122, %c0_123] : memref<3x32x192xbf16, #tpu.memory_space<vmem>>, vector<1x32x192xbf16>
    %274 = vector.shape_cast %273 : vector<1x32x192xbf16> to vector<32x192xbf16>
    %cst_124 = arith.constant dense<0.000000e+00> : vector<32x256xf32>
    %275 = tpu.matmul %274, %272, %cst_124 {dimension_numbers = #tpu.dot_dimension_numbers<[1], [0], [0], [1], [0, 0, 1, 1], [], []>} : vector<32x192xbf16>, vector<192x256xbf16>, vector<32x256xf32> -> vector<32x256xf32>
    %c1_125 = arith.constant 1 : index
    %c0_126 = arith.constant 0 : index
    %c0_127 = arith.constant 0 : index
    %276 = vector.load %arg13[%c1_125, %c0_126, %c0_127] : memref<3x32x192xbf16, #tpu.memory_space<vmem>>, vector<1x32x192xbf16>
    %277 = vector.shape_cast %276 : vector<1x32x192xbf16> to vector<32x192xbf16>
    %cst_128 = arith.constant dense<0.000000e+00> : vector<32x256xf32>
    %278 = tpu.matmul %277, %272, %cst_128 {dimension_numbers = #tpu.dot_dimension_numbers<[1], [0], [0], [1], [0, 0, 1, 1], [], []>} : vector<32x192xbf16>, vector<192x256xbf16>, vector<32x256xf32> -> vector<32x256xf32>
    %c2_129 = arith.constant 2 : index
    %c0_130 = arith.constant 0 : index
    %c0_131 = arith.constant 0 : index
    %279 = vector.load %arg13[%c2_129, %c0_130, %c0_131] : memref<3x32x192xbf16, #tpu.memory_space<vmem>>, vector<1x32x192xbf16>
    %280 = vector.shape_cast %279 : vector<1x32x192xbf16> to vector<32x192xbf16>
    %cst_132 = arith.constant dense<0.000000e+00> : vector<32x256xf32>
    %281 = tpu.matmul %280, %272, %cst_132 {dimension_numbers = #tpu.dot_dimension_numbers<[1], [0], [0], [1], [0, 0, 1, 1], [], []>} : vector<32x192xbf16>, vector<192x256xbf16>, vector<32x256xf32> -> vector<32x256xf32>
    %cst_133 = arith.constant 0.000000e+00 : f32
    %282 = vector.broadcast %cst_133 : f32 to vector<32x16xf32>
    %283 = vector.extract_strided_slice %275 {offsets = [0, 0], sizes = [32, 240], strides = [1, 1]} : vector<32x256xf32> to vector<32x240xf32>
    %284 = tpu.concatenate %282, %283 in 1 : vector<32x16xf32>, vector<32x240xf32> -> vector<32x256xf32>
    %285 = arith.addf %278, %284 : vector<32x256xf32>
    %cst_134 = arith.constant 0.000000e+00 : f32
    %286 = vector.broadcast %cst_134 : f32 to vector<32x16xf32>
    %287 = vector.extract_strided_slice %281 {offsets = [0, 16], sizes = [32, 240], strides = [1, 1]} : vector<32x256xf32> to vector<32x240xf32>
    %288 = tpu.concatenate %287, %286 in 1 : vector<32x240xf32>, vector<32x16xf32> -> vector<32x256xf32>
    %289 = arith.addf %285, %288 : vector<32x256xf32>
    %c0_135 = arith.constant 0 : index
    %c0_136 = arith.constant 0 : index
    %290 = vector.load %arg14[%c0_135, %c0_136] : memref<32x1xf32, #tpu.memory_space<vmem>>, vector<32x1xf32>
    %291 = vector.broadcast %290 : vector<32x1xf32> to vector<32x256xf32>
    %292 = arith.addf %289, %291 : vector<32x256xf32>
    %cst_137 = arith.constant 0.000000e+00 : f32
    %293 = vector.broadcast %cst_137 : f32 to vector<32x256xf32>
    %294 = arith.maximumf %292, %293 : vector<32x256xf32>
    %295 = arith.truncf %294 : vector<32x256xf32> to vector<32x256xbf16>
    %cst_138 = arith.constant 0.000000e+00 : bf16
    %296 = vector.broadcast %cst_138 : bf16 to vector<32x1xbf16>
    %297 = vector.extract_strided_slice %63 {offsets = [0, 0], sizes = [32, 255], strides = [1, 1]} : vector<32x256xbf16> to vector<32x255xbf16>
    %298 = tpu.concatenate %296, %297 in 1 : vector<32x1xbf16>, vector<32x255xbf16> -> vector<32x256xbf16>
    %cst_139 = arith.constant 0.000000e+00 : f32
    %299 = arith.truncf %cst_139 : f32 to bf16
    %300 = vector.shape_cast %21 : vector<1x256xi1> to vector<1x256xi1>
    %301 = vector.broadcast %300 : vector<1x256xi1> to vector<32x256xi1>
    %302 = vector.broadcast %299 : bf16 to vector<32x256xbf16>
    %303 = arith.select %301, %302, %298 : vector<32x256xi1>, vector<32x256xbf16>
    %cst_140 = arith.constant 0.000000e+00 : bf16
    %304 = vector.broadcast %cst_140 : bf16 to vector<32x1xbf16>
    %305 = vector.extract_strided_slice %63 {offsets = [0, 1], sizes = [32, 255], strides = [1, 1]} : vector<32x256xbf16> to vector<32x255xbf16>
    %306 = tpu.concatenate %305, %304 in 1 : vector<32x255xbf16>, vector<32x1xbf16> -> vector<32x256xbf16>
    %cst_141 = arith.constant 0.000000e+00 : f32
    %307 = arith.truncf %cst_141 : f32 to bf16
    %308 = vector.shape_cast %23 : vector<1x256xi1> to vector<1x256xi1>
    %309 = vector.broadcast %308 : vector<1x256xi1> to vector<32x256xi1>
    %310 = vector.broadcast %307 : bf16 to vector<32x256xbf16>
    %311 = arith.select %309, %310, %306 : vector<32x256xi1>, vector<32x256xbf16>
    %cst_142 = arith.constant 0.000000e+00 : bf16
    %312 = vector.broadcast %cst_142 : bf16 to vector<32x1xbf16>
    %313 = vector.extract_strided_slice %295 {offsets = [0, 0], sizes = [32, 255], strides = [1, 1]} : vector<32x256xbf16> to vector<32x255xbf16>
    %314 = tpu.concatenate %312, %313 in 1 : vector<32x1xbf16>, vector<32x255xbf16> -> vector<32x256xbf16>
    %cst_143 = arith.constant 0.000000e+00 : f32
    %315 = arith.truncf %cst_143 : f32 to bf16
    %316 = vector.shape_cast %21 : vector<1x256xi1> to vector<1x256xi1>
    %317 = vector.broadcast %316 : vector<1x256xi1> to vector<32x256xi1>
    %318 = vector.broadcast %315 : bf16 to vector<32x256xbf16>
    %319 = arith.select %317, %318, %314 : vector<32x256xi1>, vector<32x256xbf16>
    %cst_144 = arith.constant 0.000000e+00 : bf16
    %320 = vector.broadcast %cst_144 : bf16 to vector<32x1xbf16>
    %321 = vector.extract_strided_slice %295 {offsets = [0, 1], sizes = [32, 255], strides = [1, 1]} : vector<32x256xbf16> to vector<32x255xbf16>
    %322 = tpu.concatenate %321, %320 in 1 : vector<32x255xbf16>, vector<32x1xbf16> -> vector<32x256xbf16>
    %cst_145 = arith.constant 0.000000e+00 : f32
    %323 = arith.truncf %cst_145 : f32 to bf16
    %324 = vector.shape_cast %23 : vector<1x256xi1> to vector<1x256xi1>
    %325 = vector.broadcast %324 : vector<1x256xi1> to vector<32x256xi1>
    %326 = vector.broadcast %323 : bf16 to vector<32x256xbf16>
    %327 = arith.select %325, %326, %322 : vector<32x256xi1>, vector<32x256xbf16>
    %328 = tpu.concatenate %303, %63, %311, %319, %295, %327 in 0 : vector<32x256xbf16>, vector<32x256xbf16>, vector<32x256xbf16>, vector<32x256xbf16>, vector<32x256xbf16>, vector<32x256xbf16> -> vector<192x256xbf16>
    %c0_146 = arith.constant 0 : index
    %c0_147 = arith.constant 0 : index
    %c0_148 = arith.constant 0 : index
    %329 = vector.load %arg15[%c0_146, %c0_147, %c0_148] : memref<3x24x192xbf16, #tpu.memory_space<vmem>>, vector<1x24x192xbf16>
    %330 = vector.shape_cast %329 : vector<1x24x192xbf16> to vector<24x192xbf16>
    %cst_149 = arith.constant dense<0.000000e+00> : vector<24x256xf32>
    %331 = tpu.matmul %330, %328, %cst_149 {dimension_numbers = #tpu.dot_dimension_numbers<[1], [0], [0], [1], [0, 0, 1, 1], [], []>} : vector<24x192xbf16>, vector<192x256xbf16>, vector<24x256xf32> -> vector<24x256xf32>
    %c1_150 = arith.constant 1 : index
    %c0_151 = arith.constant 0 : index
    %c0_152 = arith.constant 0 : index
    %332 = vector.load %arg15[%c1_150, %c0_151, %c0_152] : memref<3x24x192xbf16, #tpu.memory_space<vmem>>, vector<1x24x192xbf16>
    %333 = vector.shape_cast %332 : vector<1x24x192xbf16> to vector<24x192xbf16>
    %cst_153 = arith.constant dense<0.000000e+00> : vector<24x256xf32>
    %334 = tpu.matmul %333, %328, %cst_153 {dimension_numbers = #tpu.dot_dimension_numbers<[1], [0], [0], [1], [0, 0, 1, 1], [], []>} : vector<24x192xbf16>, vector<192x256xbf16>, vector<24x256xf32> -> vector<24x256xf32>
    %c2_154 = arith.constant 2 : index
    %c0_155 = arith.constant 0 : index
    %c0_156 = arith.constant 0 : index
    %335 = vector.load %arg15[%c2_154, %c0_155, %c0_156] : memref<3x24x192xbf16, #tpu.memory_space<vmem>>, vector<1x24x192xbf16>
    %336 = vector.shape_cast %335 : vector<1x24x192xbf16> to vector<24x192xbf16>
    %cst_157 = arith.constant dense<0.000000e+00> : vector<24x256xf32>
    %337 = tpu.matmul %336, %328, %cst_157 {dimension_numbers = #tpu.dot_dimension_numbers<[1], [0], [0], [1], [0, 0, 1, 1], [], []>} : vector<24x192xbf16>, vector<192x256xbf16>, vector<24x256xf32> -> vector<24x256xf32>
    %cst_158 = arith.constant 0.000000e+00 : f32
    %338 = vector.broadcast %cst_158 : f32 to vector<24x16xf32>
    %339 = vector.extract_strided_slice %331 {offsets = [0, 0], sizes = [24, 240], strides = [1, 1]} : vector<24x256xf32> to vector<24x240xf32>
    %340 = tpu.concatenate %338, %339 in 1 : vector<24x16xf32>, vector<24x240xf32> -> vector<24x256xf32>
    %341 = arith.addf %334, %340 : vector<24x256xf32>
    %cst_159 = arith.constant 0.000000e+00 : f32
    %342 = vector.broadcast %cst_159 : f32 to vector<24x16xf32>
    %343 = vector.extract_strided_slice %337 {offsets = [0, 16], sizes = [24, 240], strides = [1, 1]} : vector<24x256xf32> to vector<24x240xf32>
    %344 = tpu.concatenate %343, %342 in 1 : vector<24x240xf32>, vector<24x16xf32> -> vector<24x256xf32>
    %345 = arith.addf %341, %344 : vector<24x256xf32>
    %c0_160 = arith.constant 0 : index
    %c0_161 = arith.constant 0 : index
    %346 = vector.load %arg16[%c0_160, %c0_161] : memref<24x1xf32, #tpu.memory_space<vmem>>, vector<24x1xf32>
    %347 = vector.broadcast %346 : vector<24x1xf32> to vector<24x256xf32>
    %348 = arith.addf %345, %347 : vector<24x256xf32>
    %349 = math.tanh %348 : vector<24x256xf32>
    %350 = vector.extract_strided_slice %349 {offsets = [0, 0], sizes = [3, 256], strides = [1, 1]} : vector<24x256xf32> to vector<3x256xf32>
    %351 = arith.mulf %1, %1 : vector<3x256xf32>
    %352 = arith.subf %351, %1 : vector<3x256xf32>
    %353 = arith.mulf %350, %352 : vector<3x256xf32>
    %354 = arith.addf %1, %353 : vector<3x256xf32>
    %355 = vector.extract_strided_slice %349 {offsets = [3, 0], sizes = [3, 256], strides = [1, 1]} : vector<24x256xf32> to vector<3x256xf32>
    %356 = arith.mulf %354, %354 : vector<3x256xf32>
    %357 = arith.subf %356, %354 : vector<3x256xf32>
    %358 = arith.mulf %355, %357 : vector<3x256xf32>
    %359 = arith.addf %354, %358 : vector<3x256xf32>
    %360 = vector.extract_strided_slice %349 {offsets = [6, 0], sizes = [3, 256], strides = [1, 1]} : vector<24x256xf32> to vector<3x256xf32>
    %361 = arith.mulf %359, %359 : vector<3x256xf32>
    %362 = arith.subf %361, %359 : vector<3x256xf32>
    %363 = arith.mulf %360, %362 : vector<3x256xf32>
    %364 = arith.addf %359, %363 : vector<3x256xf32>
    %365 = vector.extract_strided_slice %349 {offsets = [9, 0], sizes = [3, 256], strides = [1, 1]} : vector<24x256xf32> to vector<3x256xf32>
    %366 = arith.mulf %364, %364 : vector<3x256xf32>
    %367 = arith.subf %366, %364 : vector<3x256xf32>
    %368 = arith.mulf %365, %367 : vector<3x256xf32>
    %369 = arith.addf %364, %368 : vector<3x256xf32>
    %370 = vector.extract_strided_slice %349 {offsets = [12, 0], sizes = [3, 256], strides = [1, 1]} : vector<24x256xf32> to vector<3x256xf32>
    %371 = arith.mulf %369, %369 : vector<3x256xf32>
    %372 = arith.subf %371, %369 : vector<3x256xf32>
    %373 = arith.mulf %370, %372 : vector<3x256xf32>
    %374 = arith.addf %369, %373 : vector<3x256xf32>
    %375 = vector.extract_strided_slice %349 {offsets = [15, 0], sizes = [3, 256], strides = [1, 1]} : vector<24x256xf32> to vector<3x256xf32>
    %376 = arith.mulf %374, %374 : vector<3x256xf32>
    %377 = arith.subf %376, %374 : vector<3x256xf32>
    %378 = arith.mulf %375, %377 : vector<3x256xf32>
    %379 = arith.addf %374, %378 : vector<3x256xf32>
    %380 = vector.extract_strided_slice %349 {offsets = [18, 0], sizes = [3, 256], strides = [1, 1]} : vector<24x256xf32> to vector<3x256xf32>
    %381 = arith.mulf %379, %379 : vector<3x256xf32>
    %382 = arith.subf %381, %379 : vector<3x256xf32>
    %383 = arith.mulf %380, %382 : vector<3x256xf32>
    %384 = arith.addf %379, %383 : vector<3x256xf32>
    %385 = vector.extract_strided_slice %349 {offsets = [21, 0], sizes = [3, 256], strides = [1, 1]} : vector<24x256xf32> to vector<3x256xf32>
    %386 = arith.mulf %384, %384 : vector<3x256xf32>
    %387 = arith.subf %386, %384 : vector<3x256xf32>
    %388 = arith.mulf %385, %387 : vector<3x256xf32>
    %389 = arith.addf %384, %388 : vector<3x256xf32>
    %c0_162 = arith.constant 0 : index
    %c0_163 = arith.constant 0 : index
    %c0_164 = arith.constant 0 : index
    %390 = vector.load %arg17[%c0_162, %c0_163, %c0_164] : memref<1x3x256xf32, #tpu.memory_space<vmem>>, vector<1x3x256xf32>
    %391 = vector.shape_cast %390 : vector<1x3x256xf32> to vector<3x256xf32>
    %392 = vector.shape_cast %389 : vector<3x256xf32> to vector<1x3x256xf32>
    tpu.vector_store %arg17[%c0_162, %c0_163, %c0_164], %392 {strides = array<i32>} : memref<1x3x256xf32, #tpu.memory_space<vmem>>, vector<1x3x256xf32>,
    return
  }
  func.func @transform_0(%arg0: i32, %arg1: i32) -> (i32, i32, i32, i32) {
    %c0_i32 = arith.constant 0 : i32
    %c0_i32_0 = arith.constant 0 : i32
    %c0_i32_1 = arith.constant 0 : i32
    return %arg0, %arg1, %c0_i32, %c0_i32_0 : i32, i32, i32, i32
  }
  func.func @transform_1(%arg0: i32, %arg1: i32) -> (i32, i32, i32) {
    %c0_i32 = arith.constant 0 : i32
    %c0_i32_0 = arith.constant 0 : i32
    %c0_i32_1 = arith.constant 0 : i32
    %c0_i32_2 = arith.constant 0 : i32
    return %c0_i32, %c0_i32_0, %c0_i32_1 : i32, i32, i32
  }
  func.func @transform_2(%arg0: i32, %arg1: i32) -> (i32, i32) {
    %c0_i32 = arith.constant 0 : i32
    %c0_i32_0 = arith.constant 0 : i32
    %c0_i32_1 = arith.constant 0 : i32
    return %c0_i32, %c0_i32_0 : i32, i32
  }
  func.func @transform_3(%arg0: i32, %arg1: i32) -> (i32, i32, i32) {
    %c0_i32 = arith.constant 0 : i32
    %c0_i32_0 = arith.constant 0 : i32
    %c0_i32_1 = arith.constant 0 : i32
    %c0_i32_2 = arith.constant 0 : i32
    return %c0_i32, %c0_i32_0, %c0_i32_1 : i32, i32, i32
  }
  func.func @transform_4(%arg0: i32, %arg1: i32) -> (i32, i32) {
    %c0_i32 = arith.constant 0 : i32
    %c0_i32_0 = arith.constant 0 : i32
    %c0_i32_1 = arith.constant 0 : i32
    return %c0_i32, %c0_i32_0 : i32, i32
  }
  func.func @transform_5(%arg0: i32, %arg1: i32) -> (i32, i32, i32) {
    %c0_i32 = arith.constant 0 : i32
    %c0_i32_0 = arith.constant 0 : i32
    %c0_i32_1 = arith.constant 0 : i32
    %c0_i32_2 = arith.constant 0 : i32
    return %c0_i32, %c0_i32_0, %c0_i32_1 : i32, i32, i32
  }
  func.func @transform_6(%arg0: i32, %arg1: i32) -> (i32, i32) {
    %c0_i32 = arith.constant 0 : i32
    %c0_i32_0 = arith.constant 0 : i32
    %c0_i32_1 = arith.constant 0 : i32
    return %c0_i32, %c0_i32_0 : i32, i32
  }
  func.func @transform_7(%arg0: i32, %arg1: i32) -> (i32, i32, i32) {
    %c0_i32 = arith.constant 0 : i32
    %c0_i32_0 = arith.constant 0 : i32
    %c0_i32_1 = arith.constant 0 : i32
    %c0_i32_2 = arith.constant 0 : i32
    return %c0_i32, %c0_i32_0, %c0_i32_1 : i32, i32, i32
  }
  func.func @transform_8(%arg0: i32, %arg1: i32) -> (i32, i32) {
    %c0_i32 = arith.constant 0 : i32
    %c0_i32_0 = arith.constant 0 : i32
    %c0_i32_1 = arith.constant 0 : i32
    return %c0_i32, %c0_i32_0 : i32, i32
  }
  func.func @transform_9(%arg0: i32, %arg1: i32) -> (i32, i32, i32) {
    %c0_i32 = arith.constant 0 : i32
    %c0_i32_0 = arith.constant 0 : i32
    %c0_i32_1 = arith.constant 0 : i32
    %c0_i32_2 = arith.constant 0 : i32
    return %c0_i32, %c0_i32_0, %c0_i32_1 : i32, i32, i32
  }
  func.func @transform_10(%arg0: i32, %arg1: i32) -> (i32, i32) {
    %c0_i32 = arith.constant 0 : i32
    %c0_i32_0 = arith.constant 0 : i32
    %c0_i32_1 = arith.constant 0 : i32
    return %c0_i32, %c0_i32_0 : i32, i32
  }
  func.func @transform_11(%arg0: i32, %arg1: i32) -> (i32, i32, i32) {
    %c0_i32 = arith.constant 0 : i32
    %c0_i32_0 = arith.constant 0 : i32
    %c0_i32_1 = arith.constant 0 : i32
    %c0_i32_2 = arith.constant 0 : i32
    return %c0_i32, %c0_i32_0, %c0_i32_1 : i32, i32, i32
  }
  func.func @transform_12(%arg0: i32, %arg1: i32) -> (i32, i32) {
    %c0_i32 = arith.constant 0 : i32
    %c0_i32_0 = arith.constant 0 : i32
    %c0_i32_1 = arith.constant 0 : i32
    return %c0_i32, %c0_i32_0 : i32, i32
  }
  func.func @transform_13(%arg0: i32, %arg1: i32) -> (i32, i32, i32) {
    %c0_i32 = arith.constant 0 : i32
    %c0_i32_0 = arith.constant 0 : i32
    %c0_i32_1 = arith.constant 0 : i32
    %c0_i32_2 = arith.constant 0 : i32
    return %c0_i32, %c0_i32_0, %c0_i32_1 : i32, i32, i32
  }
  func.func @transform_14(%arg0: i32, %arg1: i32) -> (i32, i32) {
    %c0_i32 = arith.constant 0 : i32
    %c0_i32_0 = arith.constant 0 : i32
    %c0_i32_1 = arith.constant 0 : i32
    return %c0_i32, %c0_i32_0 : i32, i32
  }
  func.func @transform_15(%arg0: i32, %arg1: i32) -> (i32, i32, i32) {
    %c0_i32 = arith.constant 0 : i32
    %c0_i32_0 = arith.constant 0 : i32
    return %arg0, %c0_i32, %arg1 : i32, i32, i32
  }
}

</mosaic_0001>

<llo_original>
// kernel: zero_dce_forward.1
$region0: #{zero_dce_forward.1}
  #allocation0 [shape = 'u32[]', space=smem, size = 0x4, offset = 0x4, fixed_abs, tag = 'smem constant byte address 0x4 - core index']
  #allocation1 [shape = 'u32[144,128]{1,0:T(1,128)}', space=vmem, size = 0x12000, scoped, tag = 'internal scratch']
  %s0 = inlined_call_operand.vmem [shape: f32[2,1,3,256], index: 0, kind: input, shape index: {}]
  %s1 = inlined_call_operand.vmem [shape: bf16[3,32,9], index: 1, kind: input, shape index: {}]
  %s2 = inlined_call_operand.vmem [shape: f32[32,1], index: 2, kind: input, shape index: {}]
  %s3 = inlined_call_operand.vmem [shape: bf16[3,32,96], index: 3, kind: input, shape index: {}]
  %s4 = inlined_call_operand.vmem [shape: f32[32,1], index: 4, kind: input, shape index: {}]
  %s5 = inlined_call_operand.vmem [shape: bf16[3,32,96], index: 5, kind: input, shape index: {}]
  %s6 = inlined_call_operand.vmem [shape: f32[32,1], index: 6, kind: input, shape index: {}]
  %s7 = inlined_call_operand.vmem [shape: bf16[3,32,96], index: 7, kind: input, shape index: {}]
  %s8 = inlined_call_operand.vmem [shape: f32[32,1], index: 8, kind: input, shape index: {}]
  %s9 = inlined_call_operand.vmem [shape: bf16[3,32,192], index: 9, kind: input, shape index: {}]
  %s10 = inlined_call_operand.vmem [shape: f32[32,1], index: 10, kind: input, shape index: {}]
  %s11 = inlined_call_operand.vmem [shape: bf16[3,32,192], index: 11, kind: input, shape index: {}]
  %s12 = inlined_call_operand.vmem [shape: f32[32,1], index: 12, kind: input, shape index: {}]
  %s13 = inlined_call_operand.vmem [shape: bf16[3,24,192], index: 13, kind: input, shape index: {}]
  %s14 = inlined_call_operand.vmem [shape: f32[24,1], index: 14, kind: input, shape index: {}]
  %s15 = inlined_call_operand.vmem [shape: f32[2,3,256], index: 15, kind: output, shape index: {}]
  %s16 = sld [smem:[#allocation0]]
  $region93: #{zero_dce_forward.1} parent=0
    _
  %s18 = ssub.s32 1, %s16
  %s19 = scalar_select 0, %s18, %s16
  loop: start=0, step=1, limit=4
  $region2: #{zero_dce_forward.1} parent=0 // loop_pre_header
    _
  $region3: #{zero_dce_forward.1} parent=0 // loop_header
    %s21 = sphi 0, %s25
    %p22 = scmp.ge.s32.totalorder %s21, 4
    %s28 = sphi 0, %s40
    %s29 = sphi 0, %s36
    %s30 = sphi 0, %s28
    %s31 = sphi 0, %s29
    %s32 = sphi 0, %s30
    %s33 = sphi 0, %s31
    %s45 = sphi 0, %s47
    %s48 = sphi 0, %s45
    %s49 = sphi 0, %s48
    %s65 = sphi 0, %s49
    %s69 = sphi 0, %s69
    %s71 = sphi 0, %s69
    %s72 = sphi 0, %s71
    %s86 = sphi 0, %s72
    %s90 = sphi 0, %s90
    %s92 = sphi 0, %s90
    %s93 = sphi 0, %s92
    %s107 = sphi 0, %s93
    %s111 = sphi 0, %s111
    %s113 = sphi 0, %s111
    %s114 = sphi 0, %s113
    %s128 = sphi 0, %s114
    %s132 = sphi 0, %s132
    %s134 = sphi 0, %s132
    %s135 = sphi 0, %s134
    %s149 = sphi 0, %s135
    %s153 = sphi 0, %s153
    %s155 = sphi 0, %s153
    %s156 = sphi 0, %s155
    %s170 = sphi 0, %s156
    %s174 = sphi 0, %s174
    %s176 = sphi 0, %s174
    %s177 = sphi 0, %s176
    %s191 = sphi 0, %s177
    %s195 = sphi 0, %s195
    %s197 = sphi 0, %s195
    %s198 = sphi 0, %s197
    %s212 = sphi 0, %s198
    %s216 = sphi 0, %s216
    %s218 = sphi 0, %s216
    %s219 = sphi 0, %s218
    %s233 = sphi 0, %s219
    %s237 = sphi 0, %s237
    %s239 = sphi 0, %s237
    %s240 = sphi 0, %s239
    %s254 = sphi 0, %s240
    %s258 = sphi 0, %s258
    %s260 = sphi 0, %s258
    %s261 = sphi 0, %s260
    %s275 = sphi 0, %s261
    %s279 = sphi 0, %s279
    %s281 = sphi 0, %s279
    %s282 = sphi 0, %s281
    %s296 = sphi 0, %s282
    %s300 = sphi 0, %s300
    %s302 = sphi 0, %s300
    %s303 = sphi 0, %s302
    %s317 = sphi 0, %s303
    %s321 = sphi 0, %s321
    %s323 = sphi 0, %s321
    %s324 = sphi 0, %s323
    %s338 = sphi 0, %s324
    %s342 = sphi 0, %s342
    %s344 = sphi 0, %s342
    %s345 = sphi 0, %s344
    %s359 = sphi 0, %s345
    %s367 = sphi 0, %s369
    %s370 = sphi 0, %s367
    %s371 = sphi 0, %s370
    %s387 = sphi 0, %s371
  $region4: #{zero_dce_forward.1} parent=0 // loop_header_branch
    %24 = sbr.rel (%p22) target = $region8
  $region5: #{zero_dce_forward.1} parent=0 // loop_body
    %s26 = ssub.s32 %s21, 1
    %s27 = ssub.s32 %s21, 2
    %s34 = sadd.s32 1, %s29
    %p35 = scmp.ge.s32.totalorder %s34, 1
    %s36 = scalar_select %p35, 0, %s34
    %s37 = sadd.s32 1, %s28
    %s38 = scalar_select %p35, %s37, %s28
    %p39 = scmp.ge.s32.totalorder %s38, 2
    %s40 = scalar_select %p39, 0, %s38
    %s41 = ssub.s32 %s28, %s40
    %s42 = ssub.s32 %s29, %s36
    %s43 = sor.u32 %s41, %s42
    %p44 = scmp.eq.s32.totalorder %s43, 0
    %s46 = sadd.s32 %s45, 1
    %s47 = scalar_select %p44, %s45, %s46
    %p50 = pneg %p44
    %p51 = scmp.eq.s32.totalorder %s21, 1
    %p52 = por %p50, %p51
    %p53 = scmp.ne.s32.totalorder %s45, %s48
    %p54 = scmp.eq.s32.totalorder %s21, 0
    %p55 = por %p53, %p54
    %p56 = scmp.ne.s32.totalorder %s45, %s48
    %p57 = scmp.eq.s32.totalorder %s26, 1
    %p58 = por %p56, %p57
    %p59 = scmp.ne.s32.totalorder %s48, %s49
    %p60 = scmp.eq.s32.totalorder %s26, 0
    %p61 = por %p59, %p60
    %p62 = scmp.ne.s32.totalorder %s48, %s49
    %p63 = scmp.eq.s32.totalorder %s27, 1
    %p64 = por %p62, %p63
    %p66 = scmp.ne.s32.totalorder %s49, %s65
    %p67 = scmp.eq.s32.totalorder %s27, 0
    %p68 = por %p66, %p67
    %s70 = sadd.s32 %s69, 1
    %p73 = scmp.eq.s32.totalorder %s21, 1
    %p74 = scmp.ne.s32.totalorder %s69, %s71
    %p75 = scmp.eq.s32.totalorder %s21, 0
    %p76 = por %p74, %p75
    %p77 = scmp.ne.s32.totalorder %s69, %s71
    %p78 = scmp.eq.s32.totalorder %s26, 1
    %p79 = por %p77, %p78
    %p80 = scmp.ne.s32.totalorder %s71, %s72
    %p81 = scmp.eq.s32.totalorder %s26, 0
    %p82 = por %p80, %p81
    %p83 = scmp.ne.s32.totalorder %s71, %s72
    %p84 = scmp.eq.s32.totalorder %s27, 1
    %p85 = por %p83, %p84
    %p87 = scmp.ne.s32.totalorder %s72, %s86
    %p88 = scmp.eq.s32.totalorder %s27, 0
    %p89 = por %p87, %p88
    %s91 = sadd.s32 %s90, 1
    %p94 = scmp.eq.s32.totalorder %s21, 1
    %p95 = scmp.ne.s32.totalorder %s90, %s92
    %p96 = scmp.eq.s32.totalorder %s21, 0
    %p97 = por %p95, %p96
    %p98 = scmp.ne.s32.totalorder %s90, %s92
    %p99 = scmp.eq.s32.totalorder %s26, 1
    %p100 = por %p98, %p99
    %p101 = scmp.ne.s32.totalorder %s92, %s93
    %p102 = scmp.eq.s32.totalorder %s26, 0
    %p103 = por %p101, %p102
    %p104 = scmp.ne.s32.totalorder %s92, %s93
    %p105 = scmp.eq.s32.totalorder %s27, 1
    %p106 = por %p104, %p105
    %p108 = scmp.ne.s32.totalorder %s93, %s107
    %p109 = scmp.eq.s32.totalorder %s27, 0
    %p110 = por %p108, %p109
    %s112 = sadd.s32 %s111, 1
    %p115 = scmp.eq.s32.totalorder %s21, 1
    %p116 = scmp.ne.s32.totalorder %s111, %s113
    %p117 = scmp.eq.s32.totalorder %s21, 0
    %p118 = por %p116, %p117
    %p119 = scmp.ne.s32.totalorder %s111, %s113
    %p120 = scmp.eq.s32.totalorder %s26, 1
    %p121 = por %p119, %p120
    %p122 = scmp.ne.s32.totalorder %s113, %s114
    %p123 = scmp.eq.s32.totalorder %s26, 0
    %p124 = por %p122, %p123
    %p125 = scmp.ne.s32.totalorder %s113, %s114
    %p126 = scmp.eq.s32.totalorder %s27, 1
    %p127 = por %p125, %p126
    %p129 = scmp.ne.s32.totalorder %s114, %s128
    %p130 = scmp.eq.s32.totalorder %s27, 0
    %p131 = por %p129, %p130
    %s133 = sadd.s32 %s132, 1
    %p136 = scmp.eq.s32.totalorder %s21, 1
    %p137 = scmp.ne.s32.totalorder %s132, %s134
    %p138 = scmp.eq.s32.totalorder %s21, 0
    %p139 = por %p137, %p138
    %p140 = scmp.ne.s32.totalorder %s132, %s134
    %p141 = scmp.eq.s32.totalorder %s26, 1
    %p142 = por %p140, %p141
    %p143 = scmp.ne.s32.totalorder %s134, %s135
    %p144 = scmp.eq.s32.totalorder %s26, 0
    %p145 = por %p143, %p144
    %p146 = scmp.ne.s32.totalorder %s134, %s135
    %p147 = scmp.eq.s32.totalorder %s27, 1
    %p148 = por %p146, %p147
    %p150 = scmp.ne.s32.totalorder %s135, %s149
    %p151 = scmp.eq.s32.totalorder %s27, 0
    %p152 = por %p150, %p151
    %s154 = sadd.s32 %s153, 1
    %p157 = scmp.eq.s32.totalorder %s21, 1
    %p158 = scmp.ne.s32.totalorder %s153, %s155
    %p159 = scmp.eq.s32.totalorder %s21, 0
    %p160 = por %p158, %p159
    %p161 = scmp.ne.s32.totalorder %s153, %s155
    %p162 = scmp.eq.s32.totalorder %s26, 1
    %p163 = por %p161, %p162
    %p164 = scmp.ne.s32.totalorder %s155, %s156
    %p165 = scmp.eq.s32.totalorder %s26, 0
    %p166 = por %p164, %p165
    %p167 = scmp.ne.s32.totalorder %s155, %s156
    %p168 = scmp.eq.s32.totalorder %s27, 1
    %p169 = por %p167, %p168
    %p171 = scmp.ne.s32.totalorder %s156, %s170
    %p172 = scmp.eq.s32.totalorder %s27, 0
    %p173 = por %p171, %p172
    %s175 = sadd.s32 %s174, 1
    %p178 = scmp.eq.s32.totalorder %s21, 1
    %p179 = scmp.ne.s32.totalorder %s174, %s176
    %p180 = scmp.eq.s32.totalorder %s21, 0
    %p181 = por %p179, %p180
    %p182 = scmp.ne.s32.totalorder %s174, %s176
    %p183 = scmp.eq.s32.totalorder %s26, 1
    %p184 = por %p182, %p183
    %p185 = scmp.ne.s32.totalorder %s176, %s177
    %p186 = scmp.eq.s32.totalorder %s26, 0
    %p187 = por %p185, %p186
    %p188 = scmp.ne.s32.totalorder %s176, %s177
    %p189 = scmp.eq.s32.totalorder %s27, 1
    %p190 = por %p188, %p189
    %p192 = scmp.ne.s32.totalorder %s177, %s191
    %p193 = scmp.eq.s32.totalorder %s27, 0
    %p194 = por %p192, %p193
    %s196 = sadd.s32 %s195, 1
    %p199 = scmp.eq.s32.totalorder %s21, 1
    %p200 = scmp.ne.s32.totalorder %s195, %s197
    %p201 = scmp.eq.s32.totalorder %s21, 0
    %p202 = por %p200, %p201
    %p203 = scmp.ne.s32.totalorder %s195, %s197
    %p204 = scmp.eq.s32.totalorder %s26, 1
    %p205 = por %p203, %p204
    %p206 = scmp.ne.s32.totalorder %s197, %s198
    %p207 = scmp.eq.s32.totalorder %s26, 0
    %p208 = por %p206, %p207
    %p209 = scmp.ne.s32.totalorder %s197, %s198
    %p210 = scmp.eq.s32.totalorder %s27, 1
    %p211 = por %p209, %p210
    %p213 = scmp.ne.s32.totalorder %s198, %s212
    %p214 = scmp.eq.s32.totalorder %s27, 0
    %p215 = por %p213, %p214
    %s217 = sadd.s32 %s216, 1
    %p220 = scmp.eq.s32.totalorder %s21, 1
    %p221 = scmp.ne.s32.totalorder %s216, %s218
    %p222 = scmp.eq.s32.totalorder %s21, 0
    %p223 = por %p221, %p222
    %p224 = scmp.ne.s32.totalorder %s216, %s218
    %p225 = scmp.eq.s32.totalorder %s26, 1
    %p226 = por %p224, %p225
    %p227 = scmp.ne.s32.totalorder %s218, %s219
    %p228 = scmp.eq.s32.totalorder %s26, 0
    %p229 = por %p227, %p228
    %p230 = scmp.ne.s32.totalorder %s218, %s219
    %p231 = scmp.eq.s32.totalorder %s27, 1
    %p232 = por %p230, %p231
    %p234 = scmp.ne.s32.totalorder %s219, %s233
    %p235 = scmp.eq.s32.totalorder %s27, 0
    %p236 = por %p234, %p235
    %s238 = sadd.s32 %s237, 1
    %p241 = scmp.eq.s32.totalorder %s21, 1
    %p242 = scmp.ne.s32.totalorder %s237, %s239
    %p243 = scmp.eq.s32.totalorder %s21, 0
    %p244 = por %p242, %p243
    %p245 = scmp.ne.s32.totalorder %s237, %s239
    %p246 = scmp.eq.s32.totalorder %s26, 1
    %p247 = por %p245, %p246
    %p248 = scmp.ne.s32.totalorder %s239, %s240
    %p249 = scmp.eq.s32.totalorder %s26, 0
    %p250 = por %p248, %p249
    %p251 = scmp.ne.s32.totalorder %s239, %s240
    %p252 = scmp.eq.s32.totalorder %s27, 1
    %p253 = por %p251, %p252
    %p255 = scmp.ne.s32.totalorder %s240, %s254
    %p256 = scmp.eq.s32.totalorder %s27, 0
    %p257 = por %p255, %p256
    %s259 = sadd.s32 %s258, 1
    %p262 = scmp.eq.s32.totalorder %s21, 1
    %p263 = scmp.ne.s32.totalorder %s258, %s260
    %p264 = scmp.eq.s32.totalorder %s21, 0
    %p265 = por %p263, %p264
    %p266 = scmp.ne.s32.totalorder %s258, %s260
    %p267 = scmp.eq.s32.totalorder %s26, 1
    %p268 = por %p266, %p267
    %p269 = scmp.ne.s32.totalorder %s260, %s261
    %p270 = scmp.eq.s32.totalorder %s26, 0
    %p271 = por %p269, %p270
    %p272 = scmp.ne.s32.totalorder %s260, %s261
    %p273 = scmp.eq.s32.totalorder %s27, 1
    %p274 = por %p272, %p273
    %p276 = scmp.ne.s32.totalorder %s261, %s275
    %p277 = scmp.eq.s32.totalorder %s27, 0
    %p278 = por %p276, %p277
    %s280 = sadd.s32 %s279, 1
    %p283 = scmp.eq.s32.totalorder %s21, 1
    %p284 = scmp.ne.s32.totalorder %s279, %s281
    %p285 = scmp.eq.s32.totalorder %s21, 0
    %p286 = por %p284, %p285
    %p287 = scmp.ne.s32.totalorder %s279, %s281
    %p288 = scmp.eq.s32.totalorder %s26, 1
    %p289 = por %p287, %p288
    %p290 = scmp.ne.s32.totalorder %s281, %s282
    %p291 = scmp.eq.s32.totalorder %s26, 0
    %p292 = por %p290, %p291
    %p293 = scmp.ne.s32.totalorder %s281, %s282
    %p294 = scmp.eq.s32.totalorder %s27, 1
    %p295 = por %p293, %p294
    %p297 = scmp.ne.s32.totalorder %s282, %s296
    %p298 = scmp.eq.s32.totalorder %s27, 0
    %p299 = por %p297, %p298
    %s301 = sadd.s32 %s300, 1
    %p304 = scmp.eq.s32.totalorder %s21, 1
    %p305 = scmp.ne.s32.totalorder %s300, %s302
    %p306 = scmp.eq.s32.totalorder %s21, 0
    %p307 = por %p305, %p306
    %p308 = scmp.ne.s32.totalorder %s300, %s302
    %p309 = scmp.eq.s32.totalorder %s26, 1
    %p310 = por %p308, %p309
    %p311 = scmp.ne.s32.totalorder %s302, %s303
    %p312 = scmp.eq.s32.totalorder %s26, 0
    %p313 = por %p311, %p312
    %p314 = scmp.ne.s32.totalorder %s302, %s303
    %p315 = scmp.eq.s32.totalorder %s27, 1
    %p316 = por %p314, %p315
    %p318 = scmp.ne.s32.totalorder %s303, %s317
    %p319 = scmp.eq.s32.totalorder %s27, 0
    %p320 = por %p318, %p319
    %s322 = sadd.s32 %s321, 1
    %p325 = scmp.eq.s32.totalorder %s21, 1
    %p326 = scmp.ne.s32.totalorder %s321, %s323
    %p327 = scmp.eq.s32.totalorder %s21, 0
    %p328 = por %p326, %p327
    %p329 = scmp.ne.s32.totalorder %s321, %s323
    %p330 = scmp.eq.s32.totalorder %s26, 1
    %p331 = por %p329, %p330
    %p332 = scmp.ne.s32.totalorder %s323, %s324
    %p333 = scmp.eq.s32.totalorder %s26, 0
    %p334 = por %p332, %p333
    %p335 = scmp.ne.s32.totalorder %s323, %s324
    %p336 = scmp.eq.s32.totalorder %s27, 1
    %p337 = por %p335, %p336
    %p339 = scmp.ne.s32.totalorder %s324, %s338
    %p340 = scmp.eq.s32.totalorder %s27, 0
    %p341 = por %p339, %p340
    %s343 = sadd.s32 %s342, 1
    %p346 = scmp.eq.s32.totalorder %s21, 1
    %p347 = scmp.ne.s32.totalorder %s342, %s344
    %p348 = scmp.eq.s32.totalorder %s21, 0
    %p349 = por %p347, %p348
    %p350 = scmp.ne.s32.totalorder %s342, %s344
    %p351 = scmp.eq.s32.totalorder %s26, 1
    %p352 = por %p350, %p351
    %p353 = scmp.ne.s32.totalorder %s344, %s345
    %p354 = scmp.eq.s32.totalorder %s26, 0
    %p355 = por %p353, %p354
    %p356 = scmp.ne.s32.totalorder %s344, %s345
    %p357 = scmp.eq.s32.totalorder %s27, 1
    %p358 = por %p356, %p357
    %p360 = scmp.ne.s32.totalorder %s345, %s359
    %p361 = scmp.eq.s32.totalorder %s27, 0
    %p362 = por %p360, %p361
    %s363 = ssub.s32 %s28, %s40
    %s364 = ssub.s32 %s29, %s36
    %s365 = sor.u32 %s363, %s364
    %p366 = scmp.eq.s32.totalorder %s365, 0
    %s368 = sadd.s32 %s367, 1
    %s369 = scalar_select %p366, %s367, %s368
    %p372 = pneg %p366
    %p373 = scmp.eq.s32.totalorder %s21, 1
    %p374 = por %p372, %p373
    %p375 = scmp.ne.s32.totalorder %s367, %s370
    %p376 = scmp.eq.s32.totalorder %s21, 0
    %p377 = por %p375, %p376
    %p378 = scmp.ne.s32.totalorder %s367, %s370
    %p379 = scmp.eq.s32.totalorder %s26, 1
    %p380 = por %p378, %p379
    %p381 = scmp.ne.s32.totalorder %s370, %s371
    %p382 = scmp.eq.s32.totalorder %s26, 0
    %p383 = por %p381, %p382
    %p384 = scmp.ne.s32.totalorder %s370, %s371
    %p385 = scmp.eq.s32.totalorder %s27, 1
    %p386 = por %p384, %p385
    %p388 = scmp.ne.s32.totalorder %s371, %s387
    %p389 = scmp.eq.s32.totalorder %s27, 0
    %p390 = por %p388, %p389
    %p391 = scmp.le.s32.totalorder 1, %s21
    %p392 = scmp.lt.s32.totalorder %s21, 3
    %p393 = pnand %p391, %p392
    %p394 = pneg %p393
    // Predicated region
    $region9: #{zero_dce_forward.1} parent=5 // pred_check
      _
    $region10: #{zero_dce_forward.1} parent=5 // pred_check_branch
      %396 = sbr.rel (%p393) target = $region12
    $region11: #{zero_dce_forward.1} parent=5 // pred_region
      %s397 = ssub.s32 %s21, 1
      // Predicated region
      $region13: #{zero_dce_forward.1} parent=11 // pred_check
        %p398 = pneg %p82
      $region14: #{zero_dce_forward.1} parent=11 // pred_check_branch
        %400 = sbr.rel (%p398) target = $region16
      $region15: #{zero_dce_forward.1} parent=11 // pred_region
        _
      $region16: #{zero_dce_forward.1} parent=11 // pred_fallthru
        _
      // Predicated region
      $region17: #{zero_dce_forward.1} parent=11 // pred_check
        %p401 = pneg %p103
      $region18: #{zero_dce_forward.1} parent=11 // pred_check_branch
        %403 = sbr.rel (%p401) target = $region20
      $region19: #{zero_dce_forward.1} parent=11 // pred_region
        _
      $region20: #{zero_dce_forward.1} parent=11 // pred_fallthru
        _
      // Predicated region
      $region21: #{zero_dce_forward.1} parent=11 // pred_check
        %p404 = pneg %p124
      $region22: #{zero_dce_forward.1} parent=11 // pred_check_branch
        %406 = sbr.rel (%p404) target = $region24
      $region23: #{zero_dce_forward.1} parent=11 // pred_region
        _
      $region24: #{zero_dce_forward.1} parent=11 // pred_fallthru
        _
      // Predicated region
      $region25: #{zero_dce_forward.1} parent=11 // pred_check
        %p407 = pneg %p145
      $region26: #{zero_dce_forward.1} parent=11 // pred_check_branch
        %409 = sbr.rel (%p407) target = $region28
      $region27: #{zero_dce_forward.1} parent=11 // pred_region
        _
      $region28: #{zero_dce_forward.1} parent=11 // pred_fallthru
        _
      // Predicated region
      $region29: #{zero_dce_forward.1} parent=11 // pred_check
        %p410 = pneg %p166
      $region30: #{zero_dce_forward.1} parent=11 // pred_check_branch
        %412 = sbr.rel (%p410) target = $region32
      $region31: #{zero_dce_forward.1} parent=11 // pred_region
        _
      $region32: #{zero_dce_forward.1} parent=11 // pred_fallthru
        _
      // Predicated region
      $region33: #{zero_dce_forward.1} parent=11 // pred_check
        %p413 = pneg %p187
      $region34: #{zero_dce_forward.1} parent=11 // pred_check_branch
        %415 = sbr.rel (%p413) target = $region36
      $region35: #{zero_dce_forward.1} parent=11 // pred_region
        _
      $region36: #{zero_dce_forward.1} parent=11 // pred_fallthru
        _
      // Predicated region
      $region37: #{zero_dce_forward.1} parent=11 // pred_check
        %p416 = pneg %p208
      $region38: #{zero_dce_forward.1} parent=11 // pred_check_branch
        %418 = sbr.rel (%p416) target = $region40
      $region39: #{zero_dce_forward.1} parent=11 // pred_region
        _
      $region40: #{zero_dce_forward.1} parent=11 // pred_fallthru
        _
      // Predicated region
      $region41: #{zero_dce_forward.1} parent=11 // pred_check
        %p419 = pneg %p229
      $region42: #{zero_dce_forward.1} parent=11 // pred_check_branch
        %421 = sbr.rel (%p419) target = $region44
      $region43: #{zero_dce_forward.1} parent=11 // pred_region
        _
      $region44: #{zero_dce_forward.1} parent=11 // pred_fallthru
        _
      // Predicated region
      $region45: #{zero_dce_forward.1} parent=11 // pred_check
        %p422 = pneg %p250
      $region46: #{zero_dce_forward.1} parent=11 // pred_check_branch
        %424 = sbr.rel (%p422) target = $region48
      $region47: #{zero_dce_forward.1} parent=11 // pred_region
        _
      $region48: #{zero_dce_forward.1} parent=11 // pred_fallthru
        _
      // Predicated region
      $region49: #{zero_dce_forward.1} parent=11 // pred_check
        %p425 = pneg %p271
      $region50: #{zero_dce_forward.1} parent=11 // pred_check_branch
        %427 = sbr.rel (%p425) target = $region52
      $region51: #{zero_dce_forward.1} parent=11 // pred_region
        _
      $region52: #{zero_dce_forward.1} parent=11 // pred_fallthru
        _
      // Predicated region
      $region53: #{zero_dce_forward.1} parent=11 // pred_check
        %p428 = pneg %p292
      $region54: #{zero_dce_forward.1} parent=11 // pred_check_branch
        %430 = sbr.rel (%p428) target = $region56
      $region55: #{zero_dce_forward.1} parent=11 // pred_region
        _
      $region56: #{zero_dce_forward.1} parent=11 // pred_fallthru
        _
      // Predicated region
      $region57: #{zero_dce_forward.1} parent=11 // pred_check
        %p431 = pneg %p313
      $region58: #{zero_dce_forward.1} parent=11 // pred_check_branch
        %433 = sbr.rel (%p431) target = $region60
      $region59: #{zero_dce_forward.1} parent=11 // pred_region
        _
      $region60: #{zero_dce_forward.1} parent=11 // pred_fallthru
        _
      // Predicated region
      $region61: #{zero_dce_forward.1} parent=11 // pred_check
        %p434 = pneg %p334
      $region62: #{zero_dce_forward.1} parent=11 // pred_check_branch
        %436 = sbr.rel (%p434) target = $region64
      $region63: #{zero_dce_forward.1} parent=11 // pred_region
        _
      $region64: #{zero_dce_forward.1} parent=11 // pred_fallthru
        _
      // Predicated region
      $region65: #{zero_dce_forward.1} parent=11 // pred_check
        %p437 = pneg %p355
      $region66: #{zero_dce_forward.1} parent=11 // pred_check_branch
        %439 = sbr.rel (%p437) target = $region68
      $region67: #{zero_dce_forward.1} parent=11 // pred_region
        _
      $region68: #{zero_dce_forward.1} parent=11 // pred_fallthru
        _
    $region12: #{zero_dce_forward.1} parent=5 // pred_fallthru
      _
    %p440 = scmp.lt.s32.totalorder %s21, 2
    // Predicated region
    $region69: #{zero_dce_forward.1} parent=5 // pred_check
      %p441 = pneg %p440
    $region70: #{zero_dce_forward.1} parent=5 // pred_check_branch
      %443 = sbr.rel (%p441) target = $region72
    $region71: #{zero_dce_forward.1} parent=5 // pred_region
      // Predicated region
      $region73: #{zero_dce_forward.1} parent=71 // pred_check
        %p444 = pneg %p55
      $region74: #{zero_dce_forward.1} parent=71 // pred_check_branch
        %446 = sbr.rel (%p444) target = $region76
      $region75: #{zero_dce_forward.1} parent=71 // pred_region
        %p447 = scmp.lt.s32.totalorder %s28, 1
        %s448 = scalar_select %p447, %s28, 1
        %p449 = scmp.lt.s32.totalorder %s29, 0
        %s450 = scalar_select %p449, %s29, 0
        %s451 = smul.addr %s450, 2
        %s452 = smul.addr %s448, 2
        %s453 = sadd.s32 %s451, %s452
        %s454 = smul.addr %s453, 4
        %s455 = scalar_lea.vmem %s0, %s454
      $region76: #{zero_dce_forward.1} parent=71 // pred_fallthru
        _
    $region72: #{zero_dce_forward.1} parent=5 // pred_fallthru
      _
    %p456 = scmp.le.s32.totalorder 1, %s21
    %p457 = scmp.lt.s32.totalorder %s21, 3
    %p458 = pnand %p456, %p457
    %p459 = pneg %p458
    // Predicated region
    $region77: #{zero_dce_forward.1} parent=5 // pred_check
      _
    $region78: #{zero_dce_forward.1} parent=5 // pred_check_branch
      %461 = sbr.rel (%p458) target = $region80
    $region79: #{zero_dce_forward.1} parent=5 // pred_region
      %s462 = ssub.s32 %s21, 1
      %p463 = scmp.lt.s32.totalorder %s30, 1
      %s464 = scalar_select %p463, %s30, 1
      %p465 = scmp.lt.s32.totalorder %s31, 0
      %s466 = scalar_select %p465, %s31, 0
      %s467 = smul.addr %s466, 2
      %s468 = smul.addr %s464, 2
      %s469 = sadd.s32 %s467, %s468
      %s470 = smul.addr %s469, 4
      %s471 = scalar_lea.vmem %s0, %s470
      %p472 = pneg %p61
      %p473 = pneg %p58
      %p474 = pneg %p82
      %p475 = pneg %p79
      %p476 = pneg %p103
      %p477 = pneg %p100
      %p478 = pneg %p124
      %p479 = pneg %p121
      %p480 = pneg %p145
      %p481 = pneg %p142
      %p482 = pneg %p166
      %p483 = pneg %p163
      %p484 = pneg %p187
      %p485 = pneg %p184
      %p486 = pneg %p208
      %p487 = pneg %p205
      %p488 = pneg %p229
      %p489 = pneg %p226
      %p490 = pneg %p250
      %p491 = pneg %p247
      %p492 = pneg %p271
      %p493 = pneg %p268
      %p494 = pneg %p292
      %p495 = pneg %p289
      %p496 = pneg %p313
      %p497 = pneg %p310
      %p498 = pneg %p334
      %p499 = pneg %p331
      %p500 = pneg %p355
      %p501 = pneg %p352
      %p502 = pneg %p383
      %p503 = pneg %p380
      %s504 = smul.u32 2, %s31
      %p505 = scmp.lt.s32.totalorder %s30, 1
      %s506 = scalar_select %p505, %s30, 1
      %p507 = scmp.lt.s32.totalorder %s504, 1
      %s508 = scalar_select %p507, %s504, 1
      %s509 = smul.addr %s506, 2
      %s510 = sadd.s32 %s508, %s509
      %s511 = smul.addr %s510, 4
      %s512 = scalar_lea.vmem %s15, %s511
      %p513 = scmp.lt.s32.totalorder %s30, 1
      %s514 = scalar_select %p513, %s30, 1
      %p515 = scmp.lt.s32.totalorder %s31, 0
      %s516 = scalar_select %p515, %s31, 0
      %s517 = smul.addr %s516, 2
      %s518 = smul.addr %s514, 2
      %s519 = sadd.s32 %s517, %s518
      %s520 = smul.addr %s519, 4
      %s521 = scalar_lea.vmem %s0, %s520
      %s522 = smul.u32 2, %s31
      %p523 = scmp.lt.s32.totalorder %s30, 1
      %s524 = scalar_select %p523, %s30, 1
      %p525 = scmp.lt.s32.totalorder %s522, 1
      %s526 = scalar_select %p525, %s522, 1
      %s527 = smul.addr %s524, 2
      %s528 = sadd.s32 %s526, %s527
      %s529 = smul.addr %s528, 4
      %s530 = scalar_lea.vmem %s15, %s529
      %s531 = smul.u32 2, %s31
      %v535 = vld [vmem:[%s521] sm:$0x77]
      %v537 = vcombine.high %v535, %v535
      %v539 = vpack.c.bf16 %v535, %v535
      %v540 = vpack.c.bf16 %v537, %v537
      %v541 = vlaneseq
      %v542 = vand.u32 %v541, 127
      %v543 = vadd.s32 %v542, 128
      %vm544 = vcmp.lt.s32.totalorder %v542, 0
      %v545 = vsub.s32 0, %v542
      %v546 = vsel %vm544, %v545, %v542
      %v547 = vshrl.u32 %v546, 4
      %v548 = vand.u32 %v546, 15
      %v549 = vsub.s32 0, %v548
      %v550 = vsel %vm544, %v549, %v548
      %vm551 = vcmp.lt.s32.totalorder %v543, 0
      %v552 = vsub.s32 0, %v543
      %v553 = vsel %vm551, %v552, %v543
      %v554 = vshrl.u32 %v553, 4
      %v555 = vand.u32 %v553, 15
      %v556 = vsub.s32 0, %v555
      %v557 = vsel %vm551, %v556, %v555
      %vm558 = vcmp.ne.s32.totalorder %v550, 0
      %vm559 = vcmp.ne.s32.totalorder %v557, 0
      %vm560 = vcmp.lt.s32.totalorder %v550, 0
      %vm561 = vcmp.lt.s32.totalorder %v557, 0
      %vm562 = vmand %vm560, %vm558
      %vm563 = vmand %vm561, %vm559
      %v564 = vadd.s32 %v550, 16
      %v565 = vadd.s32 %v557, 16
      %v566 = vsel %vm562, %v564, %v550
      %v567 = vsel %vm563, %v565, %v557
      %vm568 = vcmp.eq.s32.totalorder %v566, 0
      %vm569 = vcmp.eq.s32.totalorder %v567, 0
      %vm570 = vcmp.eq.s32.totalorder %v566, 15
      %vm571 = vcmp.eq.s32.totalorder %v567, 15
      %574 = vrot.lane.b32.xlu0 %v539, 1
      %v575 = vpop.permute.xlu0 %574
      %576 = vrot.lane.b32.xlu0 %v540, 1
      %v577 = vpop.permute.xlu0 %576
      %vm578 = vcmask 7168
      %v579 = vsel %vm578, %v575, %v577
      %vm581 = vcmask 7168
      %v584 = vsel %vm581, 0, %v575
      %v586 = vsel %vm568, 1, 0
      %v587 = vsel %vm569, 1, 0
      %vm588 = vcmp.eq.s32.totalorder %v586, 1
      %vm589 = vcmp.eq.s32.totalorder %v587, 1
      %vm590 = vmpackc.low %vm589, %vm588
      %v591 = vsel %vm590, 65537, 0
      %v592 = vlaneseq
      %v593 = vshrl.u32 %v592, 7
      %v594 = vsub.s32 0, %v593
      %v595 = vrot.slane %v591, %v594
      %v596 = vlaneseq
      %v597 = vshrl.u32 %v596, 7
      %v598 = vsub.s32 4, %v597
      %v599 = vrot.slane %v591, %v598
      %vm600 = vcmp.ne.s16.totalorder %v595, 0
      %vm601 = vcmp.ne.s16.totalorder %v599, 0
      %v602 = vsel %vm600, 0, %v584
      %v603 = vsel %vm601, 0, %v579
      %604 = vrot.lane.b32.xlu0 %v539, 127
      %v605 = vpop.permute.xlu0 %604
      %606 = vrot.lane.b32.xlu0 %v540, 127
      %v607 = vpop.permute.xlu0 %606
      %vm608 = vcmask 1039360
      %v609 = vsel %vm608, %v605, %v607
      %vm611 = vcmask 1039360
      %v613 = vsel %vm611, %v607, 0
      %v615 = vsel %vm570, 1, 0
      %v616 = vsel %vm571, 1, 0
      %vm617 = vcmp.eq.s32.totalorder %v615, 1
      %vm618 = vcmp.eq.s32.totalorder %v616, 1
      %vm619 = vmpackc.low %vm618, %vm617
      %v620 = vsel %vm619, 65537, 0
      %v621 = vlaneseq
      %v622 = vshrl.u32 %v621, 7
      %v623 = vsub.s32 0, %v622
      %v624 = vrot.slane %v620, %v623
      %v625 = vlaneseq
      %v626 = vshrl.u32 %v625, 7
      %v627 = vsub.s32 4, %v626
      %v628 = vrot.slane %v620, %v627
      %vm629 = vcmp.ne.s16.totalorder %v624, 0
      %vm630 = vcmp.ne.s16.totalorder %v628, 0
      %v631 = vsel %vm629, 0, %v609
      %v632 = vsel %vm630, 0, %v613
      %v634 = vshrl.u32 %v539, 16
      %v636 = vrot.slane %v634, 6
      %v637 = vshll.u32 %v539, 16
      %v639 = vrot.slane %v637, 7
      %v640 = vor.u32 %v636, %v639
      %v642 = vshrl.u32 %v540, 16
      %v644 = vrot.slane %v642, 6
      %v645 = vshll.u32 %v540, 16
      %v647 = vrot.slane %v645, 7
      %v648 = vor.u32 %v644, %v647
      %v653 = vrot.slane %v631, 5
      %v654 = vrot.slane %v632, 5
      %vm655 = vcmask 1041408
      %vm656 = vsmask.f32 1280
      %vm657 = vmand %vm655, %vm656
      %v658 = vsel %vm657, %v602, %v640
      %v659 = vsel %vm657, %v603, %v648
      %vm660 = vcmask 1042432
      %v663 = vsel %vm660, %v658, %v653
      %v666 = vsel %vm660, %v659, %v654
      %v667 = vld [vmem:[%s1] sm:$0xf]
      %v668 = vld [vmem:[%s1 + $0x4] sm:$0xf]
      %v669 = vld [vmem:[%s1 + $0x8] sm:$0xf]
      %v670 = vld [vmem:[%s1 + $0xc] sm:$0xf]
      %v675 = vunpack.c.l.b16 %v667
      %v676 = vunpack.c.l.b16 %v668
      %v677 = vunpack.c.l.b16 %v669
      %v678 = vunpack.c.l.b16 %v670
      %v679 = vpack.c.b16 %v676, %v675
      %v680 = vpack.c.b16 %v678, %v677
      %vm681 = vcmask 72704
      %v683 = vsel %vm681, %v679, 0
      %v686 = vsel %vm681, %v680, 0
      %vm688 = vcmask 1043456
      %vm689 = vcmask 1044480
      %v690 = vsel %vm688, 4294967295, 65535
      %v691 = vsel %vm689, %v690, 0
      %v692 = vand.u32 %v663, %v691
      %v694 = vand.u32 %v666, %v691
      %696 = vmatprep.subr.bf16.mxu0 %v694
      %697 = vmatpush1.bf16.msra.mxu0 %v692
      %698 = vmatprep.subr.bf16.mxu0 0
      %699 = vmatpush1.bf16.msra.mxu0 0
      %700 = vmatprep.subr.bf16.mxu0 0
      %701 = vmatpush1.bf16.msra.mxu0 0
      %702 = vmatprep.subr.bf16.mxu0 0
      %703 = vmatpush1.bf16.msra.mxu0 0
      %704 = vmatprep.subr.bf16.mxu0 0
      %705 = vmatpush1.bf16.msra.mxu0 0
      %706 = vmatprep.subr.bf16.mxu0 0
      %707 = vmatpush1.bf16.msra.mxu0 0
      %708 = vmatprep.subr.bf16.mxu0 0
      %709 = vmatpush1.bf16.msra.mxu0 0
      %710 = vmatprep.subr.bf16.mxu0 0
      %711 = vmatpush1.bf16.msra.mxu0 0
      %712 = vmatprep.subr.bf16.mxu0 0
      %713 = vmatpush1.bf16.msra.mxu0 0
      %714 = vmatprep.subr.bf16.mxu0 0
      %715 = vmatpush1.bf16.msra.mxu0 0
      %716 = vmatprep.subr.bf16.mxu0 0
      %717 = vmatpush1.bf16.msra.mxu0 0
      %718 = vmatprep.subr.bf16.mxu0 0
      %719 = vmatpush1.bf16.msra.mxu0 0
      %720 = vmatprep.subr.bf16.mxu0 0
      %721 = vmatpush1.bf16.msra.mxu0 0
      %722 = vmatprep.subr.bf16.mxu0 0
      %723 = vmatpush1.bf16.msra.mxu0 0
      %724 = vmatprep.subr.bf16.mxu0 0
      %725 = vmatpush1.bf16.msra.mxu0 0
      %726 = vmatprep.subr.bf16.mxu0 0
      %727 = vmatpush1.bf16.msra.mxu0 0
      %728 = vmatprep.mubr.bf16.mxu0 0
      %729 = vmatmul.mubr.bf16.gmra.mrb[0].mxu0 %v683
      %v730 = vpop.f32.mrb[0].mxu0
      %v731 = vadd.f32 0.0, %v730
      %v732 = vpop.f32.mrb[0].mxu0
      %v733 = vadd.f32 0.0, %v732
      %v734 = vpop.f32.mrb[0].mxu0
      %v735 = vadd.f32 0.0, %v734
      %v736 = vpop.f32.mrb[0].mxu0
      %v737 = vadd.f32 0.0, %v736
      %738 = vmatprep.mubr.bf16.mxu0 0
      %739 = vmatmul.mubr.bf16.gmra.mrb[0].mxu0 %v686
      %v740 = vpop.f32.mrb[0].mxu0
      %v741 = vadd.f32 0.0, %v740
      %v742 = vpop.f32.mrb[0].mxu0
      %v743 = vadd.f32 0.0, %v742
      %v744 = vpop.f32.mrb[0].mxu0
      %v745 = vadd.f32 0.0, %v744
      %v746 = vpop.f32.mrb[0].mxu0
      %v747 = vadd.f32 0.0, %v746
      %748 = vdwg.mxu0
      %s749 = scalar_lea.vmem %s1, 16
      %v750 = vld [vmem:[%s749] sm:$0xf]
      %v751 = vld [vmem:[%s749 + $0x4] sm:$0xf]
      %v752 = vld [vmem:[%s749 + $0x8] sm:$0xf]
      %v753 = vld [vmem:[%s749 + $0xc] sm:$0xf]
      %s754 = scalar_lea.vmem %s1, 32
      %v755 = vld [vmem:[%s754] sm:$0xf]
      %v756 = vld [vmem:[%s754 + $0x4] sm:$0xf]
      %v757 = vld [vmem:[%s754 + $0x8] sm:$0xf]
      %v758 = vld [vmem:[%s754 + $0xc] sm:$0xf]
      %v763 = vunpack.c.l.b16 %v755
      %v764 = vunpack.c.l.b16 %v756
      %v765 = vunpack.c.l.b16 %v757
      %v766 = vunpack.c.l.b16 %v758
      %v767 = vpack.c.b16 %v764, %v763
      %v768 = vpack.c.b16 %v766, %v765
      %v770 = vsel %vm681, %v767, 0
      %v773 = vsel %vm681, %v768, 0
      %775 = vmatprep.subr.bf16.mxu0 %v694
      %776 = vmatpush1.bf16.msra.mxu0 %v692
      %777 = vmatprep.subr.bf16.mxu0 0
      %778 = vmatpush1.bf16.msra.mxu0 0
      %779 = vmatprep.subr.bf16.mxu0 0
      %780 = vmatpush1.bf16.msra.mxu0 0
      %781 = vmatprep.subr.bf16.mxu0 0
      %782 = vmatpush1.bf16.msra.mxu0 0
      %783 = vmatprep.subr.bf16.mxu0 0
      %784 = vmatpush1.bf16.msra.mxu0 0
      %785 = vmatprep.subr.bf16.mxu0 0
      %786 = vmatpush1.bf16.msra.mxu0 0
      %787 = vmatprep.subr.bf16.mxu0 0
      %788 = vmatpush1.bf16.msra.mxu0 0
      %789 = vmatprep.subr.bf16.mxu0 0
      %790 = vmatpush1.bf16.msra.mxu0 0
      %791 = vmatprep.subr.bf16.mxu0 0
      %792 = vmatpush1.bf16.msra.mxu0 0
      %793 = vmatprep.subr.bf16.mxu0 0
      %794 = vmatpush1.bf16.msra.mxu0 0
      %795 = vmatprep.subr.bf16.mxu0 0
      %796 = vmatpush1.bf16.msra.mxu0 0
      %797 = vmatprep.subr.bf16.mxu0 0
      %798 = vmatpush1.bf16.msra.mxu0 0
      %799 = vmatprep.subr.bf16.mxu0 0
      %800 = vmatpush1.bf16.msra.mxu0 0
      %801 = vmatprep.subr.bf16.mxu0 0
      %802 = vmatpush1.bf16.msra.mxu0 0
      %803 = vmatprep.subr.bf16.mxu0 0
      %804 = vmatpush1.bf16.msra.mxu0 0
      %805 = vmatprep.subr.bf16.mxu0 0
      %806 = vmatpush1.bf16.msra.mxu0 0
      %807 = vmatprep.mubr.bf16.mxu0 0
      %808 = vmatmul.mubr.bf16.gmra.mrb[0].mxu0 %v770
      %v809 = vpop.f32.mrb[0].mxu0
      %v810 = vadd.f32 0.0, %v809
      %v811 = vpop.f32.mrb[0].mxu0
      %v812 = vadd.f32 0.0, %v811
      %v813 = vpop.f32.mrb[0].mxu0
      %v814 = vadd.f32 0.0, %v813
      %v815 = vpop.f32.mrb[0].mxu0
      %v816 = vadd.f32 0.0, %v815
      %817 = vmatprep.mubr.bf16.mxu0 0
      %818 = vmatmul.mubr.bf16.gmra.mrb[0].mxu0 %v773
      %v819 = vpop.f32.mrb[0].mxu0
      %v820 = vadd.f32 0.0, %v819
      %v821 = vpop.f32.mrb[0].mxu0
      %v822 = vadd.f32 0.0, %v821
      %v823 = vpop.f32.mrb[0].mxu0
      %v824 = vadd.f32 0.0, %v823
      %v825 = vpop.f32.mrb[0].mxu0
      %v826 = vadd.f32 0.0, %v825
      %827 = vdwg.mxu0
      %836 = vrot.lane.b32.xlu0 %v731, 16
      %v837 = vpop.permute.xlu0 %836
      %838 = vrot.lane.b32.xlu0 %v733, 16
      %v839 = vpop.permute.xlu0 %838
      %840 = vrot.lane.b32.xlu0 %v735, 16
      %v841 = vpop.permute.xlu0 %840
      %842 = vrot.lane.b32.xlu0 %v737, 16
      %v843 = vpop.permute.xlu0 %842
      %844 = vrot.lane.b32.xlu0 %v741, 16
      %v845 = vpop.permute.xlu0 %844
      %846 = vrot.lane.b32.xlu0 %v743, 16
      %v847 = vpop.permute.xlu0 %846
      %848 = vrot.lane.b32.xlu0 %v745, 16
      %v849 = vpop.permute.xlu0 %848
      %850 = vrot.lane.b32.xlu0 %v747, 16
      %v851 = vpop.permute.xlu0 %850
      %vm852 = vcmask 130048
      %v853 = vsel %vm852, %v837, %v839
      %v854 = vsel %vm852, %v841, %v843
      %v855 = vsel %vm852, %v845, %v847
      %v856 = vsel %vm852, %v849, %v851
      %v865 = vsel %vm852, 0.0, %v837
      %v866 = vsel %vm852, 0.0, %v841
      %v867 = vsel %vm852, 0.0, %v845
      %v868 = vsel %vm852, 0.0, %v849
      %v873 = vunpack.c.l.b16 %v750
      %v874 = vunpack.c.l.b16 %v751
      %v875 = vunpack.c.l.b16 %v752
      %v876 = vunpack.c.l.b16 %v753
      %v877 = vpack.c.b16 %v874, %v873
      %v878 = vpack.c.b16 %v876, %v875
      %v880 = vsel %vm681, %v877, 0
      %v883 = vsel %vm681, %v878, 0
      %885 = vmatprep.subr.bf16.mxu0 %v694
      %886 = vmatpush1.bf16.msra.mxu0 %v692
      %887 = vmatprep.subr.bf16.mxu0 0
      %888 = vmatpush1.bf16.msra.mxu0 0
      %889 = vmatprep.subr.bf16.mxu0 0
      %890 = vmatpush1.bf16.msra.mxu0 0
      %891 = vmatprep.subr.bf16.mxu0 0
      %892 = vmatpush1.bf16.msra.mxu0 0
      %893 = vmatprep.subr.bf16.mxu0 0
      %894 = vmatpush1.bf16.msra.mxu0 0
      %895 = vmatprep.subr.bf16.mxu0 0
      %896 = vmatpush1.bf16.msra.mxu0 0
      %897 = vmatprep.subr.bf16.mxu0 0
      %898 = vmatpush1.bf16.msra.mxu0 0
      %899 = vmatprep.subr.bf16.mxu0 0
      %900 = vmatpush1.bf16.msra.mxu0 0
      %901 = vmatprep.subr.bf16.mxu0 0
      %902 = vmatpush1.bf16.msra.mxu0 0
      %903 = vmatprep.subr.bf16.mxu0 0
      %904 = vmatpush1.bf16.msra.mxu0 0
      %905 = vmatprep.subr.bf16.mxu0 0
      %906 = vmatpush1.bf16.msra.mxu0 0
      %907 = vmatprep.subr.bf16.mxu0 0
      %908 = vmatpush1.bf16.msra.mxu0 0
      %909 = vmatprep.subr.bf16.mxu0 0
      %910 = vmatpush1.bf16.msra.mxu0 0
      %911 = vmatprep.subr.bf16.mxu0 0
      %912 = vmatpush1.bf16.msra.mxu0 0
      %913 = vmatprep.subr.bf16.mxu0 0
      %914 = vmatpush1.bf16.msra.mxu0 0
      %915 = vmatprep.subr.bf16.mxu0 0
      %916 = vmatpush1.bf16.msra.mxu0 0
      %917 = vmatprep.mubr.bf16.mxu0 0
      %918 = vmatmul.mubr.bf16.gmra.mrb[0].mxu0 %v880
      %v919 = vpop.f32.mrb[0].mxu0
      %v920 = vadd.f32 %v865, %v919
      %v921 = vpop.f32.mrb[0].mxu0
      %v922 = vadd.f32 %v853, %v921
      %v923 = vpop.f32.mrb[0].mxu0
      %v924 = vadd.f32 %v866, %v923
      %v925 = vpop.f32.mrb[0].mxu0
      %v926 = vadd.f32 %v854, %v925
      %927 = vmatprep.mubr.bf16.mxu0 0
      %928 = vmatmul.mubr.bf16.gmra.mrb[0].mxu0 %v883
      %v929 = vpop.f32.mrb[0].mxu0
      %v930 = vadd.f32 %v867, %v929
      %v931 = vpop.f32.mrb[0].mxu0
      %v932 = vadd.f32 %v855, %v931
      %v933 = vpop.f32.mrb[0].mxu0
      %v934 = vadd.f32 %v868, %v933
      %v935 = vpop.f32.mrb[0].mxu0
      %v936 = vadd.f32 %v856, %v935
      %937 = vdwg.mxu0
      %946 = vrot.lane.b32.xlu0 %v810, 112
      %v947 = vpop.permute.xlu0 %946
      %948 = vrot.lane.b32.xlu0 %v812, 112
      %v949 = vpop.permute.xlu0 %948
      %950 = vrot.lane.b32.xlu0 %v814, 112
      %v951 = vpop.permute.xlu0 %950
      %952 = vrot.lane.b32.xlu0 %v816, 112
      %v953 = vpop.permute.xlu0 %952
      %954 = vrot.lane.b32.xlu0 %v820, 112
      %v955 = vpop.permute.xlu0 %954
      %956 = vrot.lane.b32.xlu0 %v822, 112
      %v957 = vpop.permute.xlu0 %956
      %958 = vrot.lane.b32.xlu0 %v824, 112
      %v959 = vpop.permute.xlu0 %958
      %960 = vrot.lane.b32.xlu0 %v826, 112
      %v961 = vpop.permute.xlu0 %960
      %vm962 = vcmask 916480
      %v963 = vsel %vm962, %v947, %v949
      %v964 = vsel %vm962, %v951, %v953
      %v965 = vsel %vm962, %v955, %v957
      %v966 = vsel %vm962, %v959, %v961
      %v975 = vsel %vm962, %v949, 0.0
      %v976 = vsel %vm962, %v953, 0.0
      %v977 = vsel %vm962, %v957, 0.0
      %v978 = vsel %vm962, %v961, 0.0
      %v979 = vadd.f32 %v920, %v963
      %v980 = vadd.f32 %v922, %v975
      %v981 = vadd.f32 %v924, %v964
      %v982 = vadd.f32 %v926, %v976
      %v983 = vadd.f32 %v930, %v965
      %v984 = vadd.f32 %v932, %v977
      %v985 = vadd.f32 %v934, %v966
      %v986 = vadd.f32 %v936, %v978
      %v987 = vld [vmem:[%s2] sm:$0xff]
      %v988 = vld [vmem:[%s2 + $0x8] sm:$0xff]
      %v989 = vld [vmem:[%s2 + $0x10] sm:$0xff]
      %v990 = vld [vmem:[%s2 + $0x18] sm:$0xff]
      %992 = vset.pattern.permute.xlu0 0
      %993 = vperm.xlu0 %992, %v987
      %v994 = vpop.permute.xlu0 %993
      %997 = vset.pattern.permute.xlu0 0
      %998 = vperm.xlu0 %997, %v988
      %v999 = vpop.permute.xlu0 %998
      %1002 = vset.pattern.permute.xlu0 0
      %1003 = vperm.xlu0 %1002, %v989
      %v1004 = vpop.permute.xlu0 %1003
      %1007 = vset.pattern.permute.xlu0 0
      %1008 = vperm.xlu0 %1007, %v990
      %v1009 = vpop.permute.xlu0 %1008
      %v1011 = vadd.f32 %v979, %v994
      %v1012 = vadd.f32 %v980, %v994
      %v1013 = vadd.f32 %v981, %v999
      %v1014 = vadd.f32 %v982, %v999
      %v1015 = vadd.f32 %v983, %v1004
      %v1016 = vadd.f32 %v984, %v1004
      %v1017 = vadd.f32 %v985, %v1009
      %v1018 = vadd.f32 %v986, %v1009
      %v1019 = vmax.f32 %v1011, 0.0
      %v1020 = vmax.f32 %v1012, 0.0
      %v1021 = vmax.f32 %v1013, 0.0
      %v1022 = vmax.f32 %v1014, 0.0
      %v1023 = vmax.f32 %v1015, 0.0
      %v1024 = vmax.f32 %v1016, 0.0
      %v1025 = vmax.f32 %v1017, 0.0
      %v1026 = vmax.f32 %v1018, 0.0
      %v1027 = vpack.c.bf16 %v1021, %v1019
      %v1028 = vpack.c.bf16 %v1022, %v1020
      %v1029 = vpack.c.bf16 %v1025, %v1023
      %v1030 = vpack.c.bf16 %v1026, %v1024
      %1035 = vrot.lane.b32.xlu0 %v1027, 1
      %v1036 = vpop.permute.xlu0 %1035
      %1037 = vrot.lane.b32.xlu0 %v1028, 1
      %v1038 = vpop.permute.xlu0 %1037
      %1039 = vrot.lane.b32.xlu0 %v1029, 1
      %v1040 = vpop.permute.xlu0 %1039
      %1041 = vrot.lane.b32.xlu0 %v1030, 1
      %v1042 = vpop.permute.xlu0 %1041
      %v1043 = vsel %vm578, %v1036, %v1038
      %v1044 = vsel %vm578, %v1040, %v1042
      %v1048 = vsel %vm581, 0, %v1036
      %v1051 = vsel %vm581, 0, %v1040
      %v1053 = vsel %vm600, 0, %v1048
      %v1054 = vsel %vm601, 0, %v1043
      %v1055 = vsel %vm600, 0, %v1051
      %v1056 = vsel %vm601, 0, %v1044
      %1057 = vrot.lane.b32.xlu0 %v1027, 127
      %v1058 = vpop.permute.xlu0 %1057
      %1059 = vrot.lane.b32.xlu0 %v1028, 127
      %v1060 = vpop.permute.xlu0 %1059
      %1061 = vrot.lane.b32.xlu0 %v1029, 127
      %v1062 = vpop.permute.xlu0 %1061
      %1063 = vrot.lane.b32.xlu0 %v1030, 127
      %v1064 = vpop.permute.xlu0 %1063
      %v1065 = vsel %vm608, %v1058, %v1060
      %v1066 = vsel %vm608, %v1062, %v1064
      %v1070 = vsel %vm611, %v1060, 0
      %v1073 = vsel %vm611, %v1064, 0
      %v1075 = vsel %vm629, 0, %v1065
      %v1076 = vsel %vm630, 0, %v1070
      %v1077 = vsel %vm629, 0, %v1066
      %v1078 = vsel %vm630, 0, %v1073
      %v1079 = vld [vmem:[%s3] sm:$0xf]
      %v1080 = vld [vmem:[%s3 + $0x4] sm:$0xf]
      %v1081 = vld [vmem:[%s3 + $0x8] sm:$0xf]
      %v1082 = vld [vmem:[%s3 + $0xc] sm:$0xf]
      %v1087 = vunpack.c.l.b16 %v1079
      %v1088 = vunpack.c.l.b16 %v1080
      %v1089 = vunpack.c.l.b16 %v1081
      %v1090 = vunpack.c.l.b16 %v1082
      %v1091 = vpack.c.b16 %v1088, %v1087
      %v1092 = vpack.c.b16 %v1090, %v1089
      %vm1093 = vcmask 785408
      %v1095 = vsel %vm1093, %v1091, 0
      %v1098 = vsel %vm1093, %v1092, 0
      %1100 = vmatprep.subr.bf16.mxu0 %v1054
      %1101 = vmatpush1.bf16.msra.mxu0 %v1053
      %1102 = vmatprep.subr.bf16.mxu0 %v1056
      %1103 = vmatpush1.bf16.msra.mxu0 %v1055
      %1104 = vmatprep.subr.bf16.mxu0 %v1028
      %1105 = vmatpush1.bf16.msra.mxu0 %v1027
      %1106 = vmatprep.subr.bf16.mxu0 %v1030
      %1107 = vmatpush1.bf16.msra.mxu0 %v1029
      %1108 = vmatprep.subr.bf16.mxu0 %v1076
      %1109 = vmatpush1.bf16.msra.mxu0 %v1075
      %1110 = vmatprep.subr.bf16.mxu0 %v1078
      %1111 = vmatpush1.bf16.msra.mxu0 %v1077
      %1112 = vmatprep.subr.bf16.mxu0 0
      %1113 = vmatpush1.bf16.msra.mxu0 0
      %1114 = vmatprep.subr.bf16.mxu0 0
      %1115 = vmatpush1.bf16.msra.mxu0 0
      %1116 = vmatprep.subr.bf16.mxu0 0
      %1117 = vmatpush1.bf16.msra.mxu0 0
      %1118 = vmatprep.subr.bf16.mxu0 0
      %1119 = vmatpush1.bf16.msra.mxu0 0
      %1120 = vmatprep.subr.bf16.mxu0 0
      %1121 = vmatpush1.bf16.msra.mxu0 0
      %1122 = vmatprep.subr.bf16.mxu0 0
      %1123 = vmatpush1.bf16.msra.mxu0 0
      %1124 = vmatprep.subr.bf16.mxu0 0
      %1125 = vmatpush1.bf16.msra.mxu0 0
      %1126 = vmatprep.subr.bf16.mxu0 0
      %1127 = vmatpush1.bf16.msra.mxu0 0
      %1128 = vmatprep.subr.bf16.mxu0 0
      %1129 = vmatpush1.bf16.msra.mxu0 0
      %1130 = vmatprep.subr.bf16.mxu0 0
      %1131 = vmatpush1.bf16.msra.mxu0 0
      %1132 = vmatprep.mubr.bf16.mxu0 0
      %1133 = vmatmul.mubr.bf16.gmra.mrb[0].mxu0 %v1095
      %v1134 = vpop.f32.mrb[0].mxu0
      %v1135 = vadd.f32 0.0, %v1134
      %v1136 = vpop.f32.mrb[0].mxu0
      %v1137 = vadd.f32 0.0, %v1136
      %v1138 = vpop.f32.mrb[0].mxu0
      %v1139 = vadd.f32 0.0, %v1138
      %v1140 = vpop.f32.mrb[0].mxu0
      %v1141 = vadd.f32 0.0, %v1140
      %1142 = vmatprep.mubr.bf16.mxu0 0
      %1143 = vmatmul.mubr.bf16.gmra.mrb[0].mxu0 %v1098
      %v1144 = vpop.f32.mrb[0].mxu0
      %v1145 = vadd.f32 0.0, %v1144
      %v1146 = vpop.f32.mrb[0].mxu0
      %v1147 = vadd.f32 0.0, %v1146
      %v1148 = vpop.f32.mrb[0].mxu0
      %v1149 = vadd.f32 0.0, %v1148
      %v1150 = vpop.f32.mrb[0].mxu0
      %v1151 = vadd.f32 0.0, %v1150
      %1152 = vdwg.mxu0
      %s1153 = scalar_lea.vmem %s3, 16
      %v1154 = vld [vmem:[%s1153] sm:$0xf]
      %v1155 = vld [vmem:[%s1153 + $0x4] sm:$0xf]
      %v1156 = vld [vmem:[%s1153 + $0x8] sm:$0xf]
      %v1157 = vld [vmem:[%s1153 + $0xc] sm:$0xf]
      %s1158 = scalar_lea.vmem %s3, 32
      %v1159 = vld [vmem:[%s1158] sm:$0xf]
      %v1160 = vld [vmem:[%s1158 + $0x4] sm:$0xf]
      %v1161 = vld [vmem:[%s1158 + $0x8] sm:$0xf]
      %v1162 = vld [vmem:[%s1158 + $0xc] sm:$0xf]
      %v1167 = vunpack.c.l.b16 %v1159
      %v1168 = vunpack.c.l.b16 %v1160
      %v1169 = vunpack.c.l.b16 %v1161
      %v1170 = vunpack.c.l.b16 %v1162
      %v1171 = vpack.c.b16 %v1168, %v1167
      %v1172 = vpack.c.b16 %v1170, %v1169
      %v1174 = vsel %vm1093, %v1171, 0
      %v1177 = vsel %vm1093, %v1172, 0
      %1179 = vmatprep.subr.bf16.mxu0 %v1054
      %1180 = vmatpush1.bf16.msra.mxu0 %v1053
      %1181 = vmatprep.subr.bf16.mxu0 %v1056
      %1182 = vmatpush1.bf16.msra.mxu0 %v1055
      %1183 = vmatprep.subr.bf16.mxu0 %v1028
      %1184 = vmatpush1.bf16.msra.mxu0 %v1027
      %1185 = vmatprep.subr.bf16.mxu0 %v1030
      %1186 = vmatpush1.bf16.msra.mxu0 %v1029
      %1187 = vmatprep.subr.bf16.mxu0 %v1076
      %1188 = vmatpush1.bf16.msra.mxu0 %v1075
      %1189 = vmatprep.subr.bf16.mxu0 %v1078
      %1190 = vmatpush1.bf16.msra.mxu0 %v1077
      %1191 = vmatprep.subr.bf16.mxu0 0
      %1192 = vmatpush1.bf16.msra.mxu0 0
      %1193 = vmatprep.subr.bf16.mxu0 0
      %1194 = vmatpush1.bf16.msra.mxu0 0
      %1195 = vmatprep.subr.bf16.mxu0 0
      %1196 = vmatpush1.bf16.msra.mxu0 0
      %1197 = vmatprep.subr.bf16.mxu0 0
      %1198 = vmatpush1.bf16.msra.mxu0 0
      %1199 = vmatprep.subr.bf16.mxu0 0
      %1200 = vmatpush1.bf16.msra.mxu0 0
      %1201 = vmatprep.subr.bf16.mxu0 0
      %1202 = vmatpush1.bf16.msra.mxu0 0
      %1203 = vmatprep.subr.bf16.mxu0 0
      %1204 = vmatpush1.bf16.msra.mxu0 0
      %1205 = vmatprep.subr.bf16.mxu0 0
      %1206 = vmatpush1.bf16.msra.mxu0 0
      %1207 = vmatprep.subr.bf16.mxu0 0
      %1208 = vmatpush1.bf16.msra.mxu0 0
      %1209 = vmatprep.subr.bf16.mxu0 0
      %1210 = vmatpush1.bf16.msra.mxu0 0
      %1211 = vmatprep.mubr.bf16.mxu0 0
      %1212 = vmatmul.mubr.bf16.gmra.mrb[0].mxu0 %v1174
      %v1213 = vpop.f32.mrb[0].mxu0
      %v1214 = vadd.f32 0.0, %v1213
      %v1215 = vpop.f32.mrb[0].mxu0
      %v1216 = vadd.f32 0.0, %v1215
      %v1217 = vpop.f32.mrb[0].mxu0
      %v1218 = vadd.f32 0.0, %v1217
      %v1219 = vpop.f32.mrb[0].mxu0
      %v1220 = vadd.f32 0.0, %v1219
      %1221 = vmatprep.mubr.bf16.mxu0 0
      %1222 = vmatmul.mubr.bf16.gmra.mrb[0].mxu0 %v1177
      %v1223 = vpop.f32.mrb[0].mxu0
      %v1224 = vadd.f32 0.0, %v1223
      %v1225 = vpop.f32.mrb[0].mxu0
      %v1226 = vadd.f32 0.0, %v1225
      %v1227 = vpop.f32.mrb[0].mxu0
      %v1228 = vadd.f32 0.0, %v1227
      %v1229 = vpop.f32.mrb[0].mxu0
      %v1230 = vadd.f32 0.0, %v1229
      %1231 = vdwg.mxu0
      %1240 = vrot.lane.b32.xlu0 %v1135, 16
      %v1241 = vpop.permute.xlu0 %1240
      %1242 = vrot.lane.b32.xlu0 %v1137, 16
      %v1243 = vpop.permute.xlu0 %1242
      %1244 = vrot.lane.b32.xlu0 %v1139, 16
      %v1245 = vpop.permute.xlu0 %1244
      %1246 = vrot.lane.b32.xlu0 %v1141, 16
      %v1247 = vpop.permute.xlu0 %1246
      %1248 = vrot.lane.b32.xlu0 %v1145, 16
      %v1249 = vpop.permute.xlu0 %1248
      %1250 = vrot.lane.b32.xlu0 %v1147, 16
      %v1251 = vpop.permute.xlu0 %1250
      %1252 = vrot.lane.b32.xlu0 %v1149, 16
      %v1253 = vpop.permute.xlu0 %1252
      %1254 = vrot.lane.b32.xlu0 %v1151, 16
      %v1255 = vpop.permute.xlu0 %1254
      %v1256 = vsel %vm852, %v1241, %v1243
      %v1257 = vsel %vm852, %v1245, %v1247
      %v1258 = vsel %vm852, %v1249, %v1251
      %v1259 = vsel %vm852, %v1253, %v1255
      %v1268 = vsel %vm852, 0.0, %v1241
      %v1269 = vsel %vm852, 0.0, %v1245
      %v1270 = vsel %vm852, 0.0, %v1249
      %v1271 = vsel %vm852, 0.0, %v1253
      %v1276 = vunpack.c.l.b16 %v1154
      %v1277 = vunpack.c.l.b16 %v1155
      %v1278 = vunpack.c.l.b16 %v1156
      %v1279 = vunpack.c.l.b16 %v1157
      %v1280 = vpack.c.b16 %v1277, %v1276
      %v1281 = vpack.c.b16 %v1279, %v1278
      %v1283 = vsel %vm1093, %v1280, 0
      %v1286 = vsel %vm1093, %v1281, 0
      %1288 = vmatprep.subr.bf16.mxu0 %v1054
      %1289 = vmatpush1.bf16.msra.mxu0 %v1053
      %1290 = vmatprep.subr.bf16.mxu0 %v1056
      %1291 = vmatpush1.bf16.msra.mxu0 %v1055
      %1292 = vmatprep.subr.bf16.mxu0 %v1028
      %1293 = vmatpush1.bf16.msra.mxu0 %v1027
      %1294 = vmatprep.subr.bf16.mxu0 %v1030
      %1295 = vmatpush1.bf16.msra.mxu0 %v1029
      %1296 = vmatprep.subr.bf16.mxu0 %v1076
      %1297 = vmatpush1.bf16.msra.mxu0 %v1075
      %1298 = vmatprep.subr.bf16.mxu0 %v1078
      %1299 = vmatpush1.bf16.msra.mxu0 %v1077
      %1300 = vmatprep.subr.bf16.mxu0 0
      %1301 = vmatpush1.bf16.msra.mxu0 0
      %1302 = vmatprep.subr.bf16.mxu0 0
      %1303 = vmatpush1.bf16.msra.mxu0 0
      %1304 = vmatprep.subr.bf16.mxu0 0
      %1305 = vmatpush1.bf16.msra.mxu0 0
      %1306 = vmatprep.subr.bf16.mxu0 0
      %1307 = vmatpush1.bf16.msra.mxu0 0
      %1308 = vmatprep.subr.bf16.mxu0 0
      %1309 = vmatpush1.bf16.msra.mxu0 0
      %1310 = vmatprep.subr.bf16.mxu0 0
      %1311 = vmatpush1.bf16.msra.mxu0 0
      %1312 = vmatprep.subr.bf16.mxu0 0
      %1313 = vmatpush1.bf16.msra.mxu0 0
      %1314 = vmatprep.subr.bf16.mxu0 0
      %1315 = vmatpush1.bf16.msra.mxu0 0
      %1316 = vmatprep.subr.bf16.mxu0 0
      %1317 = vmatpush1.bf16.msra.mxu0 0
      %1318 = vmatprep.subr.bf16.mxu0 0
      %1319 = vmatpush1.bf16.msra.mxu0 0
      %1320 = vmatprep.mubr.bf16.mxu0 0
      %1321 = vmatmul.mubr.bf16.gmra.mrb[0].mxu0 %v1283
      %v1322 = vpop.f32.mrb[0].mxu0
      %v1323 = vadd.f32 %v1268, %v1322
      %v1324 = vpop.f32.mrb[0].mxu0
      %v1325 = vadd.f32 %v1256, %v1324
      %v1326 = vpop.f32.mrb[0].mxu0
      %v1327 = vadd.f32 %v1269, %v1326
      %v1328 = vpop.f32.mrb[0].mxu0
      %v1329 = vadd.f32 %v1257, %v1328
      %1330 = vmatprep.mubr.bf16.mxu0 0
      %1331 = vmatmul.mubr.bf16.gmra.mrb[0].mxu0 %v1286
      %v1332 = vpop.f32.mrb[0].mxu0
      %v1333 = vadd.f32 %v1270, %v1332
      %v1334 = vpop.f32.mrb[0].mxu0
      %v1335 = vadd.f32 %v1258, %v1334
      %v1336 = vpop.f32.mrb[0].mxu0
      %v1337 = vadd.f32 %v1271, %v1336
      %v1338 = vpop.f32.mrb[0].mxu0
      %v1339 = vadd.f32 %v1259, %v1338
      %1340 = vdwg.mxu0
      %1349 = vrot.lane.b32.xlu0 %v1214, 112
      %v1350 = vpop.permute.xlu0 %1349
      %1351 = vrot.lane.b32.xlu0 %v1216, 112
      %v1352 = vpop.permute.xlu0 %1351
      %1353 = vrot.lane.b32.xlu0 %v1218, 112
      %v1354 = vpop.permute.xlu0 %1353
      %1355 = vrot.lane.b32.xlu0 %v1220, 112
      %v1356 = vpop.permute.xlu0 %1355
      %1357 = vrot.lane.b32.xlu0 %v1224, 112
      %v1358 = vpop.permute.xlu0 %1357
      %1359 = vrot.lane.b32.xlu0 %v1226, 112
      %v1360 = vpop.permute.xlu0 %1359
      %1361 = vrot.lane.b32.xlu0 %v1228, 112
      %v1362 = vpop.permute.xlu0 %1361
      %1363 = vrot.lane.b32.xlu0 %v1230, 112
      %v1364 = vpop.permute.xlu0 %1363
      %v1365 = vsel %vm962, %v1350, %v1352
      %v1366 = vsel %vm962, %v1354, %v1356
      %v1367 = vsel %vm962, %v1358, %v1360
      %v1368 = vsel %vm962, %v1362, %v1364
      %v1377 = vsel %vm962, %v1352, 0.0
      %v1378 = vsel %vm962, %v1356, 0.0
      %v1379 = vsel %vm962, %v1360, 0.0
      %v1380 = vsel %vm962, %v1364, 0.0
      %v1381 = vadd.f32 %v1323, %v1365
      %v1382 = vadd.f32 %v1325, %v1377
      %v1383 = vadd.f32 %v1327, %v1366
      %v1384 = vadd.f32 %v1329, %v1378
      %v1385 = vadd.f32 %v1333, %v1367
      %v1386 = vadd.f32 %v1335, %v1379
      %v1387 = vadd.f32 %v1337, %v1368
      %v1388 = vadd.f32 %v1339, %v1380
      %v1389 = vld [vmem:[%s4] sm:$0xff]
      %v1390 = vld [vmem:[%s4 + $0x8] sm:$0xff]
      %v1391 = vld [vmem:[%s4 + $0x10] sm:$0xff]
      %v1392 = vld [vmem:[%s4 + $0x18] sm:$0xff]
      %1394 = vset.pattern.permute.xlu0 0
      %1395 = vperm.xlu0 %1394, %v1389
      %v1396 = vpop.permute.xlu0 %1395
      %1399 = vset.pattern.permute.xlu0 0
      %1400 = vperm.xlu0 %1399, %v1390
      %v1401 = vpop.permute.xlu0 %1400
      %1404 = vset.pattern.permute.xlu0 0
      %1405 = vperm.xlu0 %1404, %v1391
      %v1406 = vpop.permute.xlu0 %1405
      %1409 = vset.pattern.permute.xlu0 0
      %1410 = vperm.xlu0 %1409, %v1392
      %v1411 = vpop.permute.xlu0 %1410
      %v1413 = vadd.f32 %v1381, %v1396
      %v1414 = vadd.f32 %v1382, %v1396
      %v1415 = vadd.f32 %v1383, %v1401
      %v1416 = vadd.f32 %v1384, %v1401
      %v1417 = vadd.f32 %v1385, %v1406
      %v1418 = vadd.f32 %v1386, %v1406
      %v1419 = vadd.f32 %v1387, %v1411
      %v1420 = vadd.f32 %v1388, %v1411
      %v1421 = vmax.f32 %v1413, 0.0
      %v1422 = vmax.f32 %v1414, 0.0
      %v1423 = vmax.f32 %v1415, 0.0
      %v1424 = vmax.f32 %v1416, 0.0
      %v1425 = vmax.f32 %v1417, 0.0
      %v1426 = vmax.f32 %v1418, 0.0
      %v1427 = vmax.f32 %v1419, 0.0
      %v1428 = vmax.f32 %v1420, 0.0
      %v1429 = vpack.c.bf16 %v1423, %v1421
      %v1430 = vpack.c.bf16 %v1424, %v1422
      %v1431 = vpack.c.bf16 %v1427, %v1425
      %v1432 = vpack.c.bf16 %v1428, %v1426
      %1437 = vrot.lane.b32.xlu0 %v1429, 1
      %v1438 = vpop.permute.xlu0 %1437
      %1439 = vrot.lane.b32.xlu0 %v1430, 1
      %v1440 = vpop.permute.xlu0 %1439
      %1441 = vrot.lane.b32.xlu0 %v1431, 1
      %v1442 = vpop.permute.xlu0 %1441
      %1443 = vrot.lane.b32.xlu0 %v1432, 1
      %v1444 = vpop.permute.xlu0 %1443
      %v1445 = vsel %vm578, %v1438, %v1440
      %v1446 = vsel %vm578, %v1442, %v1444
      %v1450 = vsel %vm581, 0, %v1438
      %v1453 = vsel %vm581, 0, %v1442
      %v1455 = vsel %vm600, 0, %v1450
      %v1456 = vsel %vm601, 0, %v1445
      %v1457 = vsel %vm600, 0, %v1453
      %v1458 = vsel %vm601, 0, %v1446
      %1459 = vrot.lane.b32.xlu0 %v1429, 127
      %v1460 = vpop.permute.xlu0 %1459
      %1461 = vrot.lane.b32.xlu0 %v1430, 127
      %v1462 = vpop.permute.xlu0 %1461
      %1463 = vrot.lane.b32.xlu0 %v1431, 127
      %v1464 = vpop.permute.xlu0 %1463
      %1465 = vrot.lane.b32.xlu0 %v1432, 127
      %v1466 = vpop.permute.xlu0 %1465
      %v1467 = vsel %vm608, %v1460, %v1462
      %v1468 = vsel %vm608, %v1464, %v1466
      %v1472 = vsel %vm611, %v1462, 0
      %v1475 = vsel %vm611, %v1466, 0
      %v1477 = vsel %vm629, 0, %v1467
      %v1478 = vsel %vm630, 0, %v1472
      %v1479 = vsel %vm629, 0, %v1468
      %v1480 = vsel %vm630, 0, %v1475
      %v1481 = vld [vmem:[%s5] sm:$0xf]
      %v1482 = vld [vmem:[%s5 + $0x4] sm:$0xf]
      %v1483 = vld [vmem:[%s5 + $0x8] sm:$0xf]
      %v1484 = vld [vmem:[%s5 + $0xc] sm:$0xf]
      %v1489 = vunpack.c.l.b16 %v1481
      %v1490 = vunpack.c.l.b16 %v1482
      %v1491 = vunpack.c.l.b16 %v1483
      %v1492 = vunpack.c.l.b16 %v1484
      %v1493 = vpack.c.b16 %v1490, %v1489
      %v1494 = vpack.c.b16 %v1492, %v1491
      %v1496 = vsel %vm1093, %v1493, 0
      %v1499 = vsel %vm1093, %v1494, 0
      %1501 = vmatprep.subr.bf16.mxu0 %v1456
      %1502 = vmatpush1.bf16.msra.mxu0 %v1455
      %1503 = vmatprep.subr.bf16.mxu0 %v1458
      %1504 = vmatpush1.bf16.msra.mxu0 %v1457
      %1505 = vmatprep.subr.bf16.mxu0 %v1430
      %1506 = vmatpush1.bf16.msra.mxu0 %v1429
      %1507 = vmatprep.subr.bf16.mxu0 %v1432
      %1508 = vmatpush1.bf16.msra.mxu0 %v1431
      %1509 = vmatprep.subr.bf16.mxu0 %v1478
      %1510 = vmatpush1.bf16.msra.mxu0 %v1477
      %1511 = vmatprep.subr.bf16.mxu0 %v1480
      %1512 = vmatpush1.bf16.msra.mxu0 %v1479
      %1513 = vmatprep.subr.bf16.mxu0 0
      %1514 = vmatpush1.bf16.msra.mxu0 0
      %1515 = vmatprep.subr.bf16.mxu0 0
      %1516 = vmatpush1.bf16.msra.mxu0 0
      %1517 = vmatprep.subr.bf16.mxu0 0
      %1518 = vmatpush1.bf16.msra.mxu0 0
      %1519 = vmatprep.subr.bf16.mxu0 0
      %1520 = vmatpush1.bf16.msra.mxu0 0
      %1521 = vmatprep.subr.bf16.mxu0 0
      %1522 = vmatpush1.bf16.msra.mxu0 0
      %1523 = vmatprep.subr.bf16.mxu0 0
      %1524 = vmatpush1.bf16.msra.mxu0 0
      %1525 = vmatprep.subr.bf16.mxu0 0
      %1526 = vmatpush1.bf16.msra.mxu0 0
      %1527 = vmatprep.subr.bf16.mxu0 0
      %1528 = vmatpush1.bf16.msra.mxu0 0
      %1529 = vmatprep.subr.bf16.mxu0 0
      %1530 = vmatpush1.bf16.msra.mxu0 0
      %1531 = vmatprep.subr.bf16.mxu0 0
      %1532 = vmatpush1.bf16.msra.mxu0 0
      %1533 = vmatprep.mubr.bf16.mxu0 0
      %1534 = vmatmul.mubr.bf16.gmra.mrb[0].mxu0 %v1496
      %v1535 = vpop.f32.mrb[0].mxu0
      %v1536 = vadd.f32 0.0, %v1535
      %v1537 = vpop.f32.mrb[0].mxu0
      %v1538 = vadd.f32 0.0, %v1537
      %v1539 = vpop.f32.mrb[0].mxu0
      %v1540 = vadd.f32 0.0, %v1539
      %v1541 = vpop.f32.mrb[0].mxu0
      %v1542 = vadd.f32 0.0, %v1541
      %1543 = vmatprep.mubr.bf16.mxu0 0
      %1544 = vmatmul.mubr.bf16.gmra.mrb[0].mxu0 %v1499
      %v1545 = vpop.f32.mrb[0].mxu0
      %v1546 = vadd.f32 0.0, %v1545
      %v1547 = vpop.f32.mrb[0].mxu0
      %v1548 = vadd.f32 0.0, %v1547
      %v1549 = vpop.f32.mrb[0].mxu0
      %v1550 = vadd.f32 0.0, %v1549
      %v1551 = vpop.f32.mrb[0].mxu0
      %v1552 = vadd.f32 0.0, %v1551
      %1553 = vdwg.mxu0
      %s1554 = scalar_lea.vmem %s5, 16
      %v1555 = vld [vmem:[%s1554] sm:$0xf]
      %v1556 = vld [vmem:[%s1554 + $0x4] sm:$0xf]
      %v1557 = vld [vmem:[%s1554 + $0x8] sm:$0xf]
      %v1558 = vld [vmem:[%s1554 + $0xc] sm:$0xf]
      %s1559 = scalar_lea.vmem %s5, 32
      %v1560 = vld [vmem:[%s1559] sm:$0xf]
      %v1561 = vld [vmem:[%s1559 + $0x4] sm:$0xf]
      %v1562 = vld [vmem:[%s1559 + $0x8] sm:$0xf]
      %v1563 = vld [vmem:[%s1559 + $0xc] sm:$0xf]
      %v1568 = vunpack.c.l.b16 %v1560
      %v1569 = vunpack.c.l.b16 %v1561
      %v1570 = vunpack.c.l.b16 %v1562
      %v1571 = vunpack.c.l.b16 %v1563
      %v1572 = vpack.c.b16 %v1569, %v1568
      %v1573 = vpack.c.b16 %v1571, %v1570
      %v1575 = vsel %vm1093, %v1572, 0
      %v1578 = vsel %vm1093, %v1573, 0
      %1580 = vmatprep.subr.bf16.mxu0 %v1456
      %1581 = vmatpush1.bf16.msra.mxu0 %v1455
      %1582 = vmatprep.subr.bf16.mxu0 %v1458
      %1583 = vmatpush1.bf16.msra.mxu0 %v1457
      %1584 = vmatprep.subr.bf16.mxu0 %v1430
      %1585 = vmatpush1.bf16.msra.mxu0 %v1429
      %1586 = vmatprep.subr.bf16.mxu0 %v1432
      %1587 = vmatpush1.bf16.msra.mxu0 %v1431
      %1588 = vmatprep.subr.bf16.mxu0 %v1478
      %1589 = vmatpush1.bf16.msra.mxu0 %v1477
      %1590 = vmatprep.subr.bf16.mxu0 %v1480
      %1591 = vmatpush1.bf16.msra.mxu0 %v1479
      %1592 = vmatprep.subr.bf16.mxu0 0
      %1593 = vmatpush1.bf16.msra.mxu0 0
      %1594 = vmatprep.subr.bf16.mxu0 0
      %1595 = vmatpush1.bf16.msra.mxu0 0
      %1596 = vmatprep.subr.bf16.mxu0 0
      %1597 = vmatpush1.bf16.msra.mxu0 0
      %1598 = vmatprep.subr.bf16.mxu0 0
      %1599 = vmatpush1.bf16.msra.mxu0 0
      %1600 = vmatprep.subr.bf16.mxu0 0
      %1601 = vmatpush1.bf16.msra.mxu0 0
      %1602 = vmatprep.subr.bf16.mxu0 0
      %1603 = vmatpush1.bf16.msra.mxu0 0
      %1604 = vmatprep.subr.bf16.mxu0 0
      %1605 = vmatpush1.bf16.msra.mxu0 0
      %1606 = vmatprep.subr.bf16.mxu0 0
      %1607 = vmatpush1.bf16.msra.mxu0 0
      %1608 = vmatprep.subr.bf16.mxu0 0
      %1609 = vmatpush1.bf16.msra.mxu0 0
      %1610 = vmatprep.subr.bf16.mxu0 0
      %1611 = vmatpush1.bf16.msra.mxu0 0
      %1612 = vmatprep.mubr.bf16.mxu0 0
      %1613 = vmatmul.mubr.bf16.gmra.mrb[0].mxu0 %v1575
      %v1614 = vpop.f32.mrb[0].mxu0
      %v1615 = vadd.f32 0.0, %v1614
      %v1616 = vpop.f32.mrb[0].mxu0
      %v1617 = vadd.f32 0.0, %v1616
      %v1618 = vpop.f32.mrb[0].mxu0
      %v1619 = vadd.f32 0.0, %v1618
      %v1620 = vpop.f32.mrb[0].mxu0
      %v1621 = vadd.f32 0.0, %v1620
      %1622 = vmatprep.mubr.bf16.mxu0 0
      %1623 = vmatmul.mubr.bf16.gmra.mrb[0].mxu0 %v1578
      %v1624 = vpop.f32.mrb[0].mxu0
      %v1625 = vadd.f32 0.0, %v1624
      %v1626 = vpop.f32.mrb[0].mxu0
      %v1627 = vadd.f32 0.0, %v1626
      %v1628 = vpop.f32.mrb[0].mxu0
      %v1629 = vadd.f32 0.0, %v1628
      %v1630 = vpop.f32.mrb[0].mxu0
      %v1631 = vadd.f32 0.0, %v1630
      %1632 = vdwg.mxu0
      %1641 = vrot.lane.b32.xlu0 %v1536, 16
      %v1642 = vpop.permute.xlu0 %1641
      %1643 = vrot.lane.b32.xlu0 %v1538, 16
      %v1644 = vpop.permute.xlu0 %1643
      %1645 = vrot.lane.b32.xlu0 %v1540, 16
      %v1646 = vpop.permute.xlu0 %1645
      %1647 = vrot.lane.b32.xlu0 %v1542, 16
      %v1648 = vpop.permute.xlu0 %1647
      %1649 = vrot.lane.b32.xlu0 %v1546, 16
      %v1650 = vpop.permute.xlu0 %1649
      %1651 = vrot.lane.b32.xlu0 %v1548, 16
      %v1652 = vpop.permute.xlu0 %1651
      %1653 = vrot.lane.b32.xlu0 %v1550, 16
      %v1654 = vpop.permute.xlu0 %1653
      %1655 = vrot.lane.b32.xlu0 %v1552, 16
      %v1656 = vpop.permute.xlu0 %1655
      %v1657 = vsel %vm852, %v1642, %v1644
      %v1658 = vsel %vm852, %v1646, %v1648
      %v1659 = vsel %vm852, %v1650, %v1652
      %v1660 = vsel %vm852, %v1654, %v1656
      %v1669 = vsel %vm852, 0.0, %v1642
      %v1670 = vsel %vm852, 0.0, %v1646
      %v1671 = vsel %vm852, 0.0, %v1650
      %v1672 = vsel %vm852, 0.0, %v1654
      %v1677 = vunpack.c.l.b16 %v1555
      %v1678 = vunpack.c.l.b16 %v1556
      %v1679 = vunpack.c.l.b16 %v1557
      %v1680 = vunpack.c.l.b16 %v1558
      %v1681 = vpack.c.b16 %v1678, %v1677
      %v1682 = vpack.c.b16 %v1680, %v1679
      %v1684 = vsel %vm1093, %v1681, 0
      %v1687 = vsel %vm1093, %v1682, 0
      %1689 = vmatprep.subr.bf16.mxu0 %v1456
      %1690 = vmatpush1.bf16.msra.mxu0 %v1455
      %1691 = vmatprep.subr.bf16.mxu0 %v1458
      %1692 = vmatpush1.bf16.msra.mxu0 %v1457
      %1693 = vmatprep.subr.bf16.mxu0 %v1430
      %1694 = vmatpush1.bf16.msra.mxu0 %v1429
      %1695 = vmatprep.subr.bf16.mxu0 %v1432
      %1696 = vmatpush1.bf16.msra.mxu0 %v1431
      %1697 = vmatprep.subr.bf16.mxu0 %v1478
      %1698 = vmatpush1.bf16.msra.mxu0 %v1477
      %1699 = vmatprep.subr.bf16.mxu0 %v1480
      %1700 = vmatpush1.bf16.msra.mxu0 %v1479
      %1701 = vmatprep.subr.bf16.mxu0 0
      %1702 = vmatpush1.bf16.msra.mxu0 0
      %1703 = vmatprep.subr.bf16.mxu0 0
      %1704 = vmatpush1.bf16.msra.mxu0 0
      %1705 = vmatprep.subr.bf16.mxu0 0
      %1706 = vmatpush1.bf16.msra.mxu0 0
      %1707 = vmatprep.subr.bf16.mxu0 0
      %1708 = vmatpush1.bf16.msra.mxu0 0
      %1709 = vmatprep.subr.bf16.mxu0 0
      %1710 = vmatpush1.bf16.msra.mxu0 0
      %1711 = vmatprep.subr.bf16.mxu0 0
      %1712 = vmatpush1.bf16.msra.mxu0 0
      %1713 = vmatprep.subr.bf16.mxu0 0
      %1714 = vmatpush1.bf16.msra.mxu0 0
      %1715 = vmatprep.subr.bf16.mxu0 0
      %1716 = vmatpush1.bf16.msra.mxu0 0
      %1717 = vmatprep.subr.bf16.mxu0 0
      %1718 = vmatpush1.bf16.msra.mxu0 0
      %1719 = vmatprep.subr.bf16.mxu0 0
      %1720 = vmatpush1.bf16.msra.mxu0 0
      %1721 = vmatprep.mubr.bf16.mxu0 0
      %1722 = vmatmul.mubr.bf16.gmra.mrb[0].mxu0 %v1684
      %v1723 = vpop.f32.mrb[0].mxu0
      %v1724 = vadd.f32 %v1669, %v1723
      %v1725 = vpop.f32.mrb[0].mxu0
      %v1726 = vadd.f32 %v1657, %v1725
      %v1727 = vpop.f32.mrb[0].mxu0
      %v1728 = vadd.f32 %v1670, %v1727
      %v1729 = vpop.f32.mrb[0].mxu0
      %v1730 = vadd.f32 %v1658, %v1729
      %1731 = vmatprep.mubr.bf16.mxu0 0
      %1732 = vmatmul.mubr.bf16.gmra.mrb[0].mxu0 %v1687
      %v1733 = vpop.f32.mrb[0].mxu0
      %v1734 = vadd.f32 %v1671, %v1733
      %v1735 = vpop.f32.mrb[0].mxu0
      %v1736 = vadd.f32 %v1659, %v1735
      %v1737 = vpop.f32.mrb[0].mxu0
      %v1738 = vadd.f32 %v1672, %v1737
      %v1739 = vpop.f32.mrb[0].mxu0
      %v1740 = vadd.f32 %v1660, %v1739
      %1741 = vdwg.mxu0
      %1750 = vrot.lane.b32.xlu0 %v1615, 112
      %v1751 = vpop.permute.xlu0 %1750
      %1752 = vrot.lane.b32.xlu0 %v1617, 112
      %v1753 = vpop.permute.xlu0 %1752
      %1754 = vrot.lane.b32.xlu0 %v1619, 112
      %v1755 = vpop.permute.xlu0 %1754
      %1756 = vrot.lane.b32.xlu0 %v1621, 112
      %v1757 = vpop.permute.xlu0 %1756
      %1758 = vrot.lane.b32.xlu0 %v1625, 112
      %v1759 = vpop.permute.xlu0 %1758
      %1760 = vrot.lane.b32.xlu0 %v1627, 112
      %v1761 = vpop.permute.xlu0 %1760
      %1762 = vrot.lane.b32.xlu0 %v1629, 112
      %v1763 = vpop.permute.xlu0 %1762
      %1764 = vrot.lane.b32.xlu0 %v1631, 112
      %v1765 = vpop.permute.xlu0 %1764
      %v1766 = vsel %vm962, %v1751, %v1753
      %v1767 = vsel %vm962, %v1755, %v1757
      %v1768 = vsel %vm962, %v1759, %v1761
      %v1769 = vsel %vm962, %v1763, %v1765
      %v1778 = vsel %vm962, %v1753, 0.0
      %v1779 = vsel %vm962, %v1757, 0.0
      %v1780 = vsel %vm962, %v1761, 0.0
      %v1781 = vsel %vm962, %v1765, 0.0
      %v1782 = vadd.f32 %v1724, %v1766
      %v1783 = vadd.f32 %v1726, %v1778
      %v1784 = vadd.f32 %v1728, %v1767
      %v1785 = vadd.f32 %v1730, %v1779
      %v1786 = vadd.f32 %v1734, %v1768
      %v1787 = vadd.f32 %v1736, %v1780
      %v1788 = vadd.f32 %v1738, %v1769
      %v1789 = vadd.f32 %v1740, %v1781
      %v1790 = vld [vmem:[%s6] sm:$0xff]
      %v1791 = vld [vmem:[%s6 + $0x8] sm:$0xff]
      %v1792 = vld [vmem:[%s6 + $0x10] sm:$0xff]
      %v1793 = vld [vmem:[%s6 + $0x18] sm:$0xff]
      %1795 = vset.pattern.permute.xlu0 0
      %1796 = vperm.xlu0 %1795, %v1790
      %v1797 = vpop.permute.xlu0 %1796
      %1800 = vset.pattern.permute.xlu0 0
      %1801 = vperm.xlu0 %1800, %v1791
      %v1802 = vpop.permute.xlu0 %1801
      %1805 = vset.pattern.permute.xlu0 0
      %1806 = vperm.xlu0 %1805, %v1792
      %v1807 = vpop.permute.xlu0 %1806
      %1810 = vset.pattern.permute.xlu0 0
      %1811 = vperm.xlu0 %1810, %v1793
      %v1812 = vpop.permute.xlu0 %1811
      %v1814 = vadd.f32 %v1782, %v1797
      %v1815 = vadd.f32 %v1783, %v1797
      %v1816 = vadd.f32 %v1784, %v1802
      %v1817 = vadd.f32 %v1785, %v1802
      %v1818 = vadd.f32 %v1786, %v1807
      %v1819 = vadd.f32 %v1787, %v1807
      %v1820 = vadd.f32 %v1788, %v1812
      %v1821 = vadd.f32 %v1789, %v1812
      %v1822 = vmax.f32 %v1814, 0.0
      %v1823 = vmax.f32 %v1815, 0.0
      %v1824 = vmax.f32 %v1816, 0.0
      %v1825 = vmax.f32 %v1817, 0.0
      %v1826 = vmax.f32 %v1818, 0.0
      %v1827 = vmax.f32 %v1819, 0.0
      %v1828 = vmax.f32 %v1820, 0.0
      %v1829 = vmax.f32 %v1821, 0.0
      %v1830 = vpack.c.bf16 %v1824, %v1822
      %v1831 = vpack.c.bf16 %v1825, %v1823
      %v1832 = vpack.c.bf16 %v1828, %v1826
      %v1833 = vpack.c.bf16 %v1829, %v1827
      %1838 = vrot.lane.b32.xlu0 %v1830, 1
      %v1839 = vpop.permute.xlu0 %1838
      %1840 = vrot.lane.b32.xlu0 %v1831, 1
      %v1841 = vpop.permute.xlu0 %1840
      %1842 = vrot.lane.b32.xlu0 %v1832, 1
      %v1843 = vpop.permute.xlu0 %1842
      %1844 = vrot.lane.b32.xlu0 %v1833, 1
      %v1845 = vpop.permute.xlu0 %1844
      %v1846 = vsel %vm578, %v1839, %v1841
      %v1847 = vsel %vm578, %v1843, %v1845
      %v1851 = vsel %vm581, 0, %v1839
      %v1854 = vsel %vm581, 0, %v1843
      %v1856 = vsel %vm600, 0, %v1851
      %v1857 = vsel %vm601, 0, %v1846
      %v1858 = vsel %vm600, 0, %v1854
      %v1859 = vsel %vm601, 0, %v1847
      %1860 = vrot.lane.b32.xlu0 %v1830, 127
      %v1861 = vpop.permute.xlu0 %1860
      %1862 = vrot.lane.b32.xlu0 %v1831, 127
      %v1863 = vpop.permute.xlu0 %1862
      %1864 = vrot.lane.b32.xlu0 %v1832, 127
      %v1865 = vpop.permute.xlu0 %1864
      %1866 = vrot.lane.b32.xlu0 %v1833, 127
      %v1867 = vpop.permute.xlu0 %1866
      %v1868 = vsel %vm608, %v1861, %v1863
      %v1869 = vsel %vm608, %v1865, %v1867
      %v1873 = vsel %vm611, %v1863, 0
      %v1876 = vsel %vm611, %v1867, 0
      %v1878 = vsel %vm629, 0, %v1868
      %v1879 = vsel %vm630, 0, %v1873
      %v1880 = vsel %vm629, 0, %v1869
      %v1881 = vsel %vm630, 0, %v1876
      %v1882 = vld [vmem:[%s7] sm:$0xf]
      %v1883 = vld [vmem:[%s7 + $0x4] sm:$0xf]
      %v1884 = vld [vmem:[%s7 + $0x8] sm:$0xf]
      %v1885 = vld [vmem:[%s7 + $0xc] sm:$0xf]
      %v1890 = vunpack.c.l.b16 %v1882
      %v1891 = vunpack.c.l.b16 %v1883
      %v1892 = vunpack.c.l.b16 %v1884
      %v1893 = vunpack.c.l.b16 %v1885
      %v1894 = vpack.c.b16 %v1891, %v1890
      %v1895 = vpack.c.b16 %v1893, %v1892
      %v1897 = vsel %vm1093, %v1894, 0
      %v1900 = vsel %vm1093, %v1895, 0
      %1902 = vmatprep.subr.bf16.mxu0 %v1857
      %1903 = vmatpush1.bf16.msra.mxu0 %v1856
      %1904 = vmatprep.subr.bf16.mxu0 %v1859
      %1905 = vmatpush1.bf16.msra.mxu0 %v1858
      %1906 = vmatprep.subr.bf16.mxu0 %v1831
      %1907 = vmatpush1.bf16.msra.mxu0 %v1830
      %1908 = vmatprep.subr.bf16.mxu0 %v1833
      %1909 = vmatpush1.bf16.msra.mxu0 %v1832
      %1910 = vmatprep.subr.bf16.mxu0 %v1879
      %1911 = vmatpush1.bf16.msra.mxu0 %v1878
      %1912 = vmatprep.subr.bf16.mxu0 %v1881
      %1913 = vmatpush1.bf16.msra.mxu0 %v1880
      %1914 = vmatprep.subr.bf16.mxu0 0
      %1915 = vmatpush1.bf16.msra.mxu0 0
      %1916 = vmatprep.subr.bf16.mxu0 0
      %1917 = vmatpush1.bf16.msra.mxu0 0
      %1918 = vmatprep.subr.bf16.mxu0 0
      %1919 = vmatpush1.bf16.msra.mxu0 0
      %1920 = vmatprep.subr.bf16.mxu0 0
      %1921 = vmatpush1.bf16.msra.mxu0 0
      %1922 = vmatprep.subr.bf16.mxu0 0
      %1923 = vmatpush1.bf16.msra.mxu0 0
      %1924 = vmatprep.subr.bf16.mxu0 0
      %1925 = vmatpush1.bf16.msra.mxu0 0
      %1926 = vmatprep.subr.bf16.mxu0 0
      %1927 = vmatpush1.bf16.msra.mxu0 0
      %1928 = vmatprep.subr.bf16.mxu0 0
      %1929 = vmatpush1.bf16.msra.mxu0 0
      %1930 = vmatprep.subr.bf16.mxu0 0
      %1931 = vmatpush1.bf16.msra.mxu0 0
      %1932 = vmatprep.subr.bf16.mxu0 0
      %1933 = vmatpush1.bf16.msra.mxu0 0
      %1934 = vmatprep.mubr.bf16.mxu0 0
      %1935 = vmatmul.mubr.bf16.gmra.mrb[0].mxu0 %v1897
      %v1936 = vpop.f32.mrb[0].mxu0
      %v1937 = vadd.f32 0.0, %v1936
      %v1938 = vpop.f32.mrb[0].mxu0
      %v1939 = vadd.f32 0.0, %v1938
      %v1940 = vpop.f32.mrb[0].mxu0
      %v1941 = vadd.f32 0.0, %v1940
      %v1942 = vpop.f32.mrb[0].mxu0
      %v1943 = vadd.f32 0.0, %v1942
      %1944 = vmatprep.mubr.bf16.mxu0 0
      %1945 = vmatmul.mubr.bf16.gmra.mrb[0].mxu0 %v1900
      %v1946 = vpop.f32.mrb[0].mxu0
      %v1947 = vadd.f32 0.0, %v1946
      %v1948 = vpop.f32.mrb[0].mxu0
      %v1949 = vadd.f32 0.0, %v1948
      %v1950 = vpop.f32.mrb[0].mxu0
      %v1951 = vadd.f32 0.0, %v1950
      %v1952 = vpop.f32.mrb[0].mxu0
      %v1953 = vadd.f32 0.0, %v1952
      %1954 = vdwg.mxu0
      %s1955 = scalar_lea.vmem %s7, 16
      %v1956 = vld [vmem:[%s1955] sm:$0xf]
      %v1957 = vld [vmem:[%s1955 + $0x4] sm:$0xf]
      %v1958 = vld [vmem:[%s1955 + $0x8] sm:$0xf]
      %v1959 = vld [vmem:[%s1955 + $0xc] sm:$0xf]
      %s1960 = scalar_lea.vmem %s7, 32
      %v1961 = vld [vmem:[%s1960] sm:$0xf]
      %v1962 = vld [vmem:[%s1960 + $0x4] sm:$0xf]
      %v1963 = vld [vmem:[%s1960 + $0x8] sm:$0xf]
      %v1964 = vld [vmem:[%s1960 + $0xc] sm:$0xf]
      %v1969 = vunpack.c.l.b16 %v1961
      %v1970 = vunpack.c.l.b16 %v1962
      %v1971 = vunpack.c.l.b16 %v1963
      %v1972 = vunpack.c.l.b16 %v1964
      %v1973 = vpack.c.b16 %v1970, %v1969
      %v1974 = vpack.c.b16 %v1972, %v1971
      %v1976 = vsel %vm1093, %v1973, 0
      %v1979 = vsel %vm1093, %v1974, 0
      %1981 = vmatprep.subr.bf16.mxu0 %v1857
      %1982 = vmatpush1.bf16.msra.mxu0 %v1856
      %1983 = vmatprep.subr.bf16.mxu0 %v1859
      %1984 = vmatpush1.bf16.msra.mxu0 %v1858
      %1985 = vmatprep.subr.bf16.mxu0 %v1831
      %1986 = vmatpush1.bf16.msra.mxu0 %v1830
      %1987 = vmatprep.subr.bf16.mxu0 %v1833
      %1988 = vmatpush1.bf16.msra.mxu0 %v1832
      %1989 = vmatprep.subr.bf16.mxu0 %v1879
      %1990 = vmatpush1.bf16.msra.mxu0 %v1878
      %1991 = vmatprep.subr.bf16.mxu0 %v1881
      %1992 = vmatpush1.bf16.msra.mxu0 %v1880
      %1993 = vmatprep.subr.bf16.mxu0 0
      %1994 = vmatpush1.bf16.msra.mxu0 0
      %1995 = vmatprep.subr.bf16.mxu0 0
      %1996 = vmatpush1.bf16.msra.mxu0 0
      %1997 = vmatprep.subr.bf16.mxu0 0
      %1998 = vmatpush1.bf16.msra.mxu0 0
      %1999 = vmatprep.subr.bf16.mxu0 0
      %2000 = vmatpush1.bf16.msra.mxu0 0
      %2001 = vmatprep.subr.bf16.mxu0 0
      %2002 = vmatpush1.bf16.msra.mxu0 0
      %2003 = vmatprep.subr.bf16.mxu0 0
      %2004 = vmatpush1.bf16.msra.mxu0 0
      %2005 = vmatprep.subr.bf16.mxu0 0
      %2006 = vmatpush1.bf16.msra.mxu0 0
      %2007 = vmatprep.subr.bf16.mxu0 0
      %2008 = vmatpush1.bf16.msra.mxu0 0
      %2009 = vmatprep.subr.bf16.mxu0 0
      %2010 = vmatpush1.bf16.msra.mxu0 0
      %2011 = vmatprep.subr.bf16.mxu0 0
      %2012 = vmatpush1.bf16.msra.mxu0 0
      %2013 = vmatprep.mubr.bf16.mxu0 0
      %2014 = vmatmul.mubr.bf16.gmra.mrb[0].mxu0 %v1976
      %v2015 = vpop.f32.mrb[0].mxu0
      %v2016 = vadd.f32 0.0, %v2015
      %v2017 = vpop.f32.mrb[0].mxu0
      %v2018 = vadd.f32 0.0, %v2017
      %v2019 = vpop.f32.mrb[0].mxu0
      %v2020 = vadd.f32 0.0, %v2019
      %v2021 = vpop.f32.mrb[0].mxu0
      %v2022 = vadd.f32 0.0, %v2021
      %2023 = vmatprep.mubr.bf16.mxu0 0
      %2024 = vmatmul.mubr.bf16.gmra.mrb[0].mxu0 %v1979
      %v2025 = vpop.f32.mrb[0].mxu0
      %v2026 = vadd.f32 0.0, %v2025
      %v2027 = vpop.f32.mrb[0].mxu0
      %v2028 = vadd.f32 0.0, %v2027
      %v2029 = vpop.f32.mrb[0].mxu0
      %v2030 = vadd.f32 0.0, %v2029
      %v2031 = vpop.f32.mrb[0].mxu0
      %v2032 = vadd.f32 0.0, %v2031
      %2033 = vdwg.mxu0
      %2042 = vrot.lane.b32.xlu0 %v1937, 16
      %v2043 = vpop.permute.xlu0 %2042
      %2044 = vrot.lane.b32.xlu0 %v1939, 16
      %v2045 = vpop.permute.xlu0 %2044
      %2046 = vrot.lane.b32.xlu0 %v1941, 16
      %v2047 = vpop.permute.xlu0 %2046
      %2048 = vrot.lane.b32.xlu0 %v1943, 16
      %v2049 = vpop.permute.xlu0 %2048
      %2050 = vrot.lane.b32.xlu0 %v1947, 16
      %v2051 = vpop.permute.xlu0 %2050
      %2052 = vrot.lane.b32.xlu0 %v1949, 16
      %v2053 = vpop.permute.xlu0 %2052
      %2054 = vrot.lane.b32.xlu0 %v1951, 16
      %v2055 = vpop.permute.xlu0 %2054
      %2056 = vrot.lane.b32.xlu0 %v1953, 16
      %v2057 = vpop.permute.xlu0 %2056
      %v2058 = vsel %vm852, %v2043, %v2045
      %v2059 = vsel %vm852, %v2047, %v2049
      %v2060 = vsel %vm852, %v2051, %v2053
      %v2061 = vsel %vm852, %v2055, %v2057
      %v2070 = vsel %vm852, 0.0, %v2043
      %v2071 = vsel %vm852, 0.0, %v2047
      %v2072 = vsel %vm852, 0.0, %v2051
      %v2073 = vsel %vm852, 0.0, %v2055
      %v2078 = vunpack.c.l.b16 %v1956
      %v2079 = vunpack.c.l.b16 %v1957
      %v2080 = vunpack.c.l.b16 %v1958
      %v2081 = vunpack.c.l.b16 %v1959
      %v2082 = vpack.c.b16 %v2079, %v2078
      %v2083 = vpack.c.b16 %v2081, %v2080
      %v2085 = vsel %vm1093, %v2082, 0
      %v2088 = vsel %vm1093, %v2083, 0
      %2090 = vmatprep.subr.bf16.mxu0 %v1857
      %2091 = vmatpush1.bf16.msra.mxu0 %v1856
      %2092 = vmatprep.subr.bf16.mxu0 %v1859
      %2093 = vmatpush1.bf16.msra.mxu0 %v1858
      %2094 = vmatprep.subr.bf16.mxu0 %v1831
      %2095 = vmatpush1.bf16.msra.mxu0 %v1830
      %2096 = vmatprep.subr.bf16.mxu0 %v1833
      %2097 = vmatpush1.bf16.msra.mxu0 %v1832
      %2098 = vmatprep.subr.bf16.mxu0 %v1879
      %2099 = vmatpush1.bf16.msra.mxu0 %v1878
      %2100 = vmatprep.subr.bf16.mxu0 %v1881
      %2101 = vmatpush1.bf16.msra.mxu0 %v1880
      %2102 = vmatprep.subr.bf16.mxu0 0
      %2103 = vmatpush1.bf16.msra.mxu0 0
      %2104 = vmatprep.subr.bf16.mxu0 0
      %2105 = vmatpush1.bf16.msra.mxu0 0
      %2106 = vmatprep.subr.bf16.mxu0 0
      %2107 = vmatpush1.bf16.msra.mxu0 0
      %2108 = vmatprep.subr.bf16.mxu0 0
      %2109 = vmatpush1.bf16.msra.mxu0 0
      %2110 = vmatprep.subr.bf16.mxu0 0
      %2111 = vmatpush1.bf16.msra.mxu0 0
      %2112 = vmatprep.subr.bf16.mxu0 0
      %2113 = vmatpush1.bf16.msra.mxu0 0
      %2114 = vmatprep.subr.bf16.mxu0 0
      %2115 = vmatpush1.bf16.msra.mxu0 0
      %2116 = vmatprep.subr.bf16.mxu0 0
      %2117 = vmatpush1.bf16.msra.mxu0 0
      %2118 = vmatprep.subr.bf16.mxu0 0
      %2119 = vmatpush1.bf16.msra.mxu0 0
      %2120 = vmatprep.subr.bf16.mxu0 0
      %2121 = vmatpush1.bf16.msra.mxu0 0
      %2122 = vmatprep.mubr.bf16.mxu0 0
      %2123 = vmatmul.mubr.bf16.gmra.mrb[0].mxu0 %v2085
      %v2124 = vpop.f32.mrb[0].mxu0
      %v2125 = vadd.f32 %v2070, %v2124
      %v2126 = vpop.f32.mrb[0].mxu0
      %v2127 = vadd.f32 %v2058, %v2126
      %v2128 = vpop.f32.mrb[0].mxu0
      %v2129 = vadd.f32 %v2071, %v2128
      %v2130 = vpop.f32.mrb[0].mxu0
      %v2131 = vadd.f32 %v2059, %v2130
      %2132 = vmatprep.mubr.bf16.mxu0 0
      %2133 = vmatmul.mubr.bf16.gmra.mrb[0].mxu0 %v2088
      %v2134 = vpop.f32.mrb[0].mxu0
      %v2135 = vadd.f32 %v2072, %v2134
      %v2136 = vpop.f32.mrb[0].mxu0
      %v2137 = vadd.f32 %v2060, %v2136
      %v2138 = vpop.f32.mrb[0].mxu0
      %v2139 = vadd.f32 %v2073, %v2138
      %v2140 = vpop.f32.mrb[0].mxu0
      %v2141 = vadd.f32 %v2061, %v2140
      %2142 = vdwg.mxu0
      %2151 = vrot.lane.b32.xlu0 %v2016, 112
      %v2152 = vpop.permute.xlu0 %2151
      %2153 = vrot.lane.b32.xlu0 %v2018, 112
      %v2154 = vpop.permute.xlu0 %2153
      %2155 = vrot.lane.b32.xlu0 %v2020, 112
      %v2156 = vpop.permute.xlu0 %2155
      %2157 = vrot.lane.b32.xlu0 %v2022, 112
      %v2158 = vpop.permute.xlu0 %2157
      %2159 = vrot.lane.b32.xlu0 %v2026, 112
      %v2160 = vpop.permute.xlu0 %2159
      %2161 = vrot.lane.b32.xlu0 %v2028, 112
      %v2162 = vpop.permute.xlu0 %2161
      %2163 = vrot.lane.b32.xlu0 %v2030, 112
      %v2164 = vpop.permute.xlu0 %2163
      %2165 = vrot.lane.b32.xlu0 %v2032, 112
      %v2166 = vpop.permute.xlu0 %2165
      %v2167 = vsel %vm962, %v2152, %v2154
      %v2168 = vsel %vm962, %v2156, %v2158
      %v2169 = vsel %vm962, %v2160, %v2162
      %v2170 = vsel %vm962, %v2164, %v2166
      %v2179 = vsel %vm962, %v2154, 0.0
      %v2180 = vsel %vm962, %v2158, 0.0
      %v2181 = vsel %vm962, %v2162, 0.0
      %v2182 = vsel %vm962, %v2166, 0.0
      %v2183 = vadd.f32 %v2125, %v2167
      %v2184 = vadd.f32 %v2127, %v2179
      %v2185 = vadd.f32 %v2129, %v2168
      %v2186 = vadd.f32 %v2131, %v2180
      %v2187 = vadd.f32 %v2135, %v2169
      %v2188 = vadd.f32 %v2137, %v2181
      %v2189 = vadd.f32 %v2139, %v2170
      %v2190 = vadd.f32 %v2141, %v2182
      %v2191 = vld [vmem:[%s8] sm:$0xff]
      %v2192 = vld [vmem:[%s8 + $0x8] sm:$0xff]
      %v2193 = vld [vmem:[%s8 + $0x10] sm:$0xff]
      %v2194 = vld [vmem:[%s8 + $0x18] sm:$0xff]
      %2196 = vset.pattern.permute.xlu0 0
      %2197 = vperm.xlu0 %2196, %v2191
      %v2198 = vpop.permute.xlu0 %2197
      %2201 = vset.pattern.permute.xlu0 0
      %2202 = vperm.xlu0 %2201, %v2192
      %v2203 = vpop.permute.xlu0 %2202
      %2206 = vset.pattern.permute.xlu0 0
      %2207 = vperm.xlu0 %2206, %v2193
      %v2208 = vpop.permute.xlu0 %2207
      %2211 = vset.pattern.permute.xlu0 0
      %2212 = vperm.xlu0 %2211, %v2194
      %v2213 = vpop.permute.xlu0 %2212
      %v2215 = vadd.f32 %v2183, %v2198
      %v2216 = vadd.f32 %v2184, %v2198
      %v2217 = vadd.f32 %v2185, %v2203
      %v2218 = vadd.f32 %v2186, %v2203
      %v2219 = vadd.f32 %v2187, %v2208
      %v2220 = vadd.f32 %v2188, %v2208
      %v2221 = vadd.f32 %v2189, %v2213
      %v2222 = vadd.f32 %v2190, %v2213
      %v2223 = vmax.f32 %v2215, 0.0
      %v2224 = vmax.f32 %v2216, 0.0
      %v2225 = vmax.f32 %v2217, 0.0
      %v2226 = vmax.f32 %v2218, 0.0
      %v2227 = vmax.f32 %v2219, 0.0
      %v2228 = vmax.f32 %v2220, 0.0
      %v2229 = vmax.f32 %v2221, 0.0
      %v2230 = vmax.f32 %v2222, 0.0
      %v2231 = vpack.c.bf16 %v2225, %v2223
      %v2232 = vpack.c.bf16 %v2226, %v2224
      %v2233 = vpack.c.bf16 %v2229, %v2227
      %v2234 = vpack.c.bf16 %v2230, %v2228
      %2239 = vrot.lane.b32.xlu0 %v2231, 1
      %v2240 = vpop.permute.xlu0 %2239
      %2241 = vrot.lane.b32.xlu0 %v2232, 1
      %v2242 = vpop.permute.xlu0 %2241
      %2243 = vrot.lane.b32.xlu0 %v2233, 1
      %v2244 = vpop.permute.xlu0 %2243
      %2245 = vrot.lane.b32.xlu0 %v2234, 1
      %v2246 = vpop.permute.xlu0 %2245
      %v2247 = vsel %vm578, %v2240, %v2242
      %v2248 = vsel %vm578, %v2244, %v2246
      %v2252 = vsel %vm581, 0, %v2240
      %v2255 = vsel %vm581, 0, %v2244
      %v2257 = vsel %vm600, 0, %v2252
      %v2258 = vsel %vm601, 0, %v2247
      %v2259 = vsel %vm600, 0, %v2255
      %v2260 = vsel %vm601, 0, %v2248
      %2261 = vrot.lane.b32.xlu0 %v2231, 127
      %v2262 = vpop.permute.xlu0 %2261
      %2263 = vrot.lane.b32.xlu0 %v2232, 127
      %v2264 = vpop.permute.xlu0 %2263
      %2265 = vrot.lane.b32.xlu0 %v2233, 127
      %v2266 = vpop.permute.xlu0 %2265
      %2267 = vrot.lane.b32.xlu0 %v2234, 127
      %v2268 = vpop.permute.xlu0 %2267
      %v2269 = vsel %vm608, %v2262, %v2264
      %v2270 = vsel %vm608, %v2266, %v2268
      %v2274 = vsel %vm611, %v2264, 0
      %v2277 = vsel %vm611, %v2268, 0
      %v2279 = vsel %vm629, 0, %v2269
      %v2280 = vsel %vm630, 0, %v2274
      %v2281 = vsel %vm629, 0, %v2270
      %v2282 = vsel %vm630, 0, %v2277
      %v2283 = vld [vmem:[%s9] sm:$0xff]
      %v2284 = vld [vmem:[%s9 + $0x8] sm:$0xff]
      %v2285 = vld [vmem:[%s9 + $0x10] sm:$0xff]
      %v2286 = vld [vmem:[%s9 + $0x18] sm:$0xff]
      %v2291 = vunpack.c.l.b16 %v2283
      %v2292 = vunpack.c.h.b16 %v2283
      %v2293 = vunpack.c.l.b16 %v2284
      %v2294 = vunpack.c.h.b16 %v2284
      %v2295 = vunpack.c.l.b16 %v2285
      %v2296 = vunpack.c.h.b16 %v2285
      %v2297 = vunpack.c.l.b16 %v2286
      %v2298 = vunpack.c.h.b16 %v2286
      %v2299 = vpack.c.b16 %v2293, %v2291
      %v2300 = vpack.c.b16 %v2294, %v2292
      %v2301 = vpack.c.b16 %v2297, %v2295
      %v2302 = vpack.c.b16 %v2298, %v2296
      %vm2305 = vcmask 523264
      %v2307 = vsel %vm2305, %v2300, 0
      %v2310 = vsel %vm2305, %v2302, 0
      %2312 = vmatprep.subr.bf16.mxu0 %v1857
      %2313 = vmatpush1.bf16.msra.mxu0 %v1856
      %2314 = vmatprep.subr.bf16.mxu0 %v1859
      %2315 = vmatpush1.bf16.msra.mxu0 %v1858
      %2316 = vmatprep.subr.bf16.mxu0 %v1831
      %2317 = vmatpush1.bf16.msra.mxu0 %v1830
      %2318 = vmatprep.subr.bf16.mxu0 %v1833
      %2319 = vmatpush1.bf16.msra.mxu0 %v1832
      %2320 = vmatprep.subr.bf16.mxu0 %v1879
      %2321 = vmatpush1.bf16.msra.mxu0 %v1878
      %2322 = vmatprep.subr.bf16.mxu0 %v1881
      %2323 = vmatpush1.bf16.msra.mxu0 %v1880
      %2324 = vmatprep.subr.bf16.mxu0 %v2258
      %2325 = vmatpush1.bf16.msra.mxu0 %v2257
      %2326 = vmatprep.subr.bf16.mxu0 %v2260
      %2327 = vmatpush1.bf16.msra.mxu0 %v2259
      %2328 = vmatprep.subr.bf16.mxu0 %v2232
      %2329 = vmatpush1.bf16.msra.mxu0 %v2231
      %2330 = vmatprep.subr.bf16.mxu0 %v2234
      %2331 = vmatpush1.bf16.msra.mxu0 %v2233
      %2332 = vmatprep.subr.bf16.mxu0 %v2280
      %2333 = vmatpush1.bf16.msra.mxu0 %v2279
      %2334 = vmatprep.subr.bf16.mxu0 %v2282
      %2335 = vmatpush1.bf16.msra.mxu0 %v2281
      %2336 = vmatprep.subr.bf16.mxu0 0
      %2337 = vmatpush1.bf16.msra.mxu0 0
      %2338 = vmatprep.subr.bf16.mxu0 0
      %2339 = vmatpush1.bf16.msra.mxu0 0
      %2340 = vmatprep.subr.bf16.mxu0 0
      %2341 = vmatpush1.bf16.msra.mxu0 0
      %2342 = vmatprep.subr.bf16.mxu0 0
      %2343 = vmatpush1.bf16.msra.mxu0 0
      %2344 = vmatprep.mubr.bf16.mxu0 %v2307
      %2345 = vmatmul.mubr.bf16.gmra.mrb[0].mxu0 %v2299
      %v2346 = vpop.f32.mrb[0].mxu0
      %v2347 = vadd.f32 0.0, %v2346
      %v2348 = vpop.f32.mrb[0].mxu0
      %v2349 = vadd.f32 0.0, %v2348
      %v2350 = vpop.f32.mrb[0].mxu0
      %v2351 = vadd.f32 0.0, %v2350
      %v2352 = vpop.f32.mrb[0].mxu0
      %v2353 = vadd.f32 0.0, %v2352
      %2354 = vmatprep.mubr.bf16.mxu0 %v2310
      %2355 = vmatmul.mubr.bf16.gmra.mrb[0].mxu0 %v2301
      %v2356 = vpop.f32.mrb[0].mxu0
      %v2357 = vadd.f32 0.0, %v2356
      %v2358 = vpop.f32.mrb[0].mxu0
      %v2359 = vadd.f32 0.0, %v2358
      %v2360 = vpop.f32.mrb[0].mxu0
      %v2361 = vadd.f32 0.0, %v2360
      %v2362 = vpop.f32.mrb[0].mxu0
      %v2363 = vadd.f32 0.0, %v2362
      %2364 = vdwg.mxu0
      %s2365 = scalar_lea.vmem %s9, 32
      %v2366 = vld [vmem:[%s2365] sm:$0xff]
      %v2367 = vld [vmem:[%s2365 + $0x8] sm:$0xff]
      %v2368 = vld [vmem:[%s2365 + $0x10] sm:$0xff]
      %v2369 = vld [vmem:[%s2365 + $0x18] sm:$0xff]
      %s2370 = scalar_lea.vmem %s9, 64
      %v2371 = vld [vmem:[%s2370] sm:$0xff]
      %v2372 = vld [vmem:[%s2370 + $0x8] sm:$0xff]
      %v2373 = vld [vmem:[%s2370 + $0x10] sm:$0xff]
      %v2374 = vld [vmem:[%s2370 + $0x18] sm:$0xff]
      %v2379 = vunpack.c.l.b16 %v2371
      %v2380 = vunpack.c.h.b16 %v2371
      %v2381 = vunpack.c.l.b16 %v2372
      %v2382 = vunpack.c.h.b16 %v2372
      %v2383 = vunpack.c.l.b16 %v2373
      %v2384 = vunpack.c.h.b16 %v2373
      %v2385 = vunpack.c.l.b16 %v2374
      %v2386 = vunpack.c.h.b16 %v2374
      %v2387 = vpack.c.b16 %v2381, %v2379
      %v2388 = vpack.c.b16 %v2382, %v2380
      %v2389 = vpack.c.b16 %v2385, %v2383
      %v2390 = vpack.c.b16 %v2386, %v2384
      %v2394 = vsel %vm2305, %v2388, 0
      %v2397 = vsel %vm2305, %v2390, 0
      %2399 = vmatprep.subr.bf16.mxu0 %v1857
      %2400 = vmatpush1.bf16.msra.mxu0 %v1856
      %2401 = vmatprep.subr.bf16.mxu0 %v1859
      %2402 = vmatpush1.bf16.msra.mxu0 %v1858
      %2403 = vmatprep.subr.bf16.mxu0 %v1831
      %2404 = vmatpush1.bf16.msra.mxu0 %v1830
      %2405 = vmatprep.subr.bf16.mxu0 %v1833
      %2406 = vmatpush1.bf16.msra.mxu0 %v1832
      %2407 = vmatprep.subr.bf16.mxu0 %v1879
      %2408 = vmatpush1.bf16.msra.mxu0 %v1878
      %2409 = vmatprep.subr.bf16.mxu0 %v1881
      %2410 = vmatpush1.bf16.msra.mxu0 %v1880
      %2411 = vmatprep.subr.bf16.mxu0 %v2258
      %2412 = vmatpush1.bf16.msra.mxu0 %v2257
      %2413 = vmatprep.subr.bf16.mxu0 %v2260
      %2414 = vmatpush1.bf16.msra.mxu0 %v2259
      %2415 = vmatprep.subr.bf16.mxu0 %v2232
      %2416 = vmatpush1.bf16.msra.mxu0 %v2231
      %2417 = vmatprep.subr.bf16.mxu0 %v2234
      %2418 = vmatpush1.bf16.msra.mxu0 %v2233
      %2419 = vmatprep.subr.bf16.mxu0 %v2280
      %2420 = vmatpush1.bf16.msra.mxu0 %v2279
      %2421 = vmatprep.subr.bf16.mxu0 %v2282
      %2422 = vmatpush1.bf16.msra.mxu0 %v2281
      %2423 = vmatprep.subr.bf16.mxu0 0
      %2424 = vmatpush1.bf16.msra.mxu0 0
      %2425 = vmatprep.subr.bf16.mxu0 0
      %2426 = vmatpush1.bf16.msra.mxu0 0
      %2427 = vmatprep.subr.bf16.mxu0 0
      %2428 = vmatpush1.bf16.msra.mxu0 0
      %2429 = vmatprep.subr.bf16.mxu0 0
      %2430 = vmatpush1.bf16.msra.mxu0 0
      %2431 = vmatprep.mubr.bf16.mxu0 %v2394
      %2432 = vmatmul.mubr.bf16.gmra.mrb[0].mxu0 %v2387
      %v2433 = vpop.f32.mrb[0].mxu0
      %v2434 = vadd.f32 0.0, %v2433
      %v2435 = vpop.f32.mrb[0].mxu0
      %v2436 = vadd.f32 0.0, %v2435
      %v2437 = vpop.f32.mrb[0].mxu0
      %v2438 = vadd.f32 0.0, %v2437
      %v2439 = vpop.f32.mrb[0].mxu0
      %v2440 = vadd.f32 0.0, %v2439
      %2441 = vmatprep.mubr.bf16.mxu0 %v2397
      %2442 = vmatmul.mubr.bf16.gmra.mrb[0].mxu0 %v2389
      %v2443 = vpop.f32.mrb[0].mxu0
      %v2444 = vadd.f32 0.0, %v2443
      %v2445 = vpop.f32.mrb[0].mxu0
      %v2446 = vadd.f32 0.0, %v2445
      %v2447 = vpop.f32.mrb[0].mxu0
      %v2448 = vadd.f32 0.0, %v2447
      %v2449 = vpop.f32.mrb[0].mxu0
      %v2450 = vadd.f32 0.0, %v2449
      %2451 = vdwg.mxu0
      %2460 = vrot.lane.b32.xlu0 %v2347, 16
      %v2461 = vpop.permute.xlu0 %2460
      %2462 = vrot.lane.b32.xlu0 %v2349, 16
      %v2463 = vpop.permute.xlu0 %2462
      %2464 = vrot.lane.b32.xlu0 %v2351, 16
      %v2465 = vpop.permute.xlu0 %2464
      %2466 = vrot.lane.b32.xlu0 %v2353, 16
      %v2467 = vpop.permute.xlu0 %2466
      %2468 = vrot.lane.b32.xlu0 %v2357, 16
      %v2469 = vpop.permute.xlu0 %2468
      %2470 = vrot.lane.b32.xlu0 %v2359, 16
      %v2471 = vpop.permute.xlu0 %2470
      %2472 = vrot.lane.b32.xlu0 %v2361, 16
      %v2473 = vpop.permute.xlu0 %2472
      %2474 = vrot.lane.b32.xlu0 %v2363, 16
      %v2475 = vpop.permute.xlu0 %2474
      %v2476 = vsel %vm852, %v2461, %v2463
      %v2477 = vsel %vm852, %v2465, %v2467
      %v2478 = vsel %vm852, %v2469, %v2471
      %v2479 = vsel %vm852, %v2473, %v2475
      %v2488 = vsel %vm852, 0.0, %v2461
      %v2489 = vsel %vm852, 0.0, %v2465
      %v2490 = vsel %vm852, 0.0, %v2469
      %v2491 = vsel %vm852, 0.0, %v2473
      %v2496 = vunpack.c.l.b16 %v2366
      %v2497 = vunpack.c.h.b16 %v2366
      %v2498 = vunpack.c.l.b16 %v2367
      %v2499 = vunpack.c.h.b16 %v2367
      %v2500 = vunpack.c.l.b16 %v2368
      %v2501 = vunpack.c.h.b16 %v2368
      %v2502 = vunpack.c.l.b16 %v2369
      %v2503 = vunpack.c.h.b16 %v2369
      %v2504 = vpack.c.b16 %v2498, %v2496
      %v2505 = vpack.c.b16 %v2499, %v2497
      %v2506 = vpack.c.b16 %v2502, %v2500
      %v2507 = vpack.c.b16 %v2503, %v2501
      %v2511 = vsel %vm2305, %v2505, 0
      %v2514 = vsel %vm2305, %v2507, 0
      %2516 = vmatprep.subr.bf16.mxu0 %v1857
      %2517 = vmatpush1.bf16.msra.mxu0 %v1856
      %2518 = vmatprep.subr.bf16.mxu0 %v1859
      %2519 = vmatpush1.bf16.msra.mxu0 %v1858
      %2520 = vmatprep.subr.bf16.mxu0 %v1831
      %2521 = vmatpush1.bf16.msra.mxu0 %v1830
      %2522 = vmatprep.subr.bf16.mxu0 %v1833
      %2523 = vmatpush1.bf16.msra.mxu0 %v1832
      %2524 = vmatprep.subr.bf16.mxu0 %v1879
      %2525 = vmatpush1.bf16.msra.mxu0 %v1878
      %2526 = vmatprep.subr.bf16.mxu0 %v1881
      %2527 = vmatpush1.bf16.msra.mxu0 %v1880
      %2528 = vmatprep.subr.bf16.mxu0 %v2258
      %2529 = vmatpush1.bf16.msra.mxu0 %v2257
      %2530 = vmatprep.subr.bf16.mxu0 %v2260
      %2531 = vmatpush1.bf16.msra.mxu0 %v2259
      %2532 = vmatprep.subr.bf16.mxu0 %v2232
      %2533 = vmatpush1.bf16.msra.mxu0 %v2231
      %2534 = vmatprep.subr.bf16.mxu0 %v2234
      %2535 = vmatpush1.bf16.msra.mxu0 %v2233
      %2536 = vmatprep.subr.bf16.mxu0 %v2280
      %2537 = vmatpush1.bf16.msra.mxu0 %v2279
      %2538 = vmatprep.subr.bf16.mxu0 %v2282
      %2539 = vmatpush1.bf16.msra.mxu0 %v2281
      %2540 = vmatprep.subr.bf16.mxu0 0
      %2541 = vmatpush1.bf16.msra.mxu0 0
      %2542 = vmatprep.subr.bf16.mxu0 0
      %2543 = vmatpush1.bf16.msra.mxu0 0
      %2544 = vmatprep.subr.bf16.mxu0 0
      %2545 = vmatpush1.bf16.msra.mxu0 0
      %2546 = vmatprep.subr.bf16.mxu0 0
      %2547 = vmatpush1.bf16.msra.mxu0 0
      %2548 = vmatprep.mubr.bf16.mxu0 %v2511
      %2549 = vmatmul.mubr.bf16.gmra.mrb[0].mxu0 %v2504
      %v2550 = vpop.f32.mrb[0].mxu0
      %v2551 = vadd.f32 %v2488, %v2550
      %v2552 = vpop.f32.mrb[0].mxu0
      %v2553 = vadd.f32 %v2476, %v2552
      %v2554 = vpop.f32.mrb[0].mxu0
      %v2555 = vadd.f32 %v2489, %v2554
      %v2556 = vpop.f32.mrb[0].mxu0
      %v2557 = vadd.f32 %v2477, %v2556
      %2558 = vmatprep.mubr.bf16.mxu0 %v2514
      %2559 = vmatmul.mubr.bf16.gmra.mrb[0].mxu0 %v2506
      %v2560 = vpop.f32.mrb[0].mxu0
      %v2561 = vadd.f32 %v2490, %v2560
      %v2562 = vpop.f32.mrb[0].mxu0
      %v2563 = vadd.f32 %v2478, %v2562
      %v2564 = vpop.f32.mrb[0].mxu0
      %v2565 = vadd.f32 %v2491, %v2564
      %v2566 = vpop.f32.mrb[0].mxu0
      %v2567 = vadd.f32 %v2479, %v2566
      %2568 = vdwg.mxu0
      %2577 = vrot.lane.b32.xlu0 %v2434, 112
      %v2578 = vpop.permute.xlu0 %2577
      %2579 = vrot.lane.b32.xlu0 %v2436, 112
      %v2580 = vpop.permute.xlu0 %2579
      %2581 = vrot.lane.b32.xlu0 %v2438, 112
      %v2582 = vpop.permute.xlu0 %2581
      %2583 = vrot.lane.b32.xlu0 %v2440, 112
      %v2584 = vpop.permute.xlu0 %2583
      %2585 = vrot.lane.b32.xlu0 %v2444, 112
      %v2586 = vpop.permute.xlu0 %2585
      %2587 = vrot.lane.b32.xlu0 %v2446, 112
      %v2588 = vpop.permute.xlu0 %2587
      %2589 = vrot.lane.b32.xlu0 %v2448, 112
      %v2590 = vpop.permute.xlu0 %2589
      %2591 = vrot.lane.b32.xlu0 %v2450, 112
      %v2592 = vpop.permute.xlu0 %2591
      %v2593 = vsel %vm962, %v2578, %v2580
      %v2594 = vsel %vm962, %v2582, %v2584
      %v2595 = vsel %vm962, %v2586, %v2588
      %v2596 = vsel %vm962, %v2590, %v2592
      %v2605 = vsel %vm962, %v2580, 0.0
      %v2606 = vsel %vm962, %v2584, 0.0
      %v2607 = vsel %vm962, %v2588, 0.0
      %v2608 = vsel %vm962, %v2592, 0.0
      %v2609 = vadd.f32 %v2551, %v2593
      %v2610 = vadd.f32 %v2553, %v2605
      %v2611 = vadd.f32 %v2555, %v2594
      %v2612 = vadd.f32 %v2557, %v2606
      %v2613 = vadd.f32 %v2561, %v2595
      %v2614 = vadd.f32 %v2563, %v2607
      %v2615 = vadd.f32 %v2565, %v2596
      %v2616 = vadd.f32 %v2567, %v2608
      %v2617 = vld [vmem:[%s10] sm:$0xff]
      %v2618 = vld [vmem:[%s10 + $0x8] sm:$0xff]
      %v2619 = vld [vmem:[%s10 + $0x10] sm:$0xff]
      %v2620 = vld [vmem:[%s10 + $0x18] sm:$0xff]
      %2622 = vset.pattern.permute.xlu0 0
      %2623 = vperm.xlu0 %2622, %v2617
      %v2624 = vpop.permute.xlu0 %2623
      %2627 = vset.pattern.permute.xlu0 0
      %2628 = vperm.xlu0 %2627, %v2618
      %v2629 = vpop.permute.xlu0 %2628
      %2632 = vset.pattern.permute.xlu0 0
      %2633 = vperm.xlu0 %2632, %v2619
      %v2634 = vpop.permute.xlu0 %2633
      %2637 = vset.pattern.permute.xlu0 0
      %2638 = vperm.xlu0 %2637, %v2620
      %v2639 = vpop.permute.xlu0 %2638
      %v2641 = vadd.f32 %v2609, %v2624
      %v2642 = vadd.f32 %v2610, %v2624
      %v2643 = vadd.f32 %v2611, %v2629
      %v2644 = vadd.f32 %v2612, %v2629
      %v2645 = vadd.f32 %v2613, %v2634
      %v2646 = vadd.f32 %v2614, %v2634
      %v2647 = vadd.f32 %v2615, %v2639
      %v2648 = vadd.f32 %v2616, %v2639
      %v2649 = vmax.f32 %v2641, 0.0
      %v2650 = vmax.f32 %v2642, 0.0
      %v2651 = vmax.f32 %v2643, 0.0
      %v2652 = vmax.f32 %v2644, 0.0
      %v2653 = vmax.f32 %v2645, 0.0
      %v2654 = vmax.f32 %v2646, 0.0
      %v2655 = vmax.f32 %v2647, 0.0
      %v2656 = vmax.f32 %v2648, 0.0
      %v2657 = vpack.c.bf16 %v2651, %v2649
      %v2658 = vpack.c.bf16 %v2652, %v2650
      %v2659 = vpack.c.bf16 %v2655, %v2653
      %v2660 = vpack.c.bf16 %v2656, %v2654
      %2665 = vrot.lane.b32.xlu0 %v2657, 1
      %v2666 = vpop.permute.xlu0 %2665
      %2667 = vrot.lane.b32.xlu0 %v2658, 1
      %v2668 = vpop.permute.xlu0 %2667
      %2669 = vrot.lane.b32.xlu0 %v2659, 1
      %v2670 = vpop.permute.xlu0 %2669
      %2671 = vrot.lane.b32.xlu0 %v2660, 1
      %v2672 = vpop.permute.xlu0 %2671
      %v2673 = vsel %vm578, %v2666, %v2668
      %v2674 = vsel %vm578, %v2670, %v2672
      %v2678 = vsel %vm581, 0, %v2666
      %v2681 = vsel %vm581, 0, %v2670
      %v2683 = vsel %vm600, 0, %v2678
      %v2684 = vsel %vm601, 0, %v2673
      %v2685 = vsel %vm600, 0, %v2681
      %v2686 = vsel %vm601, 0, %v2674
      %2687 = vrot.lane.b32.xlu0 %v2657, 127
      %v2688 = vpop.permute.xlu0 %2687
      %2689 = vrot.lane.b32.xlu0 %v2658, 127
      %v2690 = vpop.permute.xlu0 %2689
      %2691 = vrot.lane.b32.xlu0 %v2659, 127
      %v2692 = vpop.permute.xlu0 %2691
      %2693 = vrot.lane.b32.xlu0 %v2660, 127
      %v2694 = vpop.permute.xlu0 %2693
      %v2695 = vsel %vm608, %v2688, %v2690
      %v2696 = vsel %vm608, %v2692, %v2694
      %v2700 = vsel %vm611, %v2690, 0
      %v2703 = vsel %vm611, %v2694, 0
      %v2705 = vsel %vm629, 0, %v2695
      %v2706 = vsel %vm630, 0, %v2700
      %v2707 = vsel %vm629, 0, %v2696
      %v2708 = vsel %vm630, 0, %v2703
      %v2709 = vld [vmem:[%s11] sm:$0xff]
      %v2710 = vld [vmem:[%s11 + $0x8] sm:$0xff]
      %v2711 = vld [vmem:[%s11 + $0x10] sm:$0xff]
      %v2712 = vld [vmem:[%s11 + $0x18] sm:$0xff]
      %v2717 = vunpack.c.l.b16 %v2709
      %v2718 = vunpack.c.h.b16 %v2709
      %v2719 = vunpack.c.l.b16 %v2710
      %v2720 = vunpack.c.h.b16 %v2710
      %v2721 = vunpack.c.l.b16 %v2711
      %v2722 = vunpack.c.h.b16 %v2711
      %v2723 = vunpack.c.l.b16 %v2712
      %v2724 = vunpack.c.h.b16 %v2712
      %v2725 = vpack.c.b16 %v2719, %v2717
      %v2726 = vpack.c.b16 %v2720, %v2718
      %v2727 = vpack.c.b16 %v2723, %v2721
      %v2728 = vpack.c.b16 %v2724, %v2722
      %v2732 = vsel %vm2305, %v2726, 0
      %v2735 = vsel %vm2305, %v2728, 0
      %2737 = vmatprep.subr.bf16.mxu0 %v1456
      %2738 = vmatpush1.bf16.msra.mxu0 %v1455
      %2739 = vmatprep.subr.bf16.mxu0 %v1458
      %2740 = vmatpush1.bf16.msra.mxu0 %v1457
      %2741 = vmatprep.subr.bf16.mxu0 %v1430
      %2742 = vmatpush1.bf16.msra.mxu0 %v1429
      %2743 = vmatprep.subr.bf16.mxu0 %v1432
      %2744 = vmatpush1.bf16.msra.mxu0 %v1431
      %2745 = vmatprep.subr.bf16.mxu0 %v1478
      %2746 = vmatpush1.bf16.msra.mxu0 %v1477
      %2747 = vmatprep.subr.bf16.mxu0 %v1480
      %2748 = vmatpush1.bf16.msra.mxu0 %v1479
      %2749 = vmatprep.subr.bf16.mxu0 %v2684
      %2750 = vmatpush1.bf16.msra.mxu0 %v2683
      %2751 = vmatprep.subr.bf16.mxu0 %v2686
      %2752 = vmatpush1.bf16.msra.mxu0 %v2685
      %2753 = vmatprep.subr.bf16.mxu0 %v2658
      %2754 = vmatpush1.bf16.msra.mxu0 %v2657
      %2755 = vmatprep.subr.bf16.mxu0 %v2660
      %2756 = vmatpush1.bf16.msra.mxu0 %v2659
      %2757 = vmatprep.subr.bf16.mxu0 %v2706
      %2758 = vmatpush1.bf16.msra.mxu0 %v2705
      %2759 = vmatprep.subr.bf16.mxu0 %v2708
      %2760 = vmatpush1.bf16.msra.mxu0 %v2707
      %2761 = vmatprep.subr.bf16.mxu0 0
      %2762 = vmatpush1.bf16.msra.mxu0 0
      %2763 = vmatprep.subr.bf16.mxu0 0
      %2764 = vmatpush1.bf16.msra.mxu0 0
      %2765 = vmatprep.subr.bf16.mxu0 0
      %2766 = vmatpush1.bf16.msra.mxu0 0
      %2767 = vmatprep.subr.bf16.mxu0 0
      %2768 = vmatpush1.bf16.msra.mxu0 0
      %2769 = vmatprep.mubr.bf16.mxu0 %v2732
      %2770 = vmatmul.mubr.bf16.gmra.mrb[0].mxu0 %v2725
      %v2771 = vpop.f32.mrb[0].mxu0
      %v2772 = vadd.f32 0.0, %v2771
      %v2773 = vpop.f32.mrb[0].mxu0
      %v2774 = vadd.f32 0.0, %v2773
      %v2775 = vpop.f32.mrb[0].mxu0
      %v2776 = vadd.f32 0.0, %v2775
      %v2777 = vpop.f32.mrb[0].mxu0
      %v2778 = vadd.f32 0.0, %v2777
      %2779 = vmatprep.mubr.bf16.mxu0 %v2735
      %2780 = vmatmul.mubr.bf16.gmra.mrb[0].mxu0 %v2727
      %v2781 = vpop.f32.mrb[0].mxu0
      %v2782 = vadd.f32 0.0, %v2781
      %v2783 = vpop.f32.mrb[0].mxu0
      %v2784 = vadd.f32 0.0, %v2783
      %v2785 = vpop.f32.mrb[0].mxu0
      %v2786 = vadd.f32 0.0, %v2785
      %v2787 = vpop.f32.mrb[0].mxu0
      %v2788 = vadd.f32 0.0, %v2787
      %2789 = vdwg.mxu0
      %s2790 = scalar_lea.vmem %s11, 32
      %v2791 = vld [vmem:[%s2790] sm:$0xff]
      %v2792 = vld [vmem:[%s2790 + $0x8] sm:$0xff]
      %v2793 = vld [vmem:[%s2790 + $0x10] sm:$0xff]
      %v2794 = vld [vmem:[%s2790 + $0x18] sm:$0xff]
      %s2795 = scalar_lea.vmem %s11, 64
      %v2796 = vld [vmem:[%s2795] sm:$0xff]
      %v2797 = vld [vmem:[%s2795 + $0x8] sm:$0xff]
      %v2798 = vld [vmem:[%s2795 + $0x10] sm:$0xff]
      %v2799 = vld [vmem:[%s2795 + $0x18] sm:$0xff]
      %v2804 = vunpack.c.l.b16 %v2796
      %v2805 = vunpack.c.h.b16 %v2796
      %v2806 = vunpack.c.l.b16 %v2797
      %v2807 = vunpack.c.h.b16 %v2797
      %v2808 = vunpack.c.l.b16 %v2798
      %v2809 = vunpack.c.h.b16 %v2798
      %v2810 = vunpack.c.l.b16 %v2799
      %v2811 = vunpack.c.h.b16 %v2799
      %v2812 = vpack.c.b16 %v2806, %v2804
      %v2813 = vpack.c.b16 %v2807, %v2805
      %v2814 = vpack.c.b16 %v2810, %v2808
      %v2815 = vpack.c.b16 %v2811, %v2809
      %v2819 = vsel %vm2305, %v2813, 0
      %v2822 = vsel %vm2305, %v2815, 0
      %2824 = vmatprep.subr.bf16.mxu0 %v1456
      %2825 = vmatpush1.bf16.msra.mxu0 %v1455
      %2826 = vmatprep.subr.bf16.mxu0 %v1458
      %2827 = vmatpush1.bf16.msra.mxu0 %v1457
      %2828 = vmatprep.subr.bf16.mxu0 %v1430
      %2829 = vmatpush1.bf16.msra.mxu0 %v1429
      %2830 = vmatprep.subr.bf16.mxu0 %v1432
      %2831 = vmatpush1.bf16.msra.mxu0 %v1431
      %2832 = vmatprep.subr.bf16.mxu0 %v1478
      %2833 = vmatpush1.bf16.msra.mxu0 %v1477
      %2834 = vmatprep.subr.bf16.mxu0 %v1480
      %2835 = vmatpush1.bf16.msra.mxu0 %v1479
      %2836 = vmatprep.subr.bf16.mxu0 %v2684
      %2837 = vmatpush1.bf16.msra.mxu0 %v2683
      %2838 = vmatprep.subr.bf16.mxu0 %v2686
      %2839 = vmatpush1.bf16.msra.mxu0 %v2685
      %2840 = vmatprep.subr.bf16.mxu0 %v2658
      %2841 = vmatpush1.bf16.msra.mxu0 %v2657
      %2842 = vmatprep.subr.bf16.mxu0 %v2660
      %2843 = vmatpush1.bf16.msra.mxu0 %v2659
      %2844 = vmatprep.subr.bf16.mxu0 %v2706
      %2845 = vmatpush1.bf16.msra.mxu0 %v2705
      %2846 = vmatprep.subr.bf16.mxu0 %v2708
      %2847 = vmatpush1.bf16.msra.mxu0 %v2707
      %2848 = vmatprep.subr.bf16.mxu0 0
      %2849 = vmatpush1.bf16.msra.mxu0 0
      %2850 = vmatprep.subr.bf16.mxu0 0
      %2851 = vmatpush1.bf16.msra.mxu0 0
      %2852 = vmatprep.subr.bf16.mxu0 0
      %2853 = vmatpush1.bf16.msra.mxu0 0
      %2854 = vmatprep.subr.bf16.mxu0 0
      %2855 = vmatpush1.bf16.msra.mxu0 0
      %2856 = vmatprep.mubr.bf16.mxu0 %v2819
      %2857 = vmatmul.mubr.bf16.gmra.mrb[0].mxu0 %v2812
      %v2858 = vpop.f32.mrb[0].mxu0
      %v2859 = vadd.f32 0.0, %v2858
      %v2860 = vpop.f32.mrb[0].mxu0
      %v2861 = vadd.f32 0.0, %v2860
      %v2862 = vpop.f32.mrb[0].mxu0
      %v2863 = vadd.f32 0.0, %v2862
      %v2864 = vpop.f32.mrb[0].mxu0
      %v2865 = vadd.f32 0.0, %v2864
      %2866 = vmatprep.mubr.bf16.mxu0 %v2822
      %2867 = vmatmul.mubr.bf16.gmra.mrb[0].mxu0 %v2814
      %v2868 = vpop.f32.mrb[0].mxu0
      %v2869 = vadd.f32 0.0, %v2868
      %v2870 = vpop.f32.mrb[0].mxu0
      %v2871 = vadd.f32 0.0, %v2870
      %v2872 = vpop.f32.mrb[0].mxu0
      %v2873 = vadd.f32 0.0, %v2872
      %v2874 = vpop.f32.mrb[0].mxu0
      %v2875 = vadd.f32 0.0, %v2874
      %2876 = vdwg.mxu0
      %2885 = vrot.lane.b32.xlu0 %v2772, 16
      %v2886 = vpop.permute.xlu0 %2885
      %2887 = vrot.lane.b32.xlu0 %v2774, 16
      %v2888 = vpop.permute.xlu0 %2887
      %2889 = vrot.lane.b32.xlu0 %v2776, 16
      %v2890 = vpop.permute.xlu0 %2889
      %2891 = vrot.lane.b32.xlu0 %v2778, 16
      %v2892 = vpop.permute.xlu0 %2891
      %2893 = vrot.lane.b32.xlu0 %v2782, 16
      %v2894 = vpop.permute.xlu0 %2893
      %2895 = vrot.lane.b32.xlu0 %v2784, 16
      %v2896 = vpop.permute.xlu0 %2895
      %2897 = vrot.lane.b32.xlu0 %v2786, 16
      %v2898 = vpop.permute.xlu0 %2897
      %2899 = vrot.lane.b32.xlu0 %v2788, 16
      %v2900 = vpop.permute.xlu0 %2899
      %v2901 = vsel %vm852, %v2886, %v2888
      %v2902 = vsel %vm852, %v2890, %v2892
      %v2903 = vsel %vm852, %v2894, %v2896
      %v2904 = vsel %vm852, %v2898, %v2900
      %v2913 = vsel %vm852, 0.0, %v2886
      %v2914 = vsel %vm852, 0.0, %v2890
      %v2915 = vsel %vm852, 0.0, %v2894
      %v2916 = vsel %vm852, 0.0, %v2898
      %v2921 = vunpack.c.l.b16 %v2791
      %v2922 = vunpack.c.h.b16 %v2791
      %v2923 = vunpack.c.l.b16 %v2792
      %v2924 = vunpack.c.h.b16 %v2792
      %v2925 = vunpack.c.l.b16 %v2793
      %v2926 = vunpack.c.h.b16 %v2793
      %v2927 = vunpack.c.l.b16 %v2794
      %v2928 = vunpack.c.h.b16 %v2794
      %v2929 = vpack.c.b16 %v2923, %v2921
      %v2930 = vpack.c.b16 %v2924, %v2922
      %v2931 = vpack.c.b16 %v2927, %v2925
      %v2932 = vpack.c.b16 %v2928, %v2926
      %v2936 = vsel %vm2305, %v2930, 0
      %v2939 = vsel %vm2305, %v2932, 0
      %2941 = vmatprep.subr.bf16.mxu0 %v1456
      %2942 = vmatpush1.bf16.msra.mxu0 %v1455
      %2943 = vmatprep.subr.bf16.mxu0 %v1458
      %2944 = vmatpush1.bf16.msra.mxu0 %v1457
      %2945 = vmatprep.subr.bf16.mxu0 %v1430
      %2946 = vmatpush1.bf16.msra.mxu0 %v1429
      %2947 = vmatprep.subr.bf16.mxu0 %v1432
      %2948 = vmatpush1.bf16.msra.mxu0 %v1431
      %2949 = vmatprep.subr.bf16.mxu0 %v1478
      %2950 = vmatpush1.bf16.msra.mxu0 %v1477
      %2951 = vmatprep.subr.bf16.mxu0 %v1480
      %2952 = vmatpush1.bf16.msra.mxu0 %v1479
      %2953 = vmatprep.subr.bf16.mxu0 %v2684
      %2954 = vmatpush1.bf16.msra.mxu0 %v2683
      %2955 = vmatprep.subr.bf16.mxu0 %v2686
      %2956 = vmatpush1.bf16.msra.mxu0 %v2685
      %2957 = vmatprep.subr.bf16.mxu0 %v2658
      %2958 = vmatpush1.bf16.msra.mxu0 %v2657
      %2959 = vmatprep.subr.bf16.mxu0 %v2660
      %2960 = vmatpush1.bf16.msra.mxu0 %v2659
      %2961 = vmatprep.subr.bf16.mxu0 %v2706
      %2962 = vmatpush1.bf16.msra.mxu0 %v2705
      %2963 = vmatprep.subr.bf16.mxu0 %v2708
      %2964 = vmatpush1.bf16.msra.mxu0 %v2707
      %2965 = vmatprep.subr.bf16.mxu0 0
      %2966 = vmatpush1.bf16.msra.mxu0 0
      %2967 = vmatprep.subr.bf16.mxu0 0
      %2968 = vmatpush1.bf16.msra.mxu0 0
      %2969 = vmatprep.subr.bf16.mxu0 0
      %2970 = vmatpush1.bf16.msra.mxu0 0
      %2971 = vmatprep.subr.bf16.mxu0 0
      %2972 = vmatpush1.bf16.msra.mxu0 0
      %2973 = vmatprep.mubr.bf16.mxu0 %v2936
      %2974 = vmatmul.mubr.bf16.gmra.mrb[0].mxu0 %v2929
      %v2975 = vpop.f32.mrb[0].mxu0
      %v2976 = vadd.f32 %v2913, %v2975
      %v2977 = vpop.f32.mrb[0].mxu0
      %v2978 = vadd.f32 %v2901, %v2977
      %v2979 = vpop.f32.mrb[0].mxu0
      %v2980 = vadd.f32 %v2914, %v2979
      %v2981 = vpop.f32.mrb[0].mxu0
      %v2982 = vadd.f32 %v2902, %v2981
      %2983 = vmatprep.mubr.bf16.mxu0 %v2939
      %2984 = vmatmul.mubr.bf16.gmra.mrb[0].mxu0 %v2931
      %v2985 = vpop.f32.mrb[0].mxu0
      %v2986 = vadd.f32 %v2915, %v2985
      %v2987 = vpop.f32.mrb[0].mxu0
      %v2988 = vadd.f32 %v2903, %v2987
      %v2989 = vpop.f32.mrb[0].mxu0
      %v2990 = vadd.f32 %v2916, %v2989
      %v2991 = vpop.f32.mrb[0].mxu0
      %v2992 = vadd.f32 %v2904, %v2991
      %2993 = vdwg.mxu0
      %3002 = vrot.lane.b32.xlu0 %v2859, 112
      %v3003 = vpop.permute.xlu0 %3002
      %3004 = vrot.lane.b32.xlu0 %v2861, 112
      %v3005 = vpop.permute.xlu0 %3004
      %3006 = vrot.lane.b32.xlu0 %v2863, 112
      %v3007 = vpop.permute.xlu0 %3006
      %3008 = vrot.lane.b32.xlu0 %v2865, 112
      %v3009 = vpop.permute.xlu0 %3008
      %3010 = vrot.lane.b32.xlu0 %v2869, 112
      %v3011 = vpop.permute.xlu0 %3010
      %3012 = vrot.lane.b32.xlu0 %v2871, 112
      %v3013 = vpop.permute.xlu0 %3012
      %3014 = vrot.lane.b32.xlu0 %v2873, 112
      %v3015 = vpop.permute.xlu0 %3014
      %3016 = vrot.lane.b32.xlu0 %v2875, 112
      %v3017 = vpop.permute.xlu0 %3016
      %v3018 = vsel %vm962, %v3003, %v3005
      %v3019 = vsel %vm962, %v3007, %v3009
      %v3020 = vsel %vm962, %v3011, %v3013
      %v3021 = vsel %vm962, %v3015, %v3017
      %v3030 = vsel %vm962, %v3005, 0.0
      %v3031 = vsel %vm962, %v3009, 0.0
      %v3032 = vsel %vm962, %v3013, 0.0
      %v3033 = vsel %vm962, %v3017, 0.0
      %v3034 = vadd.f32 %v2976, %v3018
      %v3035 = vadd.f32 %v2978, %v3030
      %v3036 = vadd.f32 %v2980, %v3019
      %v3037 = vadd.f32 %v2982, %v3031
      %v3038 = vadd.f32 %v2986, %v3020
      %v3039 = vadd.f32 %v2988, %v3032
      %v3040 = vadd.f32 %v2990, %v3021
      %v3041 = vadd.f32 %v2992, %v3033
      %v3042 = vld [vmem:[%s12] sm:$0xff]
      %v3043 = vld [vmem:[%s12 + $0x8] sm:$0xff]
      %v3044 = vld [vmem:[%s12 + $0x10] sm:$0xff]
      %v3045 = vld [vmem:[%s12 + $0x18] sm:$0xff]
      %3047 = vset.pattern.permute.xlu0 0
      %3048 = vperm.xlu0 %3047, %v3042
      %v3049 = vpop.permute.xlu0 %3048
      %3052 = vset.pattern.permute.xlu0 0
      %3053 = vperm.xlu0 %3052, %v3043
      %v3054 = vpop.permute.xlu0 %3053
      %3057 = vset.pattern.permute.xlu0 0
      %3058 = vperm.xlu0 %3057, %v3044
      %v3059 = vpop.permute.xlu0 %3058
      %3062 = vset.pattern.permute.xlu0 0
      %3063 = vperm.xlu0 %3062, %v3045
      %v3064 = vpop.permute.xlu0 %3063
      %v3066 = vadd.f32 %v3034, %v3049
      %v3067 = vadd.f32 %v3035, %v3049
      %v3068 = vadd.f32 %v3036, %v3054
      %v3069 = vadd.f32 %v3037, %v3054
      %v3070 = vadd.f32 %v3038, %v3059
      %v3071 = vadd.f32 %v3039, %v3059
      %v3072 = vadd.f32 %v3040, %v3064
      %v3073 = vadd.f32 %v3041, %v3064
      %v3074 = vmax.f32 %v3066, 0.0
      %v3075 = vmax.f32 %v3067, 0.0
      %v3076 = vmax.f32 %v3068, 0.0
      %v3077 = vmax.f32 %v3069, 0.0
      %v3078 = vmax.f32 %v3070, 0.0
      %v3079 = vmax.f32 %v3071, 0.0
      %v3080 = vmax.f32 %v3072, 0.0
      %v3081 = vmax.f32 %v3073, 0.0
      %v3082 = vpack.c.bf16 %v3076, %v3074
      %v3083 = vpack.c.bf16 %v3077, %v3075
      %v3084 = vpack.c.bf16 %v3080, %v3078
      %v3085 = vpack.c.bf16 %v3081, %v3079
      %3090 = vrot.lane.b32.xlu0 %v3082, 1
      %v3091 = vpop.permute.xlu0 %3090
      %3092 = vrot.lane.b32.xlu0 %v3083, 1
      %v3093 = vpop.permute.xlu0 %3092
      %3094 = vrot.lane.b32.xlu0 %v3084, 1
      %v3095 = vpop.permute.xlu0 %3094
      %3096 = vrot.lane.b32.xlu0 %v3085, 1
      %v3097 = vpop.permute.xlu0 %3096
      %v3098 = vsel %vm578, %v3091, %v3093
      %v3099 = vsel %vm578, %v3095, %v3097
      %v3103 = vsel %vm581, 0, %v3091
      %v3106 = vsel %vm581, 0, %v3095
      %v3108 = vsel %vm600, 0, %v3103
      %v3109 = vsel %vm601, 0, %v3098
      %v3110 = vsel %vm600, 0, %v3106
      %v3111 = vsel %vm601, 0, %v3099
      %3112 = vrot.lane.b32.xlu0 %v3082, 127
      %v3113 = vpop.permute.xlu0 %3112
      %3114 = vrot.lane.b32.xlu0 %v3083, 127
      %v3115 = vpop.permute.xlu0 %3114
      %3116 = vrot.lane.b32.xlu0 %v3084, 127
      %v3117 = vpop.permute.xlu0 %3116
      %3118 = vrot.lane.b32.xlu0 %v3085, 127
      %v3119 = vpop.permute.xlu0 %3118
      %v3120 = vsel %vm608, %v3113, %v3115
      %v3121 = vsel %vm608, %v3117, %v3119
      %v3125 = vsel %vm611, %v3115, 0
      %v3128 = vsel %vm611, %v3119, 0
      %v3130 = vsel %vm629, 0, %v3120
      %v3131 = vsel %vm630, 0, %v3125
      %v3132 = vsel %vm629, 0, %v3121
      %v3133 = vsel %vm630, 0, %v3128
      %v3134 = vld [vmem:[%s13] sm:$0xff]
      %v3135 = vld [vmem:[%s13 + $0x8] sm:$0xff]
      %v3136 = vld [vmem:[%s13 + $0x10] sm:$0xff]
      %v3140 = vunpack.c.l.b16 %v3134
      %v3141 = vunpack.c.h.b16 %v3134
      %v3142 = vunpack.c.l.b16 %v3135
      %v3143 = vunpack.c.h.b16 %v3135
      %v3144 = vunpack.c.l.b16 %v3136
      %v3145 = vunpack.c.h.b16 %v3136
      %v3146 = vpack.c.b16 %v3142, %v3140
      %v3147 = vpack.c.b16 %v3143, %v3141
      %v3148 = vpack.c.b16 %v3144, %v3144
      %v3149 = vpack.c.b16 %v3145, %v3145
      %v3153 = vsel %vm2305, %v3147, 0
      %v3156 = vsel %vm2305, %v3149, 0
      %3158 = vmatprep.subr.bf16.mxu0 %v1054
      %3159 = vmatpush1.bf16.msra.mxu0 %v1053
      %3160 = vmatprep.subr.bf16.mxu0 %v1056
      %3161 = vmatpush1.bf16.msra.mxu0 %v1055
      %3162 = vmatprep.subr.bf16.mxu0 %v1028
      %3163 = vmatpush1.bf16.msra.mxu0 %v1027
      %3164 = vmatprep.subr.bf16.mxu0 %v1030
      %3165 = vmatpush1.bf16.msra.mxu0 %v1029
      %3166 = vmatprep.subr.bf16.mxu0 %v1076
      %3167 = vmatpush1.bf16.msra.mxu0 %v1075
      %3168 = vmatprep.subr.bf16.mxu0 %v1078
      %3169 = vmatpush1.bf16.msra.mxu0 %v1077
      %3170 = vmatprep.subr.bf16.mxu0 %v3109
      %3171 = vmatpush1.bf16.msra.mxu0 %v3108
      %3172 = vmatprep.subr.bf16.mxu0 %v3111
      %3173 = vmatpush1.bf16.msra.mxu0 %v3110
      %3174 = vmatprep.subr.bf16.mxu0 %v3083
      %3175 = vmatpush1.bf16.msra.mxu0 %v3082
      %3176 = vmatprep.subr.bf16.mxu0 %v3085
      %3177 = vmatpush1.bf16.msra.mxu0 %v3084
      %3178 = vmatprep.subr.bf16.mxu0 %v3131
      %3179 = vmatpush1.bf16.msra.mxu0 %v3130
      %3180 = vmatprep.subr.bf16.mxu0 %v3133
      %3181 = vmatpush1.bf16.msra.mxu0 %v3132
      %3182 = vmatprep.subr.bf16.mxu0 0
      %3183 = vmatpush1.bf16.msra.mxu0 0
      %3184 = vmatprep.subr.bf16.mxu0 0
      %3185 = vmatpush1.bf16.msra.mxu0 0
      %3186 = vmatprep.subr.bf16.mxu0 0
      %3187 = vmatpush1.bf16.msra.mxu0 0
      %3188 = vmatprep.subr.bf16.mxu0 0
      %3189 = vmatpush1.bf16.msra.mxu0 0
      %3190 = vmatprep.mubr.bf16.mxu0 %v3153
      %3191 = vmatmul.mubr.bf16.gmra.mrb[0].mxu0 %v3146
      %v3192 = vpop.f32.mrb[0].mxu0
      %v3193 = vadd.f32 0.0, %v3192
      %v3194 = vpop.f32.mrb[0].mxu0
      %v3195 = vadd.f32 0.0, %v3194
      %v3196 = vpop.f32.mrb[0].mxu0
      %v3197 = vadd.f32 0.0, %v3196
      %v3198 = vpop.f32.mrb[0].mxu0
      %v3199 = vadd.f32 0.0, %v3198
      %3200 = vmatprep.mubr.bf16.mxu0 %v3156
      %3201 = vmatmul.mubr.bf16.gmra.mrb[0].mxu0 %v3148
      %v3202 = vpop.f32.mrb[0].mxu0
      %v3203 = vadd.f32 0.0, %v3202
      %v3204 = vpop.f32.mrb[0].mxu0
      %v3205 = vadd.f32 0.0, %v3204
      %v3206 = vpop.f32.mrb[0].mxu0
      %v3207 = vpop.f32.mrb[0].mxu0
      %3208 = vdwg.mxu0
      %s3209 = scalar_lea.vmem %s13, 24
      %v3210 = vld [vmem:[%s3209] sm:$0xff]
      %v3211 = vld [vmem:[%s3209 + $0x8] sm:$0xff]
      %v3212 = vld [vmem:[%s3209 + $0x10] sm:$0xff]
      %s3213 = scalar_lea.vmem %s13, 48
      %v3214 = vld [vmem:[%s3213] sm:$0xff]
      %v3215 = vld [vmem:[%s3213 + $0x8] sm:$0xff]
      %v3216 = vld [vmem:[%s3213 + $0x10] sm:$0xff]
      %v3220 = vunpack.c.l.b16 %v3214
      %v3221 = vunpack.c.h.b16 %v3214
      %v3222 = vunpack.c.l.b16 %v3215
      %v3223 = vunpack.c.h.b16 %v3215
      %v3224 = vunpack.c.l.b16 %v3216
      %v3225 = vunpack.c.h.b16 %v3216
      %v3226 = vpack.c.b16 %v3222, %v3220
      %v3227 = vpack.c.b16 %v3223, %v3221
      %v3228 = vpack.c.b16 %v3224, %v3224
      %v3229 = vpack.c.b16 %v3225, %v3225
      %v3233 = vsel %vm2305, %v3227, 0
      %v3236 = vsel %vm2305, %v3229, 0
      %3238 = vmatprep.subr.bf16.mxu0 %v1054
      %3239 = vmatpush1.bf16.msra.mxu0 %v1053
      %3240 = vmatprep.subr.bf16.mxu0 %v1056
      %3241 = vmatpush1.bf16.msra.mxu0 %v1055
      %3242 = vmatprep.subr.bf16.mxu0 %v1028
      %3243 = vmatpush1.bf16.msra.mxu0 %v1027
      %3244 = vmatprep.subr.bf16.mxu0 %v1030
      %3245 = vmatpush1.bf16.msra.mxu0 %v1029
      %3246 = vmatprep.subr.bf16.mxu0 %v1076
      %3247 = vmatpush1.bf16.msra.mxu0 %v1075
      %3248 = vmatprep.subr.bf16.mxu0 %v1078
      %3249 = vmatpush1.bf16.msra.mxu0 %v1077
      %3250 = vmatprep.subr.bf16.mxu0 %v3109
      %3251 = vmatpush1.bf16.msra.mxu0 %v3108
      %3252 = vmatprep.subr.bf16.mxu0 %v3111
      %3253 = vmatpush1.bf16.msra.mxu0 %v3110
      %3254 = vmatprep.subr.bf16.mxu0 %v3083
      %3255 = vmatpush1.bf16.msra.mxu0 %v3082
      %3256 = vmatprep.subr.bf16.mxu0 %v3085
      %3257 = vmatpush1.bf16.msra.mxu0 %v3084
      %3258 = vmatprep.subr.bf16.mxu0 %v3131
      %3259 = vmatpush1.bf16.msra.mxu0 %v3130
      %3260 = vmatprep.subr.bf16.mxu0 %v3133
      %3261 = vmatpush1.bf16.msra.mxu0 %v3132
      %3262 = vmatprep.subr.bf16.mxu0 0
      %3263 = vmatpush1.bf16.msra.mxu0 0
      %3264 = vmatprep.subr.bf16.mxu0 0
      %3265 = vmatpush1.bf16.msra.mxu0 0
      %3266 = vmatprep.subr.bf16.mxu0 0
      %3267 = vmatpush1.bf16.msra.mxu0 0
      %3268 = vmatprep.subr.bf16.mxu0 0
      %3269 = vmatpush1.bf16.msra.mxu0 0
      %3270 = vmatprep.mubr.bf16.mxu0 %v3233
      %3271 = vmatmul.mubr.bf16.gmra.mrb[0].mxu0 %v3226
      %v3272 = vpop.f32.mrb[0].mxu0
      %v3273 = vadd.f32 0.0, %v3272
      %v3274 = vpop.f32.mrb[0].mxu0
      %v3275 = vadd.f32 0.0, %v3274
      %v3276 = vpop.f32.mrb[0].mxu0
      %v3277 = vadd.f32 0.0, %v3276
      %v3278 = vpop.f32.mrb[0].mxu0
      %v3279 = vadd.f32 0.0, %v3278
      %3280 = vmatprep.mubr.bf16.mxu0 %v3236
      %3281 = vmatmul.mubr.bf16.gmra.mrb[0].mxu0 %v3228
      %v3282 = vpop.f32.mrb[0].mxu0
      %v3283 = vadd.f32 0.0, %v3282
      %v3284 = vpop.f32.mrb[0].mxu0
      %v3285 = vadd.f32 0.0, %v3284
      %v3286 = vpop.f32.mrb[0].mxu0
      %v3287 = vpop.f32.mrb[0].mxu0
      %3288 = vdwg.mxu0
      %3295 = vrot.lane.b32.xlu0 %v3193, 16
      %v3296 = vpop.permute.xlu0 %3295
      %3297 = vrot.lane.b32.xlu0 %v3195, 16
      %v3298 = vpop.permute.xlu0 %3297
      %3299 = vrot.lane.b32.xlu0 %v3197, 16
      %v3300 = vpop.permute.xlu0 %3299
      %3301 = vrot.lane.b32.xlu0 %v3199, 16
      %v3302 = vpop.permute.xlu0 %3301
      %3303 = vrot.lane.b32.xlu0 %v3203, 16
      %v3304 = vpop.permute.xlu0 %3303
      %3305 = vrot.lane.b32.xlu0 %v3205, 16
      %v3306 = vpop.permute.xlu0 %3305
      %v3307 = vsel %vm852, %v3296, %v3298
      %v3308 = vsel %vm852, %v3300, %v3302
      %v3309 = vsel %vm852, %v3304, %v3306
      %v3316 = vsel %vm852, 0.0, %v3296
      %v3317 = vsel %vm852, 0.0, %v3300
      %v3318 = vsel %vm852, 0.0, %v3304
      %v3322 = vunpack.c.l.b16 %v3210
      %v3323 = vunpack.c.h.b16 %v3210
      %v3324 = vunpack.c.l.b16 %v3211
      %v3325 = vunpack.c.h.b16 %v3211
      %v3326 = vunpack.c.l.b16 %v3212
      %v3327 = vunpack.c.h.b16 %v3212
      %v3328 = vpack.c.b16 %v3324, %v3322
      %v3329 = vpack.c.b16 %v3325, %v3323
      %v3330 = vpack.c.b16 %v3326, %v3326
      %v3331 = vpack.c.b16 %v3327, %v3327
      %v3335 = vsel %vm2305, %v3329, 0
      %v3338 = vsel %vm2305, %v3331, 0
      %3340 = vmatprep.subr.bf16.mxu0 %v1054
      %3341 = vmatpush1.bf16.msra.mxu0 %v1053
      %3342 = vmatprep.subr.bf16.mxu0 %v1056
      %3343 = vmatpush1.bf16.msra.mxu0 %v1055
      %3344 = vmatprep.subr.bf16.mxu0 %v1028
      %3345 = vmatpush1.bf16.msra.mxu0 %v1027
      %3346 = vmatprep.subr.bf16.mxu0 %v1030
      %3347 = vmatpush1.bf16.msra.mxu0 %v1029
      %3348 = vmatprep.subr.bf16.mxu0 %v1076
      %3349 = vmatpush1.bf16.msra.mxu0 %v1075
      %3350 = vmatprep.subr.bf16.mxu0 %v1078
      %3351 = vmatpush1.bf16.msra.mxu0 %v1077
      %3352 = vmatprep.subr.bf16.mxu0 %v3109
      %3353 = vmatpush1.bf16.msra.mxu0 %v3108
      %3354 = vmatprep.subr.bf16.mxu0 %v3111
      %3355 = vmatpush1.bf16.msra.mxu0 %v3110
      %3356 = vmatprep.subr.bf16.mxu0 %v3083
      %3357 = vmatpush1.bf16.msra.mxu0 %v3082
      %3358 = vmatprep.subr.bf16.mxu0 %v3085
      %3359 = vmatpush1.bf16.msra.mxu0 %v3084
      %3360 = vmatprep.subr.bf16.mxu0 %v3131
      %3361 = vmatpush1.bf16.msra.mxu0 %v3130
      %3362 = vmatprep.subr.bf16.mxu0 %v3133
      %3363 = vmatpush1.bf16.msra.mxu0 %v3132
      %3364 = vmatprep.subr.bf16.mxu0 0
      %3365 = vmatpush1.bf16.msra.mxu0 0
      %3366 = vmatprep.subr.bf16.mxu0 0
      %3367 = vmatpush1.bf16.msra.mxu0 0
      %3368 = vmatprep.subr.bf16.mxu0 0
      %3369 = vmatpush1.bf16.msra.mxu0 0
      %3370 = vmatprep.subr.bf16.mxu0 0
      %3371 = vmatpush1.bf16.msra.mxu0 0
      %3372 = vmatprep.mubr.bf16.mxu0 %v3335
      %3373 = vmatmul.mubr.bf16.gmra.mrb[0].mxu0 %v3328
      %v3374 = vpop.f32.mrb[0].mxu0
      %v3375 = vadd.f32 %v3316, %v3374
      %v3376 = vpop.f32.mrb[0].mxu0
      %v3377 = vadd.f32 %v3307, %v3376
      %v3378 = vpop.f32.mrb[0].mxu0
      %v3379 = vadd.f32 %v3317, %v3378
      %v3380 = vpop.f32.mrb[0].mxu0
      %v3381 = vadd.f32 %v3308, %v3380
      %3382 = vmatprep.mubr.bf16.mxu0 %v3338
      %3383 = vmatmul.mubr.bf16.gmra.mrb[0].mxu0 %v3330
      %v3384 = vpop.f32.mrb[0].mxu0
      %v3385 = vadd.f32 %v3318, %v3384
      %v3386 = vpop.f32.mrb[0].mxu0
      %v3387 = vadd.f32 %v3309, %v3386
      %v3388 = vpop.f32.mrb[0].mxu0
      %v3389 = vpop.f32.mrb[0].mxu0
      %3390 = vdwg.mxu0
      %3397 = vrot.lane.b32.xlu0 %v3273, 112
      %v3398 = vpop.permute.xlu0 %3397
      %3399 = vrot.lane.b32.xlu0 %v3275, 112
      %v3400 = vpop.permute.xlu0 %3399
      %3401 = vrot.lane.b32.xlu0 %v3277, 112
      %v3402 = vpop.permute.xlu0 %3401
      %3403 = vrot.lane.b32.xlu0 %v3279, 112
      %v3404 = vpop.permute.xlu0 %3403
      %3405 = vrot.lane.b32.xlu0 %v3283, 112
      %v3406 = vpop.permute.xlu0 %3405
      %3407 = vrot.lane.b32.xlu0 %v3285, 112
      %v3408 = vpop.permute.xlu0 %3407
      %v3409 = vsel %vm962, %v3398, %v3400
      %v3410 = vsel %vm962, %v3402, %v3404
      %v3411 = vsel %vm962, %v3406, %v3408
      %v3418 = vsel %vm962, %v3400, 0.0
      %v3419 = vsel %vm962, %v3404, 0.0
      %v3420 = vsel %vm962, %v3408, 0.0
      %v3421 = vadd.f32 %v3375, %v3409
      %v3422 = vadd.f32 %v3377, %v3418
      %v3423 = vadd.f32 %v3379, %v3410
      %v3424 = vadd.f32 %v3381, %v3419
      %v3425 = vadd.f32 %v3385, %v3411
      %v3426 = vadd.f32 %v3387, %v3420
      %v3427 = vld [vmem:[%s14] sm:$0xff]
      %v3428 = vld [vmem:[%s14 + $0x8] sm:$0xff]
      %v3429 = vld [vmem:[%s14 + $0x10] sm:$0xff]
      %3431 = vset.pattern.permute.xlu0 0
      %3432 = vperm.xlu0 %3431, %v3427
      %v3433 = vpop.permute.xlu0 %3432
      %3436 = vset.pattern.permute.xlu0 0
      %3437 = vperm.xlu0 %3436, %v3428
      %v3438 = vpop.permute.xlu0 %3437
      %3441 = vset.pattern.permute.xlu0 0
      %3442 = vperm.xlu0 %3441, %v3429
      %v3443 = vpop.permute.xlu0 %3442
      %v3445 = vadd.f32 %v3421, %v3433
      %v3446 = vadd.f32 %v3422, %v3433
      %v3447 = vadd.f32 %v3423, %v3438
      %v3448 = vadd.f32 %v3424, %v3438
      %v3449 = vadd.f32 %v3425, %v3443
      %v3450 = vadd.f32 %v3426, %v3443
      %v3451 = vtanh.pop %v3445
      %v3452 = vtanh.pop %v3446
      %v3453 = vtanh.pop %v3447
      %v3454 = vtanh.pop %v3448
      %v3455 = vtanh.pop %v3449
      %v3456 = vtanh.pop %v3450
      %v3457 = vmul.f32 %v535, %v535
      %v3458 = vsub.f32 %v3457, %v535
      %v3460 = vcombine.high %v3458, %v3458
      %v3462 = vmul.f32 %v3451, %v3458
      %v3463 = vmul.f32 %v3452, %v3460
      %v3466 = vcombine.low %v3462, %v3463
      %v3468 = vadd.f32 %v535, %v3466
      %v3469 = vmul.f32 %v3468, %v3468
      %v3470 = vsub.f32 %v3469, %v3468
      %v3472 = vcombine.high %v3470, %v3470
      %v3473 = vrot.slane %v3470, 5
      %v3474 = vrot.slane %v3472, 5
      %v3477 = vmul.f32 %v3451, %v3473
      %v3478 = vmul.f32 %v3452, %v3474
      %v3481 = vcombine.low %v3477, %v3478
      %v3482 = vcombine.high %v3477, %v3478
      %vm3483 = vcmask 1040384
      %vm3484 = vcmask 1044484
      %vm3485 = vmor %vm3483, %vm3484
      %v3486 = vrot.slane %v3481, 7
      %v3487 = vrot.slane %v3486, 4
      %v3488 = vrot.slane %v3482, 7
      %v3489 = vsel %vm3485, %v3487, %v3488
      %v3491 = vadd.f32 %v3468, %v3489
      %v3492 = vmul.f32 %v3491, %v3491
      %v3493 = vsub.f32 %v3492, %v3491
      %v3495 = vcombine.high %v3493, %v3493
      %v3496 = vrot.slane %v3493, 2
      %v3497 = vrot.slane %v3495, 2
      %v3500 = vmul.f32 %v3451, %v3496
      %v3501 = vmul.f32 %v3452, %v3497
      %v3502 = vmul.f32 %v3453, %v3496
      %v3503 = vmul.f32 %v3454, %v3497
      %v3508 = vcombine.high %v3500, %v3501
      %v3509 = vcombine.low %v3502, %v3503
      %vm3510 = vcmask 1041408
      %vm3511 = vcmask 1045508
      %vm3512 = vmor %vm3510, %vm3511
      %v3513 = vrot.slane %v3508, 6
      %v3514 = vrot.slane %v3513, 4
      %v3515 = vrot.slane %v3509, 6
      %v3516 = vsel %vm3512, %v3514, %v3515
      %v3518 = vadd.f32 %v3491, %v3516
      %v3519 = vmul.f32 %v3518, %v3518
      %v3520 = vsub.f32 %v3519, %v3518
      %v3522 = vcombine.high %v3520, %v3520
      %v3523 = vrot.slane %v3520, 7
      %v3524 = vrot.slane %v3522, 7
      %v3527 = vmul.f32 %v3453, %v3523
      %v3528 = vmul.f32 %v3454, %v3524
      %v3531 = vcombine.low %v3527, %v3528
      %v3532 = vrot.slane %v3531, 5
      %v3533 = vrot.slane %v3532, 4
      %v3535 = vadd.f32 %v3518, %v3533
      %v3536 = vmul.f32 %v3535, %v3535
      %v3537 = vsub.f32 %v3536, %v3535
      %v3539 = vcombine.low %v3537, %v3537
      %v3541 = vmul.f32 %v3453, %v3539
      %v3542 = vmul.f32 %v3454, %v3537
      %v3545 = vcombine.high %v3541, %v3542
      %v3547 = vadd.f32 %v3535, %v3545
      %v3548 = vmul.f32 %v3547, %v3547
      %v3549 = vsub.f32 %v3548, %v3547
      %v3551 = vcombine.high %v3549, %v3549
      %v3552 = vrot.slane %v3549, 1
      %v3553 = vrot.slane %v3551, 1
      %v3556 = vmul.f32 %v3453, %v3552
      %v3557 = vmul.f32 %v3454, %v3553
      %v3558 = vmul.f32 %v3455, %v3552
      %v3559 = vmul.f32 %v3456, %v3553
      %v3564 = vcombine.high %v3556, %v3557
      %v3565 = vcombine.low %v3558, %v3559
      %v3566 = vrot.slane %v3564, 7
      %v3567 = vrot.slane %v3566, 4
      %v3568 = vrot.slane %v3565, 7
      %v3569 = vsel %vm3485, %v3567, %v3568
      %v3571 = vadd.f32 %v3547, %v3569
      %v3572 = vmul.f32 %v3571, %v3571
      %v3573 = vsub.f32 %v3572, %v3571
      %v3575 = vcombine.high %v3573, %v3573
      %v3576 = vrot.slane %v3573, 6
      %v3577 = vrot.slane %v3575, 6
      %v3580 = vmul.f32 %v3455, %v3576
      %v3581 = vmul.f32 %v3456, %v3577
      %v3584 = vcombine.low %v3580, %v3581
      %v3585 = vcombine.high %v3580, %v3581
      %v3586 = vrot.slane %v3584, 6
      %v3587 = vrot.slane %v3586, 4
      %v3588 = vrot.slane %v3585, 6
      %v3589 = vsel %vm3512, %v3587, %v3588
      %v3591 = vadd.f32 %v3571, %v3589
      %v3592 = vmul.f32 %v3591, %v3591
      %v3593 = vsub.f32 %v3592, %v3591
      %v3595 = vcombine.high %v3593, %v3593
      %v3596 = vrot.slane %v3593, 3
      %v3597 = vrot.slane %v3595, 3
      %v3600 = vmul.f32 %v3455, %v3596
      %v3601 = vmul.f32 %v3456, %v3597
      %v3604 = vcombine.high %v3600, %v3601
      %v3605 = vrot.slane %v3604, 5
      %v3606 = vrot.slane %v3605, 4
      %v3608 = vadd.f32 %v3591, %v3606
      %3609 = vst [vmem:[%s530] sm:$0x77] %v3608
      %s3610 = smul.u32 2, %s31
      %p3611 = scmp.lt.s32.totalorder %s30, 1
      %s3612 = scalar_select %p3611, %s30, 1
      %p3613 = scmp.lt.s32.totalorder %s3610, 1
      %s3614 = scalar_select %p3613, %s3610, 1
      %s3615 = smul.addr %s3612, 2
      %s3616 = sadd.s32 %s3614, %s3615
      %s3617 = smul.addr %s3616, 4
      %s3618 = scalar_lea.vmem %s15, %s3617
      // Predicated region
      $region81: #{zero_dce_forward.1} parent=79 // pred_check
        %p3619 = pneg %p380
      $region82: #{zero_dce_forward.1} parent=79 // pred_check_branch
        %3621 = sbr.rel (%p3619) target = $region84
      $region83: #{zero_dce_forward.1} parent=79 // pred_region
        %s3622 = smul.u32 2, %s31
      $region84: #{zero_dce_forward.1} parent=79 // pred_fallthru
        _
    $region80: #{zero_dce_forward.1} parent=5 // pred_fallthru
      _
    %p3623 = scmp.le.s32.totalorder 2, %s21
    // Predicated region
    $region85: #{zero_dce_forward.1} parent=5 // pred_check
      %p3624 = pneg %p3623
    $region86: #{zero_dce_forward.1} parent=5 // pred_check_branch
      %3626 = sbr.rel (%p3624) target = $region88
    $region87: #{zero_dce_forward.1} parent=5 // pred_region
      %s3627 = ssub.s32 %s21, 2
      // Predicated region
      $region89: #{zero_dce_forward.1} parent=87 // pred_check
        %p3628 = pneg %p386
      $region90: #{zero_dce_forward.1} parent=87 // pred_check_branch
        %3630 = sbr.rel (%p3628) target = $region92
      $region91: #{zero_dce_forward.1} parent=87 // pred_region
        %s3631 = smul.u32 2, %s33
        %p3632 = scmp.lt.s32.totalorder %s32, 1
        %s3633 = scalar_select %p3632, %s32, 1
        %p3634 = scmp.lt.s32.totalorder %s3631, 1
        %s3635 = scalar_select %p3634, %s3631, 1
        %s3636 = smul.addr %s3633, 2
        %s3637 = sadd.s32 %s3635, %s3636
        %s3638 = smul.addr %s3637, 4
        %s3639 = scalar_lea.vmem %s15, %s3638
      $region92: #{zero_dce_forward.1} parent=87 // pred_fallthru
        _
    $region88: #{zero_dce_forward.1} parent=5 // pred_fallthru
      _
  $region6: #{zero_dce_forward.1} parent=0 // loop_footer
    %s25 = sadd.s32 1, %s21
  $region7: #{zero_dce_forward.1} parent=0 // loop_footer_branch
    %20 = sbr.rel target = $region3
  $region8: #{zero_dce_forward.1} parent=0 // loop_exit
    _

</llo_original>
